<compile_context>
chip_gen: v5e
topology: v5e:2x2
jax: 0.10.0
libtpu: 0.0.40
codegen_flags: <defaults>
</compile_context>

<pallas_src>
import math
import functools

import jax
import jax.numpy as jnp
from jax.experimental import pallas as pl
from jax.experimental.pallas import tpu as pltpu


# ---------------------------------------------------------------- kernel body

def _layer_norm(v, alpha, beta, d_model, eps=1e-6):
    mean = jnp.mean(v, axis=-1, keepdims=True)
    # torch.Tensor.std defaults to the unbiased estimator (N-1).
    var = jnp.sum((v - mean) ** 2, axis=-1, keepdims=True) * (1.0 / (d_model - 1))
    # Exact divide here (correctness fix): 1/std amplifies approx-recip error.
    return alpha * (v - mean) / (jnp.sqrt(var) + eps) + beta


def _mha(q_in, kv_in, bias, wq_h, bq_h, wk_h, bk_h, wv_h, bv_h, wo_h, bo,
         heads, dk):
    """Head-batched attention core with no physical head transposes.

    q_in: (Sq, D) f32, kv_in: (Sk, D) f32, bias: additive mask broadcastable
    to (H, Sq, Sk).  Weights are pre-reshaped head-major in the wrapper:
    wq_h/wk_h/wv_h (H, D, dk) bf16, wo_h (H, dk, D) bf16; biases f32.
    The heads axis is created by broadcasting the activations (vreg
    replication, no lane movement) and destroyed by a sum over the leading
    (major) axis — no reshape/swapaxes relayouts.
    """
    sq, d_model = q_in.shape
    sk = kv_in.shape[0]

    q_b = jnp.broadcast_to(q_in.astype(jnp.bfloat16)[None], (heads, sq, d_model))
    kv_b = jnp.broadcast_to(kv_in.astype(jnp.bfloat16)[None], (heads, sk, d_model))

    qh = jnp.einsum('hsd,hdf->hsf', q_b, wq_h,
                    preferred_element_type=jnp.float32) + bq_h      # (H,Sq,dk)
    kh = jnp.einsum('hsd,hdf->hsf', kv_b, wk_h,
                    preferred_element_type=jnp.float32) + bk_h      # (H,Sk,dk)
    vh = jnp.einsum('hsd,hdf->hsf', kv_b, wv_h,
                    preferred_element_type=jnp.float32) + bv_h      # (H,Sk,dk)

    scores = jnp.einsum('hqd,hkd->hqk',
                        qh.astype(jnp.bfloat16), kh.astype(jnp.bfloat16),
                        preferred_element_type=jnp.float32) * (1.0 / math.sqrt(dk))
    scores = scores + bias                                          # additive mask

    m = jnp.max(scores, axis=-1, keepdims=True)
    p = jnp.exp(scores - m)
    att = p * pl.reciprocal(jnp.sum(p, axis=-1, keepdims=True), approx=True)

    ctx = jnp.einsum('hqk,hkd->hqd',
                     att.astype(jnp.bfloat16), vh.astype(jnp.bfloat16),
                     preferred_element_type=jnp.float32)            # (H,Sq,dk)
    out_h = jnp.einsum('hsd,hdf->hsf',
                       ctx.astype(jnp.bfloat16), wo_h,
                       preferred_element_type=jnp.float32)          # (H,Sq,D)
    # Sum over the leading heads axis: cheap VPU adds, no cross-lane movement.
    return jnp.sum(out_h, axis=0) + bo                              # (Sq, D)


def decoder_layer_kernel(x_ref, e_ref, trg_mask_ref, src_mask_ref,
                         wqkv1_ref, bqkv1_ref, wo1_ref, bo1_ref,
                         wq2_ref, bq2_ref, wkv2_ref, bkv2_ref, wo2_ref, bo2_ref,
                         wf1_ref, bf1_ref, wf2_ref, bf2_ref,
                         alpha_ref, beta_ref, o_ref, *, heads):
    d_model = x_ref.shape[-1]
    dk = d_model // heads

    x = x_ref[0]                   # (S, D) f32
    e = e_ref[0]                   # (S_src, D) f32
    # Mask -> additive bias, computed once per kernel step (robust <0.5 test).
    trg_bias = jnp.where(trg_mask_ref[0] < 0.5, -1e9, 0.0)   # (S, S)
    src_bias = jnp.where(src_mask_ref[0] < 0.5, -1e9, 0.0)   # (1, S_src)

    alpha = alpha_ref[...]         # (3, D)
    beta = beta_ref[...]           # (3, D)

    # --- self attention + residual + norm1 (dropout1 = identity) ---
    a1 = _mha(x, x, trg_bias,
              wqkv1_ref[0], bqkv1_ref[0], wqkv1_ref[1], bqkv1_ref[1],
              wqkv1_ref[2], bqkv1_ref[2], wo1_ref[...], bo1_ref[...],
              heads, dk)
    x = _layer_norm(x + a1, alpha[0], beta[0], d_model)

    # --- cross attention on encoder outputs + residual + norm2 ---
    a2 = _mha(x, e, src_bias,
              wq2_ref[...], bq2_ref[...], wkv2_ref[0], bkv2_ref[0],
              wkv2_ref[1], bkv2_ref[1], wo2_ref[...], bo2_ref[...],
              heads, dk)
    x = _layer_norm(x + a2, alpha[1], beta[1], d_model)

    # --- feed-forward (linear -> relu -> linear) + residual + norm3 ---
    h = jnp.dot(x.astype(jnp.bfloat16), wf1_ref[...],
                preferred_element_type=jnp.float32) + bf1_ref[...]
    h = jnp.maximum(h, 0.0)
    ff = jnp.dot(h.astype(jnp.bfloat16), wf2_ref[...],
                 preferred_element_type=jnp.float32) + bf2_ref[...]
    x = _layer_norm(x + ff, alpha[2], beta[2], d_model)

    o_ref[0] = x


# ----------------------------------------------------------------- wrapper

def decoder_layer(x, e_outputs, src_mask, trg_mask, params, heads):
    B, S, D = x.shape
    S_src = e_outputs.shape[1]
    F = params["w_ff1"].shape[-1]
    H = heads
    dk = D // H

    w1, b1 = params["w_attn1"], params["b_attn1"]     # (4, D, D), (4, D)
    w2, b2 = params["w_attn2"], params["b_attn2"]

    wdt = jnp.bfloat16   # weights live in HBM as bf16: halves the dominant DMA,
                         # native MXU path on all generations.

    def head_cols(w):    # (D, D) -> (H, D, dk): per-head slices of output cols
        return jnp.transpose(w.reshape(D, H, dk), (1, 0, 2))

    def head_bias(b):    # (D,) -> (H, 1, dk)
        return b.reshape(H, 1, dk)

    # ---- trace-time weight packing (tiny one-off reshapes) ----
    w_qkv1_h = jnp.stack([head_cols(w1[0]), head_cols(w1[1]),
                          head_cols(w1[2])]).astype(wdt)           # (3,H,D,dk)
    b_qkv1_h = jnp.stack([head_bias(b1[0]), head_bias(b1[1]),
                          head_bias(b1[2])])                        # (3,H,1,dk) f32
    w_o1 = w1[3].reshape(H, dk, D).astype(wdt)                      # (H,dk,D)
    b_o1 = b1[3][None, :]                                           # (1,D) f32

    w_q2_h = head_cols(w2[0]).astype(wdt)                           # (H,D,dk)
    b_q2_h = head_bias(b2[0])                                       # (H,1,dk)
    w_kv2_h = jnp.stack([head_cols(w2[1]), head_cols(w2[2])]).astype(wdt)  # (2,H,D,dk)
    b_kv2_h = jnp.stack([head_bias(b2[1]), head_bias(b2[2])])       # (2,H,1,dk)
    w_o2 = w2[3].reshape(H, dk, D).astype(wdt)                      # (H,dk,D)
    b_o2 = b2[3][None, :]                                           # (1,D)

    w_ff1 = params["w_ff1"].astype(wdt)                             # (D,F) bf16
    b_ff1 = params["b_ff1"]                                         # (1,F) f32
    w_ff2 = params["w_ff2"].astype(wdt)                             # (F,D) bf16
    b_ff2 = params["b_ff2"]                                         # (1,D) f32
    alpha = params["norm_alpha"]                                    # (3,D)
    beta = params["norm_beta"]                                      # (3,D)

    def full(shape):
        # Grid-invariant (weights / biases / norm params): fetched once,
        # single-buffered — double-buffering them would only waste VMEM + DMA.
        return pl.BlockSpec(shape, lambda b, _n=len(shape): (0,) * _n,
                            pipeline_mode=pl.Buffered(1))

    in_specs = [
        pl.BlockSpec((1, S, D), lambda b: (b, 0, 0)),        # x
        pl.BlockSpec((1, S_src, D), lambda b: (b, 0, 0)),    # e_outputs
        pl.BlockSpec((1, S, S), lambda b: (b, 0, 0)),        # trg_mask
        pl.BlockSpec((1, 1, S_src), lambda b: (b, 0, 0)),    # src_mask
        full(w_qkv1_h.shape), full(b_qkv1_h.shape),          # attn1 qkv (head-major)
        full(w_o1.shape), full(b_o1.shape),                  # attn1 out proj
        full(w_q2_h.shape), full(b_q2_h.shape),              # attn2 q proj
        full(w_kv2_h.shape), full(b_kv2_h.shape),            # attn2 kv proj
        full(w_o2.shape), full(b_o2.shape),                  # attn2 out proj
        full(w_ff1.shape), full(b_ff1.shape),                # ff linear1
        full(w_ff2.shape), full(b_ff2.shape),                # ff linear2
        full(alpha.shape), full(beta.shape),                 # norm alpha, beta
    ]
    out_spec = pl.BlockSpec((1, S, D), lambda b: (b, 0, 0))

    args = (x, e_outputs, trg_mask, src_mask,
            w_qkv1_h, b_qkv1_h, w_o1, b_o1,
            w_q2_h, b_q2_h, w_kv2_h, b_kv2_h, w_o2, b_o2,
            w_ff1, b_ff1, w_ff2, b_ff2, alpha, beta)

    # Advisory cost hint for XLA scheduling around the custom call.
    flops = 2 * B * (3 * S * D * D            # q/k/v proj (self)
                     + 3 * S * D * D          # o1, q2, o2 projections
                     + 2 * S_src * D * D      # k/v proj (cross)
                     + 2 * H * S * S * dk     # self-attn scores + ctx
                     + 2 * H * S * S_src * dk # cross-attn scores + ctx
                     + 2 * S * D * F)         # ff1 + ff2
    transcendentals = B * (H * (S * S + S * S_src) + 3 * S)
    bytes_accessed = sum(int(a.size) * a.dtype.itemsize for a in args) + B * S * D * 4

    kernel = functools.partial(decoder_layer_kernel, heads=heads)

    # TODO(synk): at production D/F the full-weight-in-VMEM scheme must be
    # replaced by a K-tiled FF reduction axis (v7x has only 64 MiB VMEM).
    return pl.pallas_call(
        kernel,
        out_shape=jax.ShapeDtypeStruct((B, S, D), jnp.float32),
        grid_spec=pltpu.PrefetchScalarGridSpec(
            num_scalar_prefetch=0,
            grid=(B,),
            in_specs=in_specs,
            out_specs=out_spec,
        ),
        compiler_params=pltpu.CompilerParams(
            dimension_semantics=("parallel",)),
        cost_estimate=pl.CostEstimate(flops=int(flops),
                                      transcendentals=int(transcendentals),
                                      bytes_accessed=int(bytes_accessed)),
    )(*args)


# --------------------------------------------------------- pure-JAX reference

def decoder_layer_ref(x, e, src_mask, trg_mask, params, heads):
    D = x.shape[-1]

    def ln(v, a, bi, eps=1e-6):
        mean = v.mean(-1, keepdims=True)
        var = ((v - mean) ** 2).sum(-1, keepdims=True) / (D - 1)
        return a * (v - mean) / (jnp.sqrt(var) + eps) + bi

    def mha(qin, kvin, mask, w, b):
        dk = D // heads
        q = qin @ w[0] + b[0]
        k = kvin @ w[1] + b[1]
        v = kvin @ w[2] + b[2]
        B, Sq, _ = q.shape
        Sk = k.shape[1]
        qh = q.reshape(B, Sq, heads, dk).transpose(0, 2, 1, 3)
        kh = k.reshape(B, Sk, heads, dk).transpose(0, 2, 1, 3)
        vh = v.reshape(B, Sk, heads, dk).transpose(0, 2, 1, 3)
        scores = jnp.einsum('bhqd,bhkd->bhqk', qh, kh) / math.sqrt(dk)
        scores = jnp.where(mask[:, None] == 0, -1e9, scores)
        att = jax.nn.softmax(scores, axis=-1)
        out = jnp.einsum('bhqk,bhkd->bhqd', att, vh)
        out = out.transpose(0, 2, 1, 3).reshape(B, Sq, D)
        return out @ w[3] + b[3]

    a = params["norm_alpha"]
    be = params["norm_beta"]
    x = ln(x + mha(x, x, trg_mask, params["w_attn1"], params["b_attn1"]), a[0], be[0])
    x = ln(x + mha(x, e, src_mask, params["w_attn2"], params["b_attn2"]), a[1], be[1])
    h = jnp.maximum(x @ params["w_ff1"] + params["b_ff1"][0], 0.0)
    ff = h @ params["w_ff2"] + params["b_ff2"][0]
    x = ln(x + ff, a[2], be[2])
    return x


# -------------------------------------------------------------------- main

if __name__ == "__main__":
    B, S, S_src, D, H, F = 2, 8, 8, 32, 4, 2048   # d_ff=2048 hardcoded in FeedForward

    key = jax.random.PRNGKey(0)
    keys = jax.random.split(key, 12)
    scale = 0.02
    params = {
        "w_attn1": scale * jax.random.normal(keys[0], (4, D, D), jnp.float32),
        "b_attn1": scale * jax.random.normal(keys[1], (4, D), jnp.float32),
        "w_attn2": scale * jax.random.normal(keys[2], (4, D, D), jnp.float32),
        "b_attn2": scale * jax.random.normal(keys[3], (4, D), jnp.float32),
        "w_ff1":   scale * jax.random.normal(keys[4], (D, F), jnp.float32),
        "b_ff1":   scale * jax.random.normal(keys[5], (1, F), jnp.float32),
        "w_ff2":   scale * jax.random.normal(keys[6], (F, D), jnp.float32),
        "b_ff2":   scale * jax.random.normal(keys[7], (1, D), jnp.float32),
        "norm_alpha": jnp.ones((3, D), jnp.float32),   # Norm init: alpha=1, bias=0
        "norm_beta":  jnp.zeros((3, D), jnp.float32),
    }

    x = jax.random.normal(keys[8], (B, S, D), jnp.float32)
    e_outputs = jax.random.normal(keys[9], (B, S_src, D), jnp.float32)
    # causal target mask (B, S, S); source padding mask (B, 1, S_src)
    trg_mask = jnp.broadcast_to(jnp.tril(jnp.ones((S, S), jnp.float32)), (B, S, S))
    src_mask = jnp.ones((B, 1, S_src), jnp.float32).at[1, 0, S_src - 2:].set(0.0)

    out = decoder_layer(x, e_outputs, src_mask, trg_mask, params, H)
    out = jax.block_until_ready(out)

    ref = decoder_layer_ref(x, e_outputs, src_mask, trg_mask, params, H)
    assert out.shape == (B, S, D)
    err = float(jnp.max(jnp.abs(out - ref)))
    # Tolerance 2e-2: the kernel stores weights and feeds every MXU operand in
    # bfloat16 (f32 accumulation) and uses an approximate EUP reciprocal for
    # the softmax denominator, while the reference runs entirely in float32.
    # Observed error is ~1e-3-level; 2e-2 gives comfortable margin.
    assert jnp.allclose(out, ref, atol=2e-2, rtol=2e-2), f"mismatch: max abs err {err}"

    print("KERNEL_OK")
</pallas_src>

<mosaic_0001>
module attributes {stable_mosaic.version = 11 : i64} {
  func.func @decoder_layer_kernel(%arg0: i32, %arg1: memref<1x8x32xf32, #tpu.memory_space<vmem>>, %arg2: memref<1x8x32xf32, #tpu.memory_space<vmem>>, %arg3: memref<1x8x8xf32, #tpu.memory_space<vmem>>, %arg4: memref<1x1x8xf32, #tpu.memory_space<vmem>>, %arg5: memref<3x4x32x8xbf16, #tpu.memory_space<vmem>>, %arg6: memref<3x4x1x8xf32, #tpu.memory_space<vmem>>, %arg7: memref<4x8x32xbf16, #tpu.memory_space<vmem>>, %arg8: memref<1x32xf32, #tpu.memory_space<vmem>>, %arg9: memref<4x32x8xbf16, #tpu.memory_space<vmem>>, %arg10: memref<4x1x8xf32, #tpu.memory_space<vmem>>, %arg11: memref<2x4x32x8xbf16, #tpu.memory_space<vmem>>, %arg12: memref<2x4x1x8xf32, #tpu.memory_space<vmem>>, %arg13: memref<4x8x32xbf16, #tpu.memory_space<vmem>>, %arg14: memref<1x32xf32, #tpu.memory_space<vmem>>, %arg15: memref<32x2048xbf16, #tpu.memory_space<vmem>>, %arg16: memref<1x2048xf32, #tpu.memory_space<vmem>>, %arg17: memref<2048x32xbf16, #tpu.memory_space<vmem>>, %arg18: memref<1x32xf32, #tpu.memory_space<vmem>>, %arg19: memref<3x32xf32, #tpu.memory_space<vmem>>, %arg20: memref<3x32xf32, #tpu.memory_space<vmem>>, %arg21: memref<1x8x32xf32, #tpu.memory_space<vmem>>) attributes {dimension_semantics = [#tpu.dimension_semantics<parallel>], iteration_bounds = array<i64: 2>, scalar_prefetch = 0 : i64, scratch_operands = 0 : i64, tpu.core_type = #tpu.core_type<tc>, window_params = [{transform_indices = @transform_0, window_bounds = array<i64: 1, 8, 32>}, {transform_indices = @transform_1, window_bounds = array<i64: 1, 8, 32>}, {transform_indices = @transform_2, window_bounds = array<i64: 1, 8, 8>}, {transform_indices = @transform_3, window_bounds = array<i64: 1, 1, 8>}, {pipeline_mode = #tpu.pipeline_mode<synchronous>, transform_indices = @transform_4, window_bounds = array<i64: 3, 4, 32, 8>}, {pipeline_mode = #tpu.pipeline_mode<synchronous>, transform_indices = @transform_5, window_bounds = array<i64: 3, 4, 1, 8>}, {pipeline_mode = #tpu.pipeline_mode<synchronous>, transform_indices = @transform_6, window_bounds = array<i64: 4, 8, 32>}, {pipeline_mode = #tpu.pipeline_mode<synchronous>, transform_indices = @transform_7, window_bounds = array<i64: 1, 32>}, {pipeline_mode = #tpu.pipeline_mode<synchronous>, transform_indices = @transform_8, window_bounds = array<i64: 4, 32, 8>}, {pipeline_mode = #tpu.pipeline_mode<synchronous>, transform_indices = @transform_9, window_bounds = array<i64: 4, 1, 8>}, {pipeline_mode = #tpu.pipeline_mode<synchronous>, transform_indices = @transform_10, window_bounds = array<i64: 2, 4, 32, 8>}, {pipeline_mode = #tpu.pipeline_mode<synchronous>, transform_indices = @transform_11, window_bounds = array<i64: 2, 4, 1, 8>}, {pipeline_mode = #tpu.pipeline_mode<synchronous>, transform_indices = @transform_12, window_bounds = array<i64: 4, 8, 32>}, {pipeline_mode = #tpu.pipeline_mode<synchronous>, transform_indices = @transform_13, window_bounds = array<i64: 1, 32>}, {pipeline_mode = #tpu.pipeline_mode<synchronous>, transform_indices = @transform_14, window_bounds = array<i64: 32, 2048>}, {pipeline_mode = #tpu.pipeline_mode<synchronous>, transform_indices = @transform_15, window_bounds = array<i64: 1, 2048>}, {pipeline_mode = #tpu.pipeline_mode<synchronous>, transform_indices = @transform_16, window_bounds = array<i64: 2048, 32>}, {pipeline_mode = #tpu.pipeline_mode<synchronous>, transform_indices = @transform_17, window_bounds = array<i64: 1, 32>}, {pipeline_mode = #tpu.pipeline_mode<synchronous>, transform_indices = @transform_18, window_bounds = array<i64: 3, 32>}, {pipeline_mode = #tpu.pipeline_mode<synchronous>, transform_indices = @transform_19, window_bounds = array<i64: 3, 32>}, {transform_indices = @transform_20, window_bounds = array<i64: 1, 8, 32>}]} {
    %c0 = arith.constant 0 : index
    %c0_0 = arith.constant 0 : index
    %c0_1 = arith.constant 0 : index
    %0 = vector.load %arg1[%c0, %c0_0, %c0_1] : memref<1x8x32xf32, #tpu.memory_space<vmem>>, vector<1x8x32xf32>
    %1 = vector.shape_cast %0 : vector<1x8x32xf32> to vector<8x32xf32>
    %c0_2 = arith.constant 0 : index
    %c0_3 = arith.constant 0 : index
    %c0_4 = arith.constant 0 : index
    %2 = vector.load %arg2[%c0_2, %c0_3, %c0_4] : memref<1x8x32xf32, #tpu.memory_space<vmem>>, vector<1x8x32xf32>
    %3 = vector.shape_cast %2 : vector<1x8x32xf32> to vector<8x32xf32>
    %c0_5 = arith.constant 0 : index
    %c0_6 = arith.constant 0 : index
    %c0_7 = arith.constant 0 : index
    %4 = vector.load %arg3[%c0_5, %c0_6, %c0_7] : memref<1x8x8xf32, #tpu.memory_space<vmem>>, vector<1x8x8xf32>
    %5 = vector.shape_cast %4 : vector<1x8x8xf32> to vector<8x8xf32>
    %cst = arith.constant 5.000000e-01 : f32
    %6 = vector.broadcast %cst : f32 to vector<8x8xf32>
    %7 = arith.cmpf olt, %5, %6 : vector<8x8xf32>
    %cst_8 = arith.constant -1.000000e+09 : f32
    %cst_9 = arith.constant 0.000000e+00 : f32
    %8 = vector.broadcast %cst_8 : f32 to vector<8x8xf32>
    %9 = vector.broadcast %cst_9 : f32 to vector<8x8xf32>
    %10 = arith.select %7, %8, %9 : vector<8x8xi1>, vector<8x8xf32>
    %c0_10 = arith.constant 0 : index
    %c0_11 = arith.constant 0 : index
    %c0_12 = arith.constant 0 : index
    %11 = vector.load %arg4[%c0_10, %c0_11, %c0_12] : memref<1x1x8xf32, #tpu.memory_space<vmem>>, vector<1x1x8xf32>
    %12 = vector.shape_cast %11 : vector<1x1x8xf32> to vector<1x8xf32>
    %cst_13 = arith.constant 5.000000e-01 : f32
    %13 = vector.broadcast %cst_13 : f32 to vector<1x8xf32>
    %14 = arith.cmpf olt, %12, %13 : vector<1x8xf32>
    %cst_14 = arith.constant -1.000000e+09 : f32
    %cst_15 = arith.constant 0.000000e+00 : f32
    %15 = vector.broadcast %cst_14 : f32 to vector<1x8xf32>
    %16 = vector.broadcast %cst_15 : f32 to vector<1x8xf32>
    %17 = arith.select %14, %15, %16 : vector<1x8xi1>, vector<1x8xf32>
    %c0_16 = arith.constant 0 : index
    %c0_17 = arith.constant 0 : index
    %18 = vector.load %arg19[%c0_16, %c0_17] : memref<3x32xf32, #tpu.memory_space<vmem>>, vector<3x32xf32>
    %c0_18 = arith.constant 0 : index
    %c0_19 = arith.constant 0 : index
    %19 = vector.load %arg20[%c0_18, %c0_19] : memref<3x32xf32, #tpu.memory_space<vmem>>, vector<3x32xf32>
    %c0_20 = arith.constant 0 : index
    %c0_21 = arith.constant 0 : index
    %c0_22 = arith.constant 0 : index
    %c0_23 = arith.constant 0 : index
    %20 = vector.load %arg5[%c0_20, %c0_21, %c0_22, %c0_23] : memref<3x4x32x8xbf16, #tpu.memory_space<vmem>>, vector<1x4x32x8xbf16>
    %21 = vector.shape_cast %20 : vector<1x4x32x8xbf16> to vector<4x32x8xbf16>
    %c0_24 = arith.constant 0 : index
    %c0_25 = arith.constant 0 : index
    %c0_26 = arith.constant 0 : index
    %c0_27 = arith.constant 0 : index
    %22 = vector.load %arg6[%c0_24, %c0_25, %c0_26, %c0_27] : memref<3x4x1x8xf32, #tpu.memory_space<vmem>>, vector<1x4x1x8xf32>
    %23 = vector.shape_cast %22 : vector<1x4x1x8xf32> to vector<4x1x8xf32>
    %c1 = arith.constant 1 : index
    %c0_28 = arith.constant 0 : index
    %c0_29 = arith.constant 0 : index
    %c0_30 = arith.constant 0 : index
    %24 = vector.load %arg5[%c1, %c0_28, %c0_29, %c0_30] : memref<3x4x32x8xbf16, #tpu.memory_space<vmem>>, vector<1x4x32x8xbf16>
    %25 = vector.shape_cast %24 : vector<1x4x32x8xbf16> to vector<4x32x8xbf16>
    %c1_31 = arith.constant 1 : index
    %c0_32 = arith.constant 0 : index
    %c0_33 = arith.constant 0 : index
    %c0_34 = arith.constant 0 : index
    %26 = vector.load %arg6[%c1_31, %c0_32, %c0_33, %c0_34] : memref<3x4x1x8xf32, #tpu.memory_space<vmem>>, vector<1x4x1x8xf32>
    %27 = vector.shape_cast %26 : vector<1x4x1x8xf32> to vector<4x1x8xf32>
    %c2 = arith.constant 2 : index
    %c0_35 = arith.constant 0 : index
    %c0_36 = arith.constant 0 : index
    %c0_37 = arith.constant 0 : index
    %28 = vector.load %arg5[%c2, %c0_35, %c0_36, %c0_37] : memref<3x4x32x8xbf16, #tpu.memory_space<vmem>>, vector<1x4x32x8xbf16>
    %29 = vector.shape_cast %28 : vector<1x4x32x8xbf16> to vector<4x32x8xbf16>
    %c2_38 = arith.constant 2 : index
    %c0_39 = arith.constant 0 : index
    %c0_40 = arith.constant 0 : index
    %c0_41 = arith.constant 0 : index
    %30 = vector.load %arg6[%c2_38, %c0_39, %c0_40, %c0_41] : memref<3x4x1x8xf32, #tpu.memory_space<vmem>>, vector<1x4x1x8xf32>
    %31 = vector.shape_cast %30 : vector<1x4x1x8xf32> to vector<4x1x8xf32>
    %c0_42 = arith.constant 0 : index
    %c0_43 = arith.constant 0 : index
    %c0_44 = arith.constant 0 : index
    %32 = vector.load %arg7[%c0_42, %c0_43, %c0_44] : memref<4x8x32xbf16, #tpu.memory_space<vmem>>, vector<4x8x32xbf16>
    %c0_45 = arith.constant 0 : index
    %c0_46 = arith.constant 0 : index
    %33 = vector.load %arg8[%c0_45, %c0_46] : memref<1x32xf32, #tpu.memory_space<vmem>>, vector<1x32xf32>
    %34 = arith.truncf %1 : vector<8x32xf32> to vector<8x32xbf16>
    %35 = vector.shape_cast %34 : vector<8x32xbf16> to vector<1x8x32xbf16>
    %36 = vector.shape_cast %35 : vector<1x8x32xbf16> to vector<1x8x32xbf16>
    %37 = vector.broadcast %36 : vector<1x8x32xbf16> to vector<4x8x32xbf16>
    %38 = arith.truncf %1 : vector<8x32xf32> to vector<8x32xbf16>
    %39 = vector.shape_cast %38 : vector<8x32xbf16> to vector<1x8x32xbf16>
    %40 = vector.shape_cast %39 : vector<1x8x32xbf16> to vector<1x8x32xbf16>
    %41 = vector.broadcast %40 : vector<1x8x32xbf16> to vector<4x8x32xbf16>
    "tpu.trace_start"() <{level = 10 : i32, message = "hsd,hdf->hsf"}> : () -> ()
    %cst_47 = arith.constant dense<0.000000e+00> : vector<4x8x8xf32>
    %42 = tpu.matmul %37, %21, %cst_47 {dimension_numbers = #tpu.dot_dimension_numbers<[2], [1], [1], [2], [0, 0, 0, 1, 1, 2], [0], [0]>} : vector<4x8x32xbf16>, vector<4x32x8xbf16>, vector<4x8x8xf32> -> vector<4x8x8xf32>
    "tpu.trace_stop"() : () -> ()
    %43 = vector.broadcast %23 : vector<4x1x8xf32> to vector<4x8x8xf32>
    %44 = arith.addf %42, %43 : vector<4x8x8xf32>
    "tpu.trace_start"() <{level = 10 : i32, message = "hsd,hdf->hsf"}> : () -> ()
    %cst_48 = arith.constant dense<0.000000e+00> : vector<4x8x8xf32>
    %45 = tpu.matmul %41, %25, %cst_48 {dimension_numbers = #tpu.dot_dimension_numbers<[2], [1], [1], [2], [0, 0, 0, 1, 1, 2], [0], [0]>} : vector<4x8x32xbf16>, vector<4x32x8xbf16>, vector<4x8x8xf32> -> vector<4x8x8xf32>
    "tpu.trace_stop"() : () -> ()
    %46 = vector.broadcast %27 : vector<4x1x8xf32> to vector<4x8x8xf32>
    %47 = arith.addf %45, %46 : vector<4x8x8xf32>
    "tpu.trace_start"() <{level = 10 : i32, message = "hsd,hdf->hsf"}> : () -> ()
    %cst_49 = arith.constant dense<0.000000e+00> : vector<4x8x8xf32>
    %48 = tpu.matmul %41, %29, %cst_49 {dimension_numbers = #tpu.dot_dimension_numbers<[2], [1], [1], [2], [0, 0, 0, 1, 1, 2], [0], [0]>} : vector<4x8x32xbf16>, vector<4x32x8xbf16>, vector<4x8x8xf32> -> vector<4x8x8xf32>
    "tpu.trace_stop"() : () -> ()
    %49 = vector.broadcast %31 : vector<4x1x8xf32> to vector<4x8x8xf32>
    %50 = arith.addf %48, %49 : vector<4x8x8xf32>
    %51 = arith.truncf %44 : vector<4x8x8xf32> to vector<4x8x8xbf16>
    %52 = arith.truncf %47 : vector<4x8x8xf32> to vector<4x8x8xbf16>
    "tpu.trace_start"() <{level = 10 : i32, message = "hqd,hkd->hqk"}> : () -> ()
    %cst_50 = arith.constant dense<0.000000e+00> : vector<4x8x8xf32>
    %53 = tpu.matmul %51, %52, %cst_50 {dimension_numbers = #tpu.dot_dimension_numbers<[2], [2], [1], [1], [0, 0, 0, 1, 1, 1], [0], [0]>} : vector<4x8x8xbf16>, vector<4x8x8xbf16>, vector<4x8x8xf32> -> vector<4x8x8xf32>
    "tpu.trace_stop"() : () -> ()
    %cst_51 = arith.constant 0.353553385 : f32
    %54 = vector.broadcast %cst_51 : f32 to vector<4x8x8xf32>
    %55 = arith.mulf %53, %54 : vector<4x8x8xf32>
    %56 = vector.shape_cast %10 : vector<8x8xf32> to vector<1x8x8xf32>
    %57 = vector.broadcast %56 : vector<1x8x8xf32> to vector<4x8x8xf32>
    %58 = arith.addf %55, %57 : vector<4x8x8xf32>
    %cst_52 = arith.constant dense<0xFF800000> : vector<4x8xf32>
    %59 = vector.multi_reduction <maximumf>, %58, %cst_52 [2] : vector<4x8x8xf32> to vector<4x8xf32>
    %60 = vector.shape_cast %59 : vector<4x8xf32> to vector<4x8x1xf32>
    %61 = vector.broadcast %60 : vector<4x8x1xf32> to vector<4x8x8xf32>
    %62 = arith.subf %58, %61 : vector<4x8x8xf32>
    %63 = math.exp %62 : vector<4x8x8xf32>
    %cst_53 = arith.constant dense<0.000000e+00> : vector<4x8xf32>
    %64 = vector.multi_reduction <add>, %63, %cst_53 [2] : vector<4x8x8xf32> to vector<4x8xf32>
    %65 = vector.shape_cast %64 : vector<4x8xf32> to vector<4x8x1xf32>
    %66 = tpu.reciprocal %65 {approx = true} : vector<4x8x1xf32> -> vector<4x8x1xf32>
    %67 = vector.broadcast %66 : vector<4x8x1xf32> to vector<4x8x8xf32>
    %68 = arith.mulf %63, %67 : vector<4x8x8xf32>
    %69 = arith.truncf %68 : vector<4x8x8xf32> to vector<4x8x8xbf16>
    %70 = arith.truncf %50 : vector<4x8x8xf32> to vector<4x8x8xbf16>
    "tpu.trace_start"() <{level = 10 : i32, message = "hqk,hkd->hqd"}> : () -> ()
    %cst_54 = arith.constant dense<0.000000e+00> : vector<4x8x8xf32>
    %71 = tpu.matmul %69, %70, %cst_54 {dimension_numbers = #tpu.dot_dimension_numbers<[2], [1], [1], [2], [0, 0, 0, 1, 1, 2], [0], [0]>} : vector<4x8x8xbf16>, vector<4x8x8xbf16>, vector<4x8x8xf32> -> vector<4x8x8xf32>
    "tpu.trace_stop"() : () -> ()
    %72 = arith.truncf %71 : vector<4x8x8xf32> to vector<4x8x8xbf16>
    "tpu.trace_start"() <{level = 10 : i32, message = "hsd,hdf->hsf"}> : () -> ()
    %cst_55 = arith.constant dense<0.000000e+00> : vector<4x8x32xf32>
    %73 = tpu.matmul %72, %32, %cst_55 {dimension_numbers = #tpu.dot_dimension_numbers<[2], [1], [1], [2], [0, 0, 0, 1, 1, 2], [0], [0]>} : vector<4x8x8xbf16>, vector<4x8x32xbf16>, vector<4x8x32xf32> -> vector<4x8x32xf32>
    "tpu.trace_stop"() : () -> ()
    %cst_56 = arith.constant dense<0.000000e+00> : vector<8x32xf32>
    %74 = vector.multi_reduction <add>, %73, %cst_56 [0] : vector<4x8x32xf32> to vector<8x32xf32>
    %75 = vector.broadcast %33 : vector<1x32xf32> to vector<8x32xf32>
    %76 = arith.addf %74, %75 : vector<8x32xf32>
    %77 = arith.addf %1, %76 : vector<8x32xf32>
    %78 = vector.extract_strided_slice %18 {offsets = [0, 0], sizes = [1, 32], strides = [1, 1]} : vector<3x32xf32> to vector<1x32xf32>
    %79 = vector.shape_cast %78 : vector<1x32xf32> to vector<32xf32>
    %80 = vector.extract_strided_slice %19 {offsets = [0, 0], sizes = [1, 32], strides = [1, 1]} : vector<3x32xf32> to vector<1x32xf32>
    %81 = vector.shape_cast %80 : vector<1x32xf32> to vector<32xf32>
    %cst_57 = arith.constant dense<0.000000e+00> : vector<8xf32>
    %82 = vector.multi_reduction <add>, %77, %cst_57 [1] : vector<8x32xf32> to vector<8xf32>
    %83 = vector.shape_cast %82 : vector<8xf32> to vector<8x1xf32>
    %cst_58 = arith.constant 3.200000e+01 : f32
    %84 = vector.broadcast %cst_58 : f32 to vector<8x1xf32>
    %85 = arith.divf %83, %84 : vector<8x1xf32>
    %86 = vector.broadcast %85 : vector<8x1xf32> to vector<8x32xf32>
    %87 = arith.subf %77, %86 : vector<8x32xf32>
    %88 = arith.mulf %87, %87 : vector<8x32xf32>
    %cst_59 = arith.constant dense<0.000000e+00> : vector<8xf32>
    %89 = vector.multi_reduction <add>, %88, %cst_59 [1] : vector<8x32xf32> to vector<8xf32>
    %90 = vector.shape_cast %89 : vector<8xf32> to vector<8x1xf32>
    %cst_60 = arith.constant 0.0322580636 : f32
    %91 = vector.broadcast %cst_60 : f32 to vector<8x1xf32>
    %92 = arith.mulf %90, %91 : vector<8x1xf32>
    %93 = vector.broadcast %85 : vector<8x1xf32> to vector<8x32xf32>
    %94 = arith.subf %77, %93 : vector<8x32xf32>
    %95 = vector.shape_cast %79 : vector<32xf32> to vector<1x32xf32>
    %96 = vector.broadcast %95 : vector<1x32xf32> to vector<8x32xf32>
    %97 = arith.mulf %96, %94 : vector<8x32xf32>
    %98 = math.sqrt %92 : vector<8x1xf32>
    %cst_61 = arith.constant 9.99999997E-7 : f32
    %99 = vector.broadcast %cst_61 : f32 to vector<8x1xf32>
    %100 = arith.addf %98, %99 : vector<8x1xf32>
    %101 = vector.broadcast %100 : vector<8x1xf32> to vector<8x32xf32>
    %102 = arith.divf %97, %101 : vector<8x32xf32>
    %103 = vector.shape_cast %81 : vector<32xf32> to vector<1x32xf32>
    %104 = vector.broadcast %103 : vector<1x32xf32> to vector<8x32xf32>
    %105 = arith.addf %102, %104 : vector<8x32xf32>
    %c0_62 = arith.constant 0 : index
    %c0_63 = arith.constant 0 : index
    %c0_64 = arith.constant 0 : index
    %106 = vector.load %arg9[%c0_62, %c0_63, %c0_64] : memref<4x32x8xbf16, #tpu.memory_space<vmem>>, vector<4x32x8xbf16>
    %c0_65 = arith.constant 0 : index
    %c0_66 = arith.constant 0 : index
    %c0_67 = arith.constant 0 : index
    %107 = vector.load %arg10[%c0_65, %c0_66, %c0_67] : memref<4x1x8xf32, #tpu.memory_space<vmem>>, vector<4x1x8xf32>
    %c0_68 = arith.constant 0 : index
    %c0_69 = arith.constant 0 : index
    %c0_70 = arith.constant 0 : index
    %c0_71 = arith.constant 0 : index
    %108 = vector.load %arg11[%c0_68, %c0_69, %c0_70, %c0_71] : memref<2x4x32x8xbf16, #tpu.memory_space<vmem>>, vector<1x4x32x8xbf16>
    %109 = vector.shape_cast %108 : vector<1x4x32x8xbf16> to vector<4x32x8xbf16>
    %c0_72 = arith.constant 0 : index
    %c0_73 = arith.constant 0 : index
    %c0_74 = arith.constant 0 : index
    %c0_75 = arith.constant 0 : index
    %110 = vector.load %arg12[%c0_72, %c0_73, %c0_74, %c0_75] : memref<2x4x1x8xf32, #tpu.memory_space<vmem>>, vector<1x4x1x8xf32>
    %111 = vector.shape_cast %110 : vector<1x4x1x8xf32> to vector<4x1x8xf32>
    %c1_76 = arith.constant 1 : index
    %c0_77 = arith.constant 0 : index
    %c0_78 = arith.constant 0 : index
    %c0_79 = arith.constant 0 : index
    %112 = vector.load %arg11[%c1_76, %c0_77, %c0_78, %c0_79] : memref<2x4x32x8xbf16, #tpu.memory_space<vmem>>, vector<1x4x32x8xbf16>
    %113 = vector.shape_cast %112 : vector<1x4x32x8xbf16> to vector<4x32x8xbf16>
    %c1_80 = arith.constant 1 : index
    %c0_81 = arith.constant 0 : index
    %c0_82 = arith.constant 0 : index
    %c0_83 = arith.constant 0 : index
    %114 = vector.load %arg12[%c1_80, %c0_81, %c0_82, %c0_83] : memref<2x4x1x8xf32, #tpu.memory_space<vmem>>, vector<1x4x1x8xf32>
    %115 = vector.shape_cast %114 : vector<1x4x1x8xf32> to vector<4x1x8xf32>
    %c0_84 = arith.constant 0 : index
    %c0_85 = arith.constant 0 : index
    %c0_86 = arith.constant 0 : index
    %116 = vector.load %arg13[%c0_84, %c0_85, %c0_86] : memref<4x8x32xbf16, #tpu.memory_space<vmem>>, vector<4x8x32xbf16>
    %c0_87 = arith.constant 0 : index
    %c0_88 = arith.constant 0 : index
    %117 = vector.load %arg14[%c0_87, %c0_88] : memref<1x32xf32, #tpu.memory_space<vmem>>, vector<1x32xf32>
    %118 = arith.truncf %105 : vector<8x32xf32> to vector<8x32xbf16>
    %119 = vector.shape_cast %118 : vector<8x32xbf16> to vector<1x8x32xbf16>
    %120 = vector.shape_cast %119 : vector<1x8x32xbf16> to vector<1x8x32xbf16>
    %121 = vector.broadcast %120 : vector<1x8x32xbf16> to vector<4x8x32xbf16>
    %122 = arith.truncf %3 : vector<8x32xf32> to vector<8x32xbf16>
    %123 = vector.shape_cast %122 : vector<8x32xbf16> to vector<1x8x32xbf16>
    %124 = vector.shape_cast %123 : vector<1x8x32xbf16> to vector<1x8x32xbf16>
    %125 = vector.broadcast %124 : vector<1x8x32xbf16> to vector<4x8x32xbf16>
    "tpu.trace_start"() <{level = 10 : i32, message = "hsd,hdf->hsf"}> : () -> ()
    %cst_89 = arith.constant dense<0.000000e+00> : vector<4x8x8xf32>
    %126 = tpu.matmul %121, %106, %cst_89 {dimension_numbers = #tpu.dot_dimension_numbers<[2], [1], [1], [2], [0, 0, 0, 1, 1, 2], [0], [0]>} : vector<4x8x32xbf16>, vector<4x32x8xbf16>, vector<4x8x8xf32> -> vector<4x8x8xf32>
    "tpu.trace_stop"() : () -> ()
    %127 = vector.broadcast %107 : vector<4x1x8xf32> to vector<4x8x8xf32>
    %128 = arith.addf %126, %127 : vector<4x8x8xf32>
    "tpu.trace_start"() <{level = 10 : i32, message = "hsd,hdf->hsf"}> : () -> ()
    %cst_90 = arith.constant dense<0.000000e+00> : vector<4x8x8xf32>
    %129 = tpu.matmul %125, %109, %cst_90 {dimension_numbers = #tpu.dot_dimension_numbers<[2], [1], [1], [2], [0, 0, 0, 1, 1, 2], [0], [0]>} : vector<4x8x32xbf16>, vector<4x32x8xbf16>, vector<4x8x8xf32> -> vector<4x8x8xf32>
    "tpu.trace_stop"() : () -> ()
    %130 = vector.broadcast %111 : vector<4x1x8xf32> to vector<4x8x8xf32>
    %131 = arith.addf %129, %130 : vector<4x8x8xf32>
    "tpu.trace_start"() <{level = 10 : i32, message = "hsd,hdf->hsf"}> : () -> ()
    %cst_91 = arith.constant dense<0.000000e+00> : vector<4x8x8xf32>
    %132 = tpu.matmul %125, %113, %cst_91 {dimension_numbers = #tpu.dot_dimension_numbers<[2], [1], [1], [2], [0, 0, 0, 1, 1, 2], [0], [0]>} : vector<4x8x32xbf16>, vector<4x32x8xbf16>, vector<4x8x8xf32> -> vector<4x8x8xf32>
    "tpu.trace_stop"() : () -> ()
    %133 = vector.broadcast %115 : vector<4x1x8xf32> to vector<4x8x8xf32>
    %134 = arith.addf %132, %133 : vector<4x8x8xf32>
    %135 = arith.truncf %128 : vector<4x8x8xf32> to vector<4x8x8xbf16>
    %136 = arith.truncf %131 : vector<4x8x8xf32> to vector<4x8x8xbf16>
    "tpu.trace_start"() <{level = 10 : i32, message = "hqd,hkd->hqk"}> : () -> ()
    %cst_92 = arith.constant dense<0.000000e+00> : vector<4x8x8xf32>
    %137 = tpu.matmul %135, %136, %cst_92 {dimension_numbers = #tpu.dot_dimension_numbers<[2], [2], [1], [1], [0, 0, 0, 1, 1, 1], [0], [0]>} : vector<4x8x8xbf16>, vector<4x8x8xbf16>, vector<4x8x8xf32> -> vector<4x8x8xf32>
    "tpu.trace_stop"() : () -> ()
    %cst_93 = arith.constant 0.353553385 : f32
    %138 = vector.broadcast %cst_93 : f32 to vector<4x8x8xf32>
    %139 = arith.mulf %137, %138 : vector<4x8x8xf32>
    %140 = vector.shape_cast %17 : vector<1x8xf32> to vector<1x1x8xf32>
    %141 = vector.broadcast %140 : vector<1x1x8xf32> to vector<4x8x8xf32>
    %142 = arith.addf %139, %141 : vector<4x8x8xf32>
    %cst_94 = arith.constant dense<0xFF800000> : vector<4x8xf32>
    %143 = vector.multi_reduction <maximumf>, %142, %cst_94 [2] : vector<4x8x8xf32> to vector<4x8xf32>
    %144 = vector.shape_cast %143 : vector<4x8xf32> to vector<4x8x1xf32>
    %145 = vector.broadcast %144 : vector<4x8x1xf32> to vector<4x8x8xf32>
    %146 = arith.subf %142, %145 : vector<4x8x8xf32>
    %147 = math.exp %146 : vector<4x8x8xf32>
    %cst_95 = arith.constant dense<0.000000e+00> : vector<4x8xf32>
    %148 = vector.multi_reduction <add>, %147, %cst_95 [2] : vector<4x8x8xf32> to vector<4x8xf32>
    %149 = vector.shape_cast %148 : vector<4x8xf32> to vector<4x8x1xf32>
    %150 = tpu.reciprocal %149 {approx = true} : vector<4x8x1xf32> -> vector<4x8x1xf32>
    %151 = vector.broadcast %150 : vector<4x8x1xf32> to vector<4x8x8xf32>
    %152 = arith.mulf %147, %151 : vector<4x8x8xf32>
    %153 = arith.truncf %152 : vector<4x8x8xf32> to vector<4x8x8xbf16>
    %154 = arith.truncf %134 : vector<4x8x8xf32> to vector<4x8x8xbf16>
    "tpu.trace_start"() <{level = 10 : i32, message = "hqk,hkd->hqd"}> : () -> ()
    %cst_96 = arith.constant dense<0.000000e+00> : vector<4x8x8xf32>
    %155 = tpu.matmul %153, %154, %cst_96 {dimension_numbers = #tpu.dot_dimension_numbers<[2], [1], [1], [2], [0, 0, 0, 1, 1, 2], [0], [0]>} : vector<4x8x8xbf16>, vector<4x8x8xbf16>, vector<4x8x8xf32> -> vector<4x8x8xf32>
    "tpu.trace_stop"() : () -> ()
    %156 = arith.truncf %155 : vector<4x8x8xf32> to vector<4x8x8xbf16>
    "tpu.trace_start"() <{level = 10 : i32, message = "hsd,hdf->hsf"}> : () -> ()
    %cst_97 = arith.constant dense<0.000000e+00> : vector<4x8x32xf32>
    %157 = tpu.matmul %156, %116, %cst_97 {dimension_numbers = #tpu.dot_dimension_numbers<[2], [1], [1], [2], [0, 0, 0, 1, 1, 2], [0], [0]>} : vector<4x8x8xbf16>, vector<4x8x32xbf16>, vector<4x8x32xf32> -> vector<4x8x32xf32>
    "tpu.trace_stop"() : () -> ()
    %cst_98 = arith.constant dense<0.000000e+00> : vector<8x32xf32>
    %158 = vector.multi_reduction <add>, %157, %cst_98 [0] : vector<4x8x32xf32> to vector<8x32xf32>
    %159 = vector.broadcast %117 : vector<1x32xf32> to vector<8x32xf32>
    %160 = arith.addf %158, %159 : vector<8x32xf32>
    %161 = arith.addf %105, %160 : vector<8x32xf32>
    %162 = vector.extract_strided_slice %18 {offsets = [1, 0], sizes = [1, 32], strides = [1, 1]} : vector<3x32xf32> to vector<1x32xf32>
    %163 = vector.shape_cast %162 : vector<1x32xf32> to vector<32xf32>
    %164 = vector.extract_strided_slice %19 {offsets = [1, 0], sizes = [1, 32], strides = [1, 1]} : vector<3x32xf32> to vector<1x32xf32>
    %165 = vector.shape_cast %164 : vector<1x32xf32> to vector<32xf32>
    %cst_99 = arith.constant dense<0.000000e+00> : vector<8xf32>
    %166 = vector.multi_reduction <add>, %161, %cst_99 [1] : vector<8x32xf32> to vector<8xf32>
    %167 = vector.shape_cast %166 : vector<8xf32> to vector<8x1xf32>
    %cst_100 = arith.constant 3.200000e+01 : f32
    %168 = vector.broadcast %cst_100 : f32 to vector<8x1xf32>
    %169 = arith.divf %167, %168 : vector<8x1xf32>
    %170 = vector.broadcast %169 : vector<8x1xf32> to vector<8x32xf32>
    %171 = arith.subf %161, %170 : vector<8x32xf32>
    %172 = arith.mulf %171, %171 : vector<8x32xf32>
    %cst_101 = arith.constant dense<0.000000e+00> : vector<8xf32>
    %173 = vector.multi_reduction <add>, %172, %cst_101 [1] : vector<8x32xf32> to vector<8xf32>
    %174 = vector.shape_cast %173 : vector<8xf32> to vector<8x1xf32>
    %cst_102 = arith.constant 0.0322580636 : f32
    %175 = vector.broadcast %cst_102 : f32 to vector<8x1xf32>
    %176 = arith.mulf %174, %175 : vector<8x1xf32>
    %177 = vector.broadcast %169 : vector<8x1xf32> to vector<8x32xf32>
    %178 = arith.subf %161, %177 : vector<8x32xf32>
    %179 = vector.shape_cast %163 : vector<32xf32> to vector<1x32xf32>
    %180 = vector.broadcast %179 : vector<1x32xf32> to vector<8x32xf32>
    %181 = arith.mulf %180, %178 : vector<8x32xf32>
    %182 = math.sqrt %176 : vector<8x1xf32>
    %cst_103 = arith.constant 9.99999997E-7 : f32
    %183 = vector.broadcast %cst_103 : f32 to vector<8x1xf32>
    %184 = arith.addf %182, %183 : vector<8x1xf32>
    %185 = vector.broadcast %184 : vector<8x1xf32> to vector<8x32xf32>
    %186 = arith.divf %181, %185 : vector<8x32xf32>
    %187 = vector.shape_cast %165 : vector<32xf32> to vector<1x32xf32>
    %188 = vector.broadcast %187 : vector<1x32xf32> to vector<8x32xf32>
    %189 = arith.addf %186, %188 : vector<8x32xf32>
    %190 = arith.truncf %189 : vector<8x32xf32> to vector<8x32xbf16>
    %c0_104 = arith.constant 0 : index
    %c0_105 = arith.constant 0 : index
    %191 = vector.load %arg15[%c0_104, %c0_105] : memref<32x2048xbf16, #tpu.memory_space<vmem>>, vector<32x2048xbf16>
    %cst_106 = arith.constant dense<0.000000e+00> : vector<8x2048xf32>
    %192 = tpu.matmul %190, %191, %cst_106 {dimension_numbers = #tpu.dot_dimension_numbers<[1], [0], [0], [1], [0, 0, 1, 1], [], []>} : vector<8x32xbf16>, vector<32x2048xbf16>, vector<8x2048xf32> -> vector<8x2048xf32>
    %c0_107 = arith.constant 0 : index
    %c0_108 = arith.constant 0 : index
    %193 = vector.load %arg16[%c0_107, %c0_108] : memref<1x2048xf32, #tpu.memory_space<vmem>>, vector<1x2048xf32>
    %194 = vector.broadcast %193 : vector<1x2048xf32> to vector<8x2048xf32>
    %195 = arith.addf %192, %194 : vector<8x2048xf32>
    %cst_109 = arith.constant 0.000000e+00 : f32
    %196 = vector.broadcast %cst_109 : f32 to vector<8x2048xf32>
    %197 = arith.maximumf %195, %196 : vector<8x2048xf32>
    %198 = arith.truncf %197 : vector<8x2048xf32> to vector<8x2048xbf16>
    %c0_110 = arith.constant 0 : index
    %c0_111 = arith.constant 0 : index
    %199 = vector.load %arg17[%c0_110, %c0_111] : memref<2048x32xbf16, #tpu.memory_space<vmem>>, vector<2048x32xbf16>
    %cst_112 = arith.constant dense<0.000000e+00> : vector<8x32xf32>
    %200 = tpu.matmul %198, %199, %cst_112 {dimension_numbers = #tpu.dot_dimension_numbers<[1], [0], [0], [1], [0, 0, 1, 1], [], []>} : vector<8x2048xbf16>, vector<2048x32xbf16>, vector<8x32xf32> -> vector<8x32xf32>
    %c0_113 = arith.constant 0 : index
    %c0_114 = arith.constant 0 : index
    %201 = vector.load %arg18[%c0_113, %c0_114] : memref<1x32xf32, #tpu.memory_space<vmem>>, vector<1x32xf32>
    %202 = vector.broadcast %201 : vector<1x32xf32> to vector<8x32xf32>
    %203 = arith.addf %200, %202 : vector<8x32xf32>
    %204 = arith.addf %189, %203 : vector<8x32xf32>
    %205 = vector.extract_strided_slice %18 {offsets = [2, 0], sizes = [1, 32], strides = [1, 1]} : vector<3x32xf32> to vector<1x32xf32>
    %206 = vector.shape_cast %205 : vector<1x32xf32> to vector<32xf32>
    %207 = vector.extract_strided_slice %19 {offsets = [2, 0], sizes = [1, 32], strides = [1, 1]} : vector<3x32xf32> to vector<1x32xf32>
    %208 = vector.shape_cast %207 : vector<1x32xf32> to vector<32xf32>
    %cst_115 = arith.constant dense<0.000000e+00> : vector<8xf32>
    %209 = vector.multi_reduction <add>, %204, %cst_115 [1] : vector<8x32xf32> to vector<8xf32>
    %210 = vector.shape_cast %209 : vector<8xf32> to vector<8x1xf32>
    %cst_116 = arith.constant 3.200000e+01 : f32
    %211 = vector.broadcast %cst_116 : f32 to vector<8x1xf32>
    %212 = arith.divf %210, %211 : vector<8x1xf32>
    %213 = vector.broadcast %212 : vector<8x1xf32> to vector<8x32xf32>
    %214 = arith.subf %204, %213 : vector<8x32xf32>
    %215 = arith.mulf %214, %214 : vector<8x32xf32>
    %cst_117 = arith.constant dense<0.000000e+00> : vector<8xf32>
    %216 = vector.multi_reduction <add>, %215, %cst_117 [1] : vector<8x32xf32> to vector<8xf32>
    %217 = vector.shape_cast %216 : vector<8xf32> to vector<8x1xf32>
    %cst_118 = arith.constant 0.0322580636 : f32
    %218 = vector.broadcast %cst_118 : f32 to vector<8x1xf32>
    %219 = arith.mulf %217, %218 : vector<8x1xf32>
    %220 = vector.broadcast %212 : vector<8x1xf32> to vector<8x32xf32>
    %221 = arith.subf %204, %220 : vector<8x32xf32>
    %222 = vector.shape_cast %206 : vector<32xf32> to vector<1x32xf32>
    %223 = vector.broadcast %222 : vector<1x32xf32> to vector<8x32xf32>
    %224 = arith.mulf %223, %221 : vector<8x32xf32>
    %225 = math.sqrt %219 : vector<8x1xf32>
    %cst_119 = arith.constant 9.99999997E-7 : f32
    %226 = vector.broadcast %cst_119 : f32 to vector<8x1xf32>
    %227 = arith.addf %225, %226 : vector<8x1xf32>
    %228 = vector.broadcast %227 : vector<8x1xf32> to vector<8x32xf32>
    %229 = arith.divf %224, %228 : vector<8x32xf32>
    %230 = vector.shape_cast %208 : vector<32xf32> to vector<1x32xf32>
    %231 = vector.broadcast %230 : vector<1x32xf32> to vector<8x32xf32>
    %232 = arith.addf %229, %231 : vector<8x32xf32>
    %c0_120 = arith.constant 0 : index
    %c0_121 = arith.constant 0 : index
    %c0_122 = arith.constant 0 : index
    %233 = vector.load %arg21[%c0_120, %c0_121, %c0_122] : memref<1x8x32xf32, #tpu.memory_space<vmem>>, vector<1x8x32xf32>
    %234 = vector.shape_cast %233 : vector<1x8x32xf32> to vector<8x32xf32>
    %235 = vector.shape_cast %232 : vector<8x32xf32> to vector<1x8x32xf32>
    tpu.vector_store %arg21[%c0_120, %c0_121, %c0_122], %235 {strides = array<i32>} : memref<1x8x32xf32, #tpu.memory_space<vmem>>, vector<1x8x32xf32>,
    return
  }
  func.func @transform_0(%arg0: i32) -> (i32, i32, i32) {
    %c0_i32 = arith.constant 0 : i32
    %c0_i32_0 = arith.constant 0 : i32
    %c0_i32_1 = arith.constant 0 : i32
    return %arg0, %c0_i32, %c0_i32_0 : i32, i32, i32
  }
  func.func @transform_1(%arg0: i32) -> (i32, i32, i32) {
    %c0_i32 = arith.constant 0 : i32
    %c0_i32_0 = arith.constant 0 : i32
    %c0_i32_1 = arith.constant 0 : i32
    return %arg0, %c0_i32, %c0_i32_0 : i32, i32, i32
  }
  func.func @transform_2(%arg0: i32) -> (i32, i32, i32) {
    %c0_i32 = arith.constant 0 : i32
    %c0_i32_0 = arith.constant 0 : i32
    %c0_i32_1 = arith.constant 0 : i32
    return %arg0, %c0_i32, %c0_i32_0 : i32, i32, i32
  }
  func.func @transform_3(%arg0: i32) -> (i32, i32, i32) {
    %c0_i32 = arith.constant 0 : i32
    %c0_i32_0 = arith.constant 0 : i32
    %c0_i32_1 = arith.constant 0 : i32
    return %arg0, %c0_i32, %c0_i32_0 : i32, i32, i32
  }
  func.func @transform_4(%arg0: i32) -> (i32, i32, i32, i32) {
    %c0_i32 = arith.constant 0 : i32
    %c0_i32_0 = arith.constant 0 : i32
    %c0_i32_1 = arith.constant 0 : i32
    %c0_i32_2 = arith.constant 0 : i32
    %c0_i32_3 = arith.constant 0 : i32
    return %c0_i32, %c0_i32_0, %c0_i32_1, %c0_i32_2 : i32, i32, i32, i32
  }
  func.func @transform_5(%arg0: i32) -> (i32, i32, i32, i32) {
    %c0_i32 = arith.constant 0 : i32
    %c0_i32_0 = arith.constant 0 : i32
    %c0_i32_1 = arith.constant 0 : i32
    %c0_i32_2 = arith.constant 0 : i32
    %c0_i32_3 = arith.constant 0 : i32
    return %c0_i32, %c0_i32_0, %c0_i32_1, %c0_i32_2 : i32, i32, i32, i32
  }
  func.func @transform_6(%arg0: i32) -> (i32, i32, i32) {
    %c0_i32 = arith.constant 0 : i32
    %c0_i32_0 = arith.constant 0 : i32
    %c0_i32_1 = arith.constant 0 : i32
    %c0_i32_2 = arith.constant 0 : i32
    return %c0_i32, %c0_i32_0, %c0_i32_1 : i32, i32, i32
  }
  func.func @transform_7(%arg0: i32) -> (i32, i32) {
    %c0_i32 = arith.constant 0 : i32
    %c0_i32_0 = arith.constant 0 : i32
    %c0_i32_1 = arith.constant 0 : i32
    return %c0_i32, %c0_i32_0 : i32, i32
  }
  func.func @transform_8(%arg0: i32) -> (i32, i32, i32) {
    %c0_i32 = arith.constant 0 : i32
    %c0_i32_0 = arith.constant 0 : i32
    %c0_i32_1 = arith.constant 0 : i32
    %c0_i32_2 = arith.constant 0 : i32
    return %c0_i32, %c0_i32_0, %c0_i32_1 : i32, i32, i32
  }
  func.func @transform_9(%arg0: i32) -> (i32, i32, i32) {
    %c0_i32 = arith.constant 0 : i32
    %c0_i32_0 = arith.constant 0 : i32
    %c0_i32_1 = arith.constant 0 : i32
    %c0_i32_2 = arith.constant 0 : i32
    return %c0_i32, %c0_i32_0, %c0_i32_1 : i32, i32, i32
  }
  func.func @transform_10(%arg0: i32) -> (i32, i32, i32, i32) {
    %c0_i32 = arith.constant 0 : i32
    %c0_i32_0 = arith.constant 0 : i32
    %c0_i32_1 = arith.constant 0 : i32
    %c0_i32_2 = arith.constant 0 : i32
    %c0_i32_3 = arith.constant 0 : i32
    return %c0_i32, %c0_i32_0, %c0_i32_1, %c0_i32_2 : i32, i32, i32, i32
  }
  func.func @transform_11(%arg0: i32) -> (i32, i32, i32, i32) {
    %c0_i32 = arith.constant 0 : i32
    %c0_i32_0 = arith.constant 0 : i32
    %c0_i32_1 = arith.constant 0 : i32
    %c0_i32_2 = arith.constant 0 : i32
    %c0_i32_3 = arith.constant 0 : i32
    return %c0_i32, %c0_i32_0, %c0_i32_1, %c0_i32_2 : i32, i32, i32, i32
  }
  func.func @transform_12(%arg0: i32) -> (i32, i32, i32) {
    %c0_i32 = arith.constant 0 : i32
    %c0_i32_0 = arith.constant 0 : i32
    %c0_i32_1 = arith.constant 0 : i32
    %c0_i32_2 = arith.constant 0 : i32
    return %c0_i32, %c0_i32_0, %c0_i32_1 : i32, i32, i32
  }
  func.func @transform_13(%arg0: i32) -> (i32, i32) {
    %c0_i32 = arith.constant 0 : i32
    %c0_i32_0 = arith.constant 0 : i32
    %c0_i32_1 = arith.constant 0 : i32
    return %c0_i32, %c0_i32_0 : i32, i32
  }
  func.func @transform_14(%arg0: i32) -> (i32, i32) {
    %c0_i32 = arith.constant 0 : i32
    %c0_i32_0 = arith.constant 0 : i32
    %c0_i32_1 = arith.constant 0 : i32
    return %c0_i32, %c0_i32_0 : i32, i32
  }
  func.func @transform_15(%arg0: i32) -> (i32, i32) {
    %c0_i32 = arith.constant 0 : i32
    %c0_i32_0 = arith.constant 0 : i32
    %c0_i32_1 = arith.constant 0 : i32
    return %c0_i32, %c0_i32_0 : i32, i32
  }
  func.func @transform_16(%arg0: i32) -> (i32, i32) {
    %c0_i32 = arith.constant 0 : i32
    %c0_i32_0 = arith.constant 0 : i32
    %c0_i32_1 = arith.constant 0 : i32
    return %c0_i32, %c0_i32_0 : i32, i32
  }
  func.func @transform_17(%arg0: i32) -> (i32, i32) {
    %c0_i32 = arith.constant 0 : i32
    %c0_i32_0 = arith.constant 0 : i32
    %c0_i32_1 = arith.constant 0 : i32
    return %c0_i32, %c0_i32_0 : i32, i32
  }
  func.func @transform_18(%arg0: i32) -> (i32, i32) {
    %c0_i32 = arith.constant 0 : i32
    %c0_i32_0 = arith.constant 0 : i32
    %c0_i32_1 = arith.constant 0 : i32
    return %c0_i32, %c0_i32_0 : i32, i32
  }
  func.func @transform_19(%arg0: i32) -> (i32, i32) {
    %c0_i32 = arith.constant 0 : i32
    %c0_i32_0 = arith.constant 0 : i32
    %c0_i32_1 = arith.constant 0 : i32
    return %c0_i32, %c0_i32_0 : i32, i32
  }
  func.func @transform_20(%arg0: i32) -> (i32, i32, i32) {
    %c0_i32 = arith.constant 0 : i32
    %c0_i32_0 = arith.constant 0 : i32
    %c0_i32_1 = arith.constant 0 : i32
    return %arg0, %c0_i32, %c0_i32_0 : i32, i32, i32
  }
}

</mosaic_0001>

<llo_original>
// kernel: tpu_custom_call.1
$region0: #{tpu_custom_call.1}
  #allocation0 [shape = 'u32[]', space=smem, size = 0x4, offset = 0x4, fixed_abs, tag = 'smem constant byte address 0x4 - core index']
  #allocation1 [shape = 'u32[72,128]{1,0:T(1,128)}', space=vmem, size = 0x9000, scoped, tag = 'internal scratch']
  %s0 = inlined_call_operand.vmem [shape: f32[2,8,32], index: 0, kind: input, shape index: {}]
  %s1 = inlined_call_operand.vmem [shape: f32[2,8,32], index: 1, kind: input, shape index: {}]
  %s2 = inlined_call_operand.vmem [shape: f32[2,8,8], index: 2, kind: input, shape index: {}]
  %s3 = inlined_call_operand.vmem [shape: f32[2,1,8], index: 3, kind: input, shape index: {}]
  %s4 = inlined_call_operand.vmem [shape: bf16[3,4,32,8], index: 4, kind: input, shape index: {}]
  %s5 = inlined_call_operand.vmem [shape: f32[3,4,1,8], index: 5, kind: input, shape index: {}]
  %s6 = inlined_call_operand.vmem [shape: bf16[4,8,32], index: 6, kind: input, shape index: {}]
  %s7 = inlined_call_operand.vmem [shape: f32[1,32], index: 7, kind: input, shape index: {}]
  %s8 = inlined_call_operand.vmem [shape: bf16[4,32,8], index: 8, kind: input, shape index: {}]
  %s9 = inlined_call_operand.vmem [shape: f32[4,1,8], index: 9, kind: input, shape index: {}]
  %s10 = inlined_call_operand.vmem [shape: bf16[2,4,32,8], index: 10, kind: input, shape index: {}]
  %s11 = inlined_call_operand.vmem [shape: f32[2,4,1,8], index: 11, kind: input, shape index: {}]
  %s12 = inlined_call_operand.vmem [shape: bf16[4,8,32], index: 12, kind: input, shape index: {}]
  %s13 = inlined_call_operand.vmem [shape: f32[1,32], index: 13, kind: input, shape index: {}]
  %s14 = inlined_call_operand.vmem [shape: bf16[32,2048], index: 14, kind: input, shape index: {}]
  %s15 = inlined_call_operand.vmem [shape: f32[1,2048], index: 15, kind: input, shape index: {}]
  %s16 = inlined_call_operand.vmem [shape: bf16[2048,32], index: 16, kind: input, shape index: {}]
  %s17 = inlined_call_operand.vmem [shape: f32[1,32], index: 17, kind: input, shape index: {}]
  %s18 = inlined_call_operand.vmem [shape: f32[3,32], index: 18, kind: input, shape index: {}]
  %s19 = inlined_call_operand.vmem [shape: f32[3,32], index: 19, kind: input, shape index: {}]
  %s20 = inlined_call_operand.hbm [shape: f32[2,8,32], index: 20, kind: output, shape index: {}]
  %s21 = sld [smem:[#allocation0]]
  $region113: #{tpu_custom_call.1} parent=0
    _
  %s23 = ssub.s32 1, %s21
  %s24 = scalar_select 0, %s23, %s21
  $region1: #{tpu_custom_call.1} parent=0
    #allocation2 [shape = 'u8[8192]{0}', space=vmem, size = 0x2000, scoped, tag = 'output window, operand 0']
    #allocation3 [shape = 's32[2]{0}', space=sflag, size = 0x8, scoped, tag = 'scoped memory for tpu_custom_call.1']
    %25 = vsyncpa [#allocation3], 0
    %s26 = scalar_lea.sflag [#allocation3], 1
    %27 = vsyncpa %s26, 0
    loop: start=0, step=1, limit=4
    $region2: #{tpu_custom_call.1} parent=1 // loop_pre_header
      _
    $region3: #{tpu_custom_call.1} parent=1 // loop_header
      %s29 = sphi 0, %s33
      %p30 = scmp.ge.s32.totalorder %s29, 4
      %s39 = sphi 0, %s41
      %s42 = sphi 0, %s39
      %s43 = sphi 0, %s42
      %s59 = sphi 0, %s43
      %s65 = sphi 0, %s67
      %s68 = sphi 0, %s65
      %s69 = sphi 0, %s68
      %s85 = sphi 0, %s69
      %s91 = sphi 0, %s93
      %s94 = sphi 0, %s91
      %s95 = sphi 0, %s94
      %s111 = sphi 0, %s95
      %s117 = sphi 0, %s119
      %s120 = sphi 0, %s117
      %s121 = sphi 0, %s120
      %s137 = sphi 0, %s121
      %s141 = sphi 0, %s141
      %s143 = sphi 0, %s141
      %s144 = sphi 0, %s143
      %s158 = sphi 0, %s144
      %s162 = sphi 0, %s162
      %s164 = sphi 0, %s162
      %s165 = sphi 0, %s164
      %s179 = sphi 0, %s165
      %s183 = sphi 0, %s183
      %s185 = sphi 0, %s183
      %s186 = sphi 0, %s185
      %s200 = sphi 0, %s186
      %s204 = sphi 0, %s204
      %s206 = sphi 0, %s204
      %s207 = sphi 0, %s206
      %s221 = sphi 0, %s207
      %s225 = sphi 0, %s225
      %s227 = sphi 0, %s225
      %s228 = sphi 0, %s227
      %s242 = sphi 0, %s228
      %s246 = sphi 0, %s246
      %s248 = sphi 0, %s246
      %s249 = sphi 0, %s248
      %s263 = sphi 0, %s249
      %s267 = sphi 0, %s267
      %s269 = sphi 0, %s267
      %s270 = sphi 0, %s269
      %s284 = sphi 0, %s270
      %s288 = sphi 0, %s288
      %s290 = sphi 0, %s288
      %s291 = sphi 0, %s290
      %s305 = sphi 0, %s291
      %s309 = sphi 0, %s309
      %s311 = sphi 0, %s309
      %s312 = sphi 0, %s311
      %s326 = sphi 0, %s312
      %s330 = sphi 0, %s330
      %s332 = sphi 0, %s330
      %s333 = sphi 0, %s332
      %s347 = sphi 0, %s333
      %s351 = sphi 0, %s351
      %s353 = sphi 0, %s351
      %s354 = sphi 0, %s353
      %s368 = sphi 0, %s354
      %s372 = sphi 0, %s372
      %s374 = sphi 0, %s372
      %s375 = sphi 0, %s374
      %s389 = sphi 0, %s375
      %s393 = sphi 0, %s393
      %s395 = sphi 0, %s393
      %s396 = sphi 0, %s395
      %s410 = sphi 0, %s396
      %s414 = sphi 0, %s414
      %s416 = sphi 0, %s414
      %s417 = sphi 0, %s416
      %s431 = sphi 0, %s417
      %s435 = sphi 0, %s435
      %s437 = sphi 0, %s435
      %s438 = sphi 0, %s437
      %s452 = sphi 0, %s438
      %s456 = sphi 0, %s456
      %s458 = sphi 0, %s456
      %s459 = sphi 0, %s458
      %s473 = sphi 0, %s459
      %s479 = sphi 0, %s481
      %s482 = sphi 0, %s479
      %s483 = sphi 0, %s482
      %s499 = sphi 0, %s483
    $region4: #{tpu_custom_call.1} parent=1 // loop_header_branch
      %32 = sbr.rel (%p30) target = $region8
    $region5: #{tpu_custom_call.1} parent=1 // loop_body
      %s34 = ssub.s32 %s29, 1
      %s35 = ssub.s32 %s29, 2
      %s36 = sadd.s32 %s29, 1
      %s37 = ssub.s32 %s29, %s36
      %p38 = scmp.eq.s32.totalorder %s37, 0
      %s40 = sadd.s32 %s39, 1
      %s41 = scalar_select %p38, %s39, %s40
      %p44 = pneg %p38
      %p45 = scmp.eq.s32.totalorder %s29, 1
      %p46 = por %p44, %p45
      %p47 = scmp.ne.s32.totalorder %s39, %s42
      %p48 = scmp.eq.s32.totalorder %s29, 0
      %p49 = por %p47, %p48
      %p50 = scmp.ne.s32.totalorder %s39, %s42
      %p51 = scmp.eq.s32.totalorder %s34, 1
      %p52 = por %p50, %p51
      %p53 = scmp.ne.s32.totalorder %s42, %s43
      %p54 = scmp.eq.s32.totalorder %s34, 0
      %p55 = por %p53, %p54
      %p56 = scmp.ne.s32.totalorder %s42, %s43
      %p57 = scmp.eq.s32.totalorder %s35, 1
      %p58 = por %p56, %p57
      %p60 = scmp.ne.s32.totalorder %s43, %s59
      %p61 = scmp.eq.s32.totalorder %s35, 0
      %p62 = por %p60, %p61
      %s63 = ssub.s32 %s29, %s36
      %p64 = scmp.eq.s32.totalorder %s63, 0
      %s66 = sadd.s32 %s65, 1
      %s67 = scalar_select %p64, %s65, %s66
      %p70 = pneg %p64
      %p71 = scmp.eq.s32.totalorder %s29, 1
      %p72 = por %p70, %p71
      %p73 = scmp.ne.s32.totalorder %s65, %s68
      %p74 = scmp.eq.s32.totalorder %s29, 0
      %p75 = por %p73, %p74
      %p76 = scmp.ne.s32.totalorder %s65, %s68
      %p77 = scmp.eq.s32.totalorder %s34, 1
      %p78 = por %p76, %p77
      %p79 = scmp.ne.s32.totalorder %s68, %s69
      %p80 = scmp.eq.s32.totalorder %s34, 0
      %p81 = por %p79, %p80
      %p82 = scmp.ne.s32.totalorder %s68, %s69
      %p83 = scmp.eq.s32.totalorder %s35, 1
      %p84 = por %p82, %p83
      %p86 = scmp.ne.s32.totalorder %s69, %s85
      %p87 = scmp.eq.s32.totalorder %s35, 0
      %p88 = por %p86, %p87
      %s89 = ssub.s32 %s29, %s36
      %p90 = scmp.eq.s32.totalorder %s89, 0
      %s92 = sadd.s32 %s91, 1
      %s93 = scalar_select %p90, %s91, %s92
      %p96 = pneg %p90
      %p97 = scmp.eq.s32.totalorder %s29, 1
      %p98 = por %p96, %p97
      %p99 = scmp.ne.s32.totalorder %s91, %s94
      %p100 = scmp.eq.s32.totalorder %s29, 0
      %p101 = por %p99, %p100
      %p102 = scmp.ne.s32.totalorder %s91, %s94
      %p103 = scmp.eq.s32.totalorder %s34, 1
      %p104 = por %p102, %p103
      %p105 = scmp.ne.s32.totalorder %s94, %s95
      %p106 = scmp.eq.s32.totalorder %s34, 0
      %p107 = por %p105, %p106
      %p108 = scmp.ne.s32.totalorder %s94, %s95
      %p109 = scmp.eq.s32.totalorder %s35, 1
      %p110 = por %p108, %p109
      %p112 = scmp.ne.s32.totalorder %s95, %s111
      %p113 = scmp.eq.s32.totalorder %s35, 0
      %p114 = por %p112, %p113
      %s115 = ssub.s32 %s29, %s36
      %p116 = scmp.eq.s32.totalorder %s115, 0
      %s118 = sadd.s32 %s117, 1
      %s119 = scalar_select %p116, %s117, %s118
      %p122 = pneg %p116
      %p123 = scmp.eq.s32.totalorder %s29, 1
      %p124 = por %p122, %p123
      %p125 = scmp.ne.s32.totalorder %s117, %s120
      %p126 = scmp.eq.s32.totalorder %s29, 0
      %p127 = por %p125, %p126
      %p128 = scmp.ne.s32.totalorder %s117, %s120
      %p129 = scmp.eq.s32.totalorder %s34, 1
      %p130 = por %p128, %p129
      %p131 = scmp.ne.s32.totalorder %s120, %s121
      %p132 = scmp.eq.s32.totalorder %s34, 0
      %p133 = por %p131, %p132
      %p134 = scmp.ne.s32.totalorder %s120, %s121
      %p135 = scmp.eq.s32.totalorder %s35, 1
      %p136 = por %p134, %p135
      %p138 = scmp.ne.s32.totalorder %s121, %s137
      %p139 = scmp.eq.s32.totalorder %s35, 0
      %p140 = por %p138, %p139
      %s142 = sadd.s32 %s141, 1
      %p145 = scmp.eq.s32.totalorder %s29, 1
      %p146 = scmp.ne.s32.totalorder %s141, %s143
      %p147 = scmp.eq.s32.totalorder %s29, 0
      %p148 = por %p146, %p147
      %p149 = scmp.ne.s32.totalorder %s141, %s143
      %p150 = scmp.eq.s32.totalorder %s34, 1
      %p151 = por %p149, %p150
      %p152 = scmp.ne.s32.totalorder %s143, %s144
      %p153 = scmp.eq.s32.totalorder %s34, 0
      %p154 = por %p152, %p153
      %p155 = scmp.ne.s32.totalorder %s143, %s144
      %p156 = scmp.eq.s32.totalorder %s35, 1
      %p157 = por %p155, %p156
      %p159 = scmp.ne.s32.totalorder %s144, %s158
      %p160 = scmp.eq.s32.totalorder %s35, 0
      %p161 = por %p159, %p160
      %s163 = sadd.s32 %s162, 1
      %p166 = scmp.eq.s32.totalorder %s29, 1
      %p167 = scmp.ne.s32.totalorder %s162, %s164
      %p168 = scmp.eq.s32.totalorder %s29, 0
      %p169 = por %p167, %p168
      %p170 = scmp.ne.s32.totalorder %s162, %s164
      %p171 = scmp.eq.s32.totalorder %s34, 1
      %p172 = por %p170, %p171
      %p173 = scmp.ne.s32.totalorder %s164, %s165
      %p174 = scmp.eq.s32.totalorder %s34, 0
      %p175 = por %p173, %p174
      %p176 = scmp.ne.s32.totalorder %s164, %s165
      %p177 = scmp.eq.s32.totalorder %s35, 1
      %p178 = por %p176, %p177
      %p180 = scmp.ne.s32.totalorder %s165, %s179
      %p181 = scmp.eq.s32.totalorder %s35, 0
      %p182 = por %p180, %p181
      %s184 = sadd.s32 %s183, 1
      %p187 = scmp.eq.s32.totalorder %s29, 1
      %p188 = scmp.ne.s32.totalorder %s183, %s185
      %p189 = scmp.eq.s32.totalorder %s29, 0
      %p190 = por %p188, %p189
      %p191 = scmp.ne.s32.totalorder %s183, %s185
      %p192 = scmp.eq.s32.totalorder %s34, 1
      %p193 = por %p191, %p192
      %p194 = scmp.ne.s32.totalorder %s185, %s186
      %p195 = scmp.eq.s32.totalorder %s34, 0
      %p196 = por %p194, %p195
      %p197 = scmp.ne.s32.totalorder %s185, %s186
      %p198 = scmp.eq.s32.totalorder %s35, 1
      %p199 = por %p197, %p198
      %p201 = scmp.ne.s32.totalorder %s186, %s200
      %p202 = scmp.eq.s32.totalorder %s35, 0
      %p203 = por %p201, %p202
      %s205 = sadd.s32 %s204, 1
      %p208 = scmp.eq.s32.totalorder %s29, 1
      %p209 = scmp.ne.s32.totalorder %s204, %s206
      %p210 = scmp.eq.s32.totalorder %s29, 0
      %p211 = por %p209, %p210
      %p212 = scmp.ne.s32.totalorder %s204, %s206
      %p213 = scmp.eq.s32.totalorder %s34, 1
      %p214 = por %p212, %p213
      %p215 = scmp.ne.s32.totalorder %s206, %s207
      %p216 = scmp.eq.s32.totalorder %s34, 0
      %p217 = por %p215, %p216
      %p218 = scmp.ne.s32.totalorder %s206, %s207
      %p219 = scmp.eq.s32.totalorder %s35, 1
      %p220 = por %p218, %p219
      %p222 = scmp.ne.s32.totalorder %s207, %s221
      %p223 = scmp.eq.s32.totalorder %s35, 0
      %p224 = por %p222, %p223
      %s226 = sadd.s32 %s225, 1
      %p229 = scmp.eq.s32.totalorder %s29, 1
      %p230 = scmp.ne.s32.totalorder %s225, %s227
      %p231 = scmp.eq.s32.totalorder %s29, 0
      %p232 = por %p230, %p231
      %p233 = scmp.ne.s32.totalorder %s225, %s227
      %p234 = scmp.eq.s32.totalorder %s34, 1
      %p235 = por %p233, %p234
      %p236 = scmp.ne.s32.totalorder %s227, %s228
      %p237 = scmp.eq.s32.totalorder %s34, 0
      %p238 = por %p236, %p237
      %p239 = scmp.ne.s32.totalorder %s227, %s228
      %p240 = scmp.eq.s32.totalorder %s35, 1
      %p241 = por %p239, %p240
      %p243 = scmp.ne.s32.totalorder %s228, %s242
      %p244 = scmp.eq.s32.totalorder %s35, 0
      %p245 = por %p243, %p244
      %s247 = sadd.s32 %s246, 1
      %p250 = scmp.eq.s32.totalorder %s29, 1
      %p251 = scmp.ne.s32.totalorder %s246, %s248
      %p252 = scmp.eq.s32.totalorder %s29, 0
      %p253 = por %p251, %p252
      %p254 = scmp.ne.s32.totalorder %s246, %s248
      %p255 = scmp.eq.s32.totalorder %s34, 1
      %p256 = por %p254, %p255
      %p257 = scmp.ne.s32.totalorder %s248, %s249
      %p258 = scmp.eq.s32.totalorder %s34, 0
      %p259 = por %p257, %p258
      %p260 = scmp.ne.s32.totalorder %s248, %s249
      %p261 = scmp.eq.s32.totalorder %s35, 1
      %p262 = por %p260, %p261
      %p264 = scmp.ne.s32.totalorder %s249, %s263
      %p265 = scmp.eq.s32.totalorder %s35, 0
      %p266 = por %p264, %p265
      %s268 = sadd.s32 %s267, 1
      %p271 = scmp.eq.s32.totalorder %s29, 1
      %p272 = scmp.ne.s32.totalorder %s267, %s269
      %p273 = scmp.eq.s32.totalorder %s29, 0
      %p274 = por %p272, %p273
      %p275 = scmp.ne.s32.totalorder %s267, %s269
      %p276 = scmp.eq.s32.totalorder %s34, 1
      %p277 = por %p275, %p276
      %p278 = scmp.ne.s32.totalorder %s269, %s270
      %p279 = scmp.eq.s32.totalorder %s34, 0
      %p280 = por %p278, %p279
      %p281 = scmp.ne.s32.totalorder %s269, %s270
      %p282 = scmp.eq.s32.totalorder %s35, 1
      %p283 = por %p281, %p282
      %p285 = scmp.ne.s32.totalorder %s270, %s284
      %p286 = scmp.eq.s32.totalorder %s35, 0
      %p287 = por %p285, %p286
      %s289 = sadd.s32 %s288, 1
      %p292 = scmp.eq.s32.totalorder %s29, 1
      %p293 = scmp.ne.s32.totalorder %s288, %s290
      %p294 = scmp.eq.s32.totalorder %s29, 0
      %p295 = por %p293, %p294
      %p296 = scmp.ne.s32.totalorder %s288, %s290
      %p297 = scmp.eq.s32.totalorder %s34, 1
      %p298 = por %p296, %p297
      %p299 = scmp.ne.s32.totalorder %s290, %s291
      %p300 = scmp.eq.s32.totalorder %s34, 0
      %p301 = por %p299, %p300
      %p302 = scmp.ne.s32.totalorder %s290, %s291
      %p303 = scmp.eq.s32.totalorder %s35, 1
      %p304 = por %p302, %p303
      %p306 = scmp.ne.s32.totalorder %s291, %s305
      %p307 = scmp.eq.s32.totalorder %s35, 0
      %p308 = por %p306, %p307
      %s310 = sadd.s32 %s309, 1
      %p313 = scmp.eq.s32.totalorder %s29, 1
      %p314 = scmp.ne.s32.totalorder %s309, %s311
      %p315 = scmp.eq.s32.totalorder %s29, 0
      %p316 = por %p314, %p315
      %p317 = scmp.ne.s32.totalorder %s309, %s311
      %p318 = scmp.eq.s32.totalorder %s34, 1
      %p319 = por %p317, %p318
      %p320 = scmp.ne.s32.totalorder %s311, %s312
      %p321 = scmp.eq.s32.totalorder %s34, 0
      %p322 = por %p320, %p321
      %p323 = scmp.ne.s32.totalorder %s311, %s312
      %p324 = scmp.eq.s32.totalorder %s35, 1
      %p325 = por %p323, %p324
      %p327 = scmp.ne.s32.totalorder %s312, %s326
      %p328 = scmp.eq.s32.totalorder %s35, 0
      %p329 = por %p327, %p328
      %s331 = sadd.s32 %s330, 1
      %p334 = scmp.eq.s32.totalorder %s29, 1
      %p335 = scmp.ne.s32.totalorder %s330, %s332
      %p336 = scmp.eq.s32.totalorder %s29, 0
      %p337 = por %p335, %p336
      %p338 = scmp.ne.s32.totalorder %s330, %s332
      %p339 = scmp.eq.s32.totalorder %s34, 1
      %p340 = por %p338, %p339
      %p341 = scmp.ne.s32.totalorder %s332, %s333
      %p342 = scmp.eq.s32.totalorder %s34, 0
      %p343 = por %p341, %p342
      %p344 = scmp.ne.s32.totalorder %s332, %s333
      %p345 = scmp.eq.s32.totalorder %s35, 1
      %p346 = por %p344, %p345
      %p348 = scmp.ne.s32.totalorder %s333, %s347
      %p349 = scmp.eq.s32.totalorder %s35, 0
      %p350 = por %p348, %p349
      %s352 = sadd.s32 %s351, 1
      %p355 = scmp.eq.s32.totalorder %s29, 1
      %p356 = scmp.ne.s32.totalorder %s351, %s353
      %p357 = scmp.eq.s32.totalorder %s29, 0
      %p358 = por %p356, %p357
      %p359 = scmp.ne.s32.totalorder %s351, %s353
      %p360 = scmp.eq.s32.totalorder %s34, 1
      %p361 = por %p359, %p360
      %p362 = scmp.ne.s32.totalorder %s353, %s354
      %p363 = scmp.eq.s32.totalorder %s34, 0
      %p364 = por %p362, %p363
      %p365 = scmp.ne.s32.totalorder %s353, %s354
      %p366 = scmp.eq.s32.totalorder %s35, 1
      %p367 = por %p365, %p366
      %p369 = scmp.ne.s32.totalorder %s354, %s368
      %p370 = scmp.eq.s32.totalorder %s35, 0
      %p371 = por %p369, %p370
      %s373 = sadd.s32 %s372, 1
      %p376 = scmp.eq.s32.totalorder %s29, 1
      %p377 = scmp.ne.s32.totalorder %s372, %s374
      %p378 = scmp.eq.s32.totalorder %s29, 0
      %p379 = por %p377, %p378
      %p380 = scmp.ne.s32.totalorder %s372, %s374
      %p381 = scmp.eq.s32.totalorder %s34, 1
      %p382 = por %p380, %p381
      %p383 = scmp.ne.s32.totalorder %s374, %s375
      %p384 = scmp.eq.s32.totalorder %s34, 0
      %p385 = por %p383, %p384
      %p386 = scmp.ne.s32.totalorder %s374, %s375
      %p387 = scmp.eq.s32.totalorder %s35, 1
      %p388 = por %p386, %p387
      %p390 = scmp.ne.s32.totalorder %s375, %s389
      %p391 = scmp.eq.s32.totalorder %s35, 0
      %p392 = por %p390, %p391
      %s394 = sadd.s32 %s393, 1
      %p397 = scmp.eq.s32.totalorder %s29, 1
      %p398 = scmp.ne.s32.totalorder %s393, %s395
      %p399 = scmp.eq.s32.totalorder %s29, 0
      %p400 = por %p398, %p399
      %p401 = scmp.ne.s32.totalorder %s393, %s395
      %p402 = scmp.eq.s32.totalorder %s34, 1
      %p403 = por %p401, %p402
      %p404 = scmp.ne.s32.totalorder %s395, %s396
      %p405 = scmp.eq.s32.totalorder %s34, 0
      %p406 = por %p404, %p405
      %p407 = scmp.ne.s32.totalorder %s395, %s396
      %p408 = scmp.eq.s32.totalorder %s35, 1
      %p409 = por %p407, %p408
      %p411 = scmp.ne.s32.totalorder %s396, %s410
      %p412 = scmp.eq.s32.totalorder %s35, 0
      %p413 = por %p411, %p412
      %s415 = sadd.s32 %s414, 1
      %p418 = scmp.eq.s32.totalorder %s29, 1
      %p419 = scmp.ne.s32.totalorder %s414, %s416
      %p420 = scmp.eq.s32.totalorder %s29, 0
      %p421 = por %p419, %p420
      %p422 = scmp.ne.s32.totalorder %s414, %s416
      %p423 = scmp.eq.s32.totalorder %s34, 1
      %p424 = por %p422, %p423
      %p425 = scmp.ne.s32.totalorder %s416, %s417
      %p426 = scmp.eq.s32.totalorder %s34, 0
      %p427 = por %p425, %p426
      %p428 = scmp.ne.s32.totalorder %s416, %s417
      %p429 = scmp.eq.s32.totalorder %s35, 1
      %p430 = por %p428, %p429
      %p432 = scmp.ne.s32.totalorder %s417, %s431
      %p433 = scmp.eq.s32.totalorder %s35, 0
      %p434 = por %p432, %p433
      %s436 = sadd.s32 %s435, 1
      %p439 = scmp.eq.s32.totalorder %s29, 1
      %p440 = scmp.ne.s32.totalorder %s435, %s437
      %p441 = scmp.eq.s32.totalorder %s29, 0
      %p442 = por %p440, %p441
      %p443 = scmp.ne.s32.totalorder %s435, %s437
      %p444 = scmp.eq.s32.totalorder %s34, 1
      %p445 = por %p443, %p444
      %p446 = scmp.ne.s32.totalorder %s437, %s438
      %p447 = scmp.eq.s32.totalorder %s34, 0
      %p448 = por %p446, %p447
      %p449 = scmp.ne.s32.totalorder %s437, %s438
      %p450 = scmp.eq.s32.totalorder %s35, 1
      %p451 = por %p449, %p450
      %p453 = scmp.ne.s32.totalorder %s438, %s452
      %p454 = scmp.eq.s32.totalorder %s35, 0
      %p455 = por %p453, %p454
      %s457 = sadd.s32 %s456, 1
      %p460 = scmp.eq.s32.totalorder %s29, 1
      %p461 = scmp.ne.s32.totalorder %s456, %s458
      %p462 = scmp.eq.s32.totalorder %s29, 0
      %p463 = por %p461, %p462
      %p464 = scmp.ne.s32.totalorder %s456, %s458
      %p465 = scmp.eq.s32.totalorder %s34, 1
      %p466 = por %p464, %p465
      %p467 = scmp.ne.s32.totalorder %s458, %s459
      %p468 = scmp.eq.s32.totalorder %s34, 0
      %p469 = por %p467, %p468
      %p470 = scmp.ne.s32.totalorder %s458, %s459
      %p471 = scmp.eq.s32.totalorder %s35, 1
      %p472 = por %p470, %p471
      %p474 = scmp.ne.s32.totalorder %s459, %s473
      %p475 = scmp.eq.s32.totalorder %s35, 0
      %p476 = por %p474, %p475
      %s477 = ssub.s32 %s29, %s36
      %p478 = scmp.eq.s32.totalorder %s477, 0
      %s480 = sadd.s32 %s479, 1
      %s481 = scalar_select %p478, %s479, %s480
      %p484 = pneg %p478
      %p485 = scmp.eq.s32.totalorder %s29, 1
      %p486 = por %p484, %p485
      %p487 = scmp.ne.s32.totalorder %s479, %s482
      %p488 = scmp.eq.s32.totalorder %s29, 0
      %p489 = por %p487, %p488
      %p490 = scmp.ne.s32.totalorder %s479, %s482
      %p491 = scmp.eq.s32.totalorder %s34, 1
      %p492 = por %p490, %p491
      %p493 = scmp.ne.s32.totalorder %s482, %s483
      %p494 = scmp.eq.s32.totalorder %s34, 0
      %p495 = por %p493, %p494
      %p496 = scmp.ne.s32.totalorder %s482, %s483
      %p497 = scmp.eq.s32.totalorder %s35, 1
      %p498 = por %p496, %p497
      %p500 = scmp.ne.s32.totalorder %s483, %s499
      %p501 = scmp.eq.s32.totalorder %s35, 0
      %p502 = por %p500, %p501
      %p503 = scmp.le.s32.totalorder 1, %s29
      %p504 = scmp.lt.s32.totalorder %s29, 3
      %p505 = pnand %p503, %p504
      %p506 = pneg %p505
      // Predicated region
      $region9: #{tpu_custom_call.1} parent=5 // pred_check
        _
      $region10: #{tpu_custom_call.1} parent=5 // pred_check_branch
        %508 = sbr.rel (%p505) target = $region12
      $region11: #{tpu_custom_call.1} parent=5 // pred_region
        %s509 = ssub.s32 %s29, 1
        // Predicated region
        $region13: #{tpu_custom_call.1} parent=11 // pred_check
          %p510 = pneg %p154
        $region14: #{tpu_custom_call.1} parent=11 // pred_check_branch
          %512 = sbr.rel (%p510) target = $region16
        $region15: #{tpu_custom_call.1} parent=11 // pred_region
          _
        $region16: #{tpu_custom_call.1} parent=11 // pred_fallthru
          _
        // Predicated region
        $region17: #{tpu_custom_call.1} parent=11 // pred_check
          %p513 = pneg %p175
        $region18: #{tpu_custom_call.1} parent=11 // pred_check_branch
          %515 = sbr.rel (%p513) target = $region20
        $region19: #{tpu_custom_call.1} parent=11 // pred_region
          _
        $region20: #{tpu_custom_call.1} parent=11 // pred_fallthru
          _
        // Predicated region
        $region21: #{tpu_custom_call.1} parent=11 // pred_check
          %p516 = pneg %p196
        $region22: #{tpu_custom_call.1} parent=11 // pred_check_branch
          %518 = sbr.rel (%p516) target = $region24
        $region23: #{tpu_custom_call.1} parent=11 // pred_region
          _
        $region24: #{tpu_custom_call.1} parent=11 // pred_fallthru
          _
        // Predicated region
        $region25: #{tpu_custom_call.1} parent=11 // pred_check
          %p519 = pneg %p217
        $region26: #{tpu_custom_call.1} parent=11 // pred_check_branch
          %521 = sbr.rel (%p519) target = $region28
        $region27: #{tpu_custom_call.1} parent=11 // pred_region
          _
        $region28: #{tpu_custom_call.1} parent=11 // pred_fallthru
          _
        // Predicated region
        $region29: #{tpu_custom_call.1} parent=11 // pred_check
          %p522 = pneg %p238
        $region30: #{tpu_custom_call.1} parent=11 // pred_check_branch
          %524 = sbr.rel (%p522) target = $region32
        $region31: #{tpu_custom_call.1} parent=11 // pred_region
          _
        $region32: #{tpu_custom_call.1} parent=11 // pred_fallthru
          _
        // Predicated region
        $region33: #{tpu_custom_call.1} parent=11 // pred_check
          %p525 = pneg %p259
        $region34: #{tpu_custom_call.1} parent=11 // pred_check_branch
          %527 = sbr.rel (%p525) target = $region36
        $region35: #{tpu_custom_call.1} parent=11 // pred_region
          _
        $region36: #{tpu_custom_call.1} parent=11 // pred_fallthru
          _
        // Predicated region
        $region37: #{tpu_custom_call.1} parent=11 // pred_check
          %p528 = pneg %p280
        $region38: #{tpu_custom_call.1} parent=11 // pred_check_branch
          %530 = sbr.rel (%p528) target = $region40
        $region39: #{tpu_custom_call.1} parent=11 // pred_region
          _
        $region40: #{tpu_custom_call.1} parent=11 // pred_fallthru
          _
        // Predicated region
        $region41: #{tpu_custom_call.1} parent=11 // pred_check
          %p531 = pneg %p301
        $region42: #{tpu_custom_call.1} parent=11 // pred_check_branch
          %533 = sbr.rel (%p531) target = $region44
        $region43: #{tpu_custom_call.1} parent=11 // pred_region
          _
        $region44: #{tpu_custom_call.1} parent=11 // pred_fallthru
          _
        // Predicated region
        $region45: #{tpu_custom_call.1} parent=11 // pred_check
          %p534 = pneg %p322
        $region46: #{tpu_custom_call.1} parent=11 // pred_check_branch
          %536 = sbr.rel (%p534) target = $region48
        $region47: #{tpu_custom_call.1} parent=11 // pred_region
          _
        $region48: #{tpu_custom_call.1} parent=11 // pred_fallthru
          _
        // Predicated region
        $region49: #{tpu_custom_call.1} parent=11 // pred_check
          %p537 = pneg %p343
        $region50: #{tpu_custom_call.1} parent=11 // pred_check_branch
          %539 = sbr.rel (%p537) target = $region52
        $region51: #{tpu_custom_call.1} parent=11 // pred_region
          _
        $region52: #{tpu_custom_call.1} parent=11 // pred_fallthru
          _
        // Predicated region
        $region53: #{tpu_custom_call.1} parent=11 // pred_check
          %p540 = pneg %p364
        $region54: #{tpu_custom_call.1} parent=11 // pred_check_branch
          %542 = sbr.rel (%p540) target = $region56
        $region55: #{tpu_custom_call.1} parent=11 // pred_region
          _
        $region56: #{tpu_custom_call.1} parent=11 // pred_fallthru
          _
        // Predicated region
        $region57: #{tpu_custom_call.1} parent=11 // pred_check
          %p543 = pneg %p385
        $region58: #{tpu_custom_call.1} parent=11 // pred_check_branch
          %545 = sbr.rel (%p543) target = $region60
        $region59: #{tpu_custom_call.1} parent=11 // pred_region
          _
        $region60: #{tpu_custom_call.1} parent=11 // pred_fallthru
          _
        // Predicated region
        $region61: #{tpu_custom_call.1} parent=11 // pred_check
          %p546 = pneg %p406
        $region62: #{tpu_custom_call.1} parent=11 // pred_check_branch
          %548 = sbr.rel (%p546) target = $region64
        $region63: #{tpu_custom_call.1} parent=11 // pred_region
          _
        $region64: #{tpu_custom_call.1} parent=11 // pred_fallthru
          _
        // Predicated region
        $region65: #{tpu_custom_call.1} parent=11 // pred_check
          %p549 = pneg %p427
        $region66: #{tpu_custom_call.1} parent=11 // pred_check_branch
          %551 = sbr.rel (%p549) target = $region68
        $region67: #{tpu_custom_call.1} parent=11 // pred_region
          _
        $region68: #{tpu_custom_call.1} parent=11 // pred_fallthru
          _
        // Predicated region
        $region69: #{tpu_custom_call.1} parent=11 // pred_check
          %p552 = pneg %p448
        $region70: #{tpu_custom_call.1} parent=11 // pred_check_branch
          %554 = sbr.rel (%p552) target = $region72
        $region71: #{tpu_custom_call.1} parent=11 // pred_region
          _
        $region72: #{tpu_custom_call.1} parent=11 // pred_fallthru
          _
        // Predicated region
        $region73: #{tpu_custom_call.1} parent=11 // pred_check
          %p555 = pneg %p469
        $region74: #{tpu_custom_call.1} parent=11 // pred_check_branch
          %557 = sbr.rel (%p555) target = $region76
        $region75: #{tpu_custom_call.1} parent=11 // pred_region
          _
        $region76: #{tpu_custom_call.1} parent=11 // pred_fallthru
          _
      $region12: #{tpu_custom_call.1} parent=5 // pred_fallthru
        _
      %p558 = scmp.lt.s32.totalorder %s29, 2
      // Predicated region
      $region77: #{tpu_custom_call.1} parent=5 // pred_check
        %p559 = pneg %p558
      $region78: #{tpu_custom_call.1} parent=5 // pred_check_branch
        %561 = sbr.rel (%p559) target = $region80
      $region79: #{tpu_custom_call.1} parent=5 // pred_region
        // Predicated region
        $region81: #{tpu_custom_call.1} parent=79 // pred_check
          %p562 = pneg %p49
        $region82: #{tpu_custom_call.1} parent=79 // pred_check_branch
          %564 = sbr.rel (%p562) target = $region84
        $region83: #{tpu_custom_call.1} parent=79 // pred_region
          %p565 = scmp.lt.s32.totalorder %s29, 1
          %s566 = scalar_select %p565, %s29, 1
          %s567 = smul.addr %s566, 8
          %s568 = scalar_lea.vmem %s0, %s567
        $region84: #{tpu_custom_call.1} parent=79 // pred_fallthru
          _
        // Predicated region
        $region85: #{tpu_custom_call.1} parent=79 // pred_check
          %p569 = pneg %p75
        $region86: #{tpu_custom_call.1} parent=79 // pred_check_branch
          %571 = sbr.rel (%p569) target = $region88
        $region87: #{tpu_custom_call.1} parent=79 // pred_region
          %p572 = scmp.lt.s32.totalorder %s29, 1
          %s573 = scalar_select %p572, %s29, 1
          %s574 = smul.addr %s573, 8
          %s575 = scalar_lea.vmem %s1, %s574
        $region88: #{tpu_custom_call.1} parent=79 // pred_fallthru
          _
        // Predicated region
        $region89: #{tpu_custom_call.1} parent=79 // pred_check
          %p576 = pneg %p101
        $region90: #{tpu_custom_call.1} parent=79 // pred_check_branch
          %578 = sbr.rel (%p576) target = $region92
        $region91: #{tpu_custom_call.1} parent=79 // pred_region
          %p579 = scmp.lt.s32.totalorder %s29, 1
          %s580 = scalar_select %p579, %s29, 1
          %s581 = smul.addr %s580, 8
          %s582 = scalar_lea.vmem %s2, %s581
        $region92: #{tpu_custom_call.1} parent=79 // pred_fallthru
          _
        // Predicated region
        $region93: #{tpu_custom_call.1} parent=79 // pred_check
          %p583 = pneg %p127
        $region94: #{tpu_custom_call.1} parent=79 // pred_check_branch
          %585 = sbr.rel (%p583) target = $region96
        $region95: #{tpu_custom_call.1} parent=79 // pred_region
          %p586 = scmp.lt.s32.totalorder %s29, 1
          %s587 = scalar_select %p586, %s29, 1
          %s588 = scalar_lea.vmem %s3, %s587
        $region96: #{tpu_custom_call.1} parent=79 // pred_fallthru
          _
      $region80: #{tpu_custom_call.1} parent=5 // pred_fallthru
        _
      %p589 = scmp.le.s32.totalorder 1, %s29
      %p590 = scmp.lt.s32.totalorder %s29, 3
      %p591 = pnand %p589, %p590
      %p592 = pneg %p591
      // Predicated region
      $region97: #{tpu_custom_call.1} parent=5 // pred_check
        _
      $region98: #{tpu_custom_call.1} parent=5 // pred_check_branch
        %594 = sbr.rel (%p591) target = $region100
      $region99: #{tpu_custom_call.1} parent=5 // pred_region
        %s595 = ssub.s32 %s29, 1
        %p596 = scmp.lt.s32.totalorder %s34, 1
        %s597 = scalar_select %p596, %s34, 1
        %s598 = smul.addr %s597, 8
        %s599 = scalar_lea.vmem %s0, %s598
        %p600 = pneg %p55
        %p601 = pneg %p52
        %p602 = scmp.lt.s32.totalorder %s34, 1
        %s603 = scalar_select %p602, %s34, 1
        %s604 = smul.addr %s603, 8
        %s605 = scalar_lea.vmem %s1, %s604
        %p606 = pneg %p81
        %p607 = pneg %p78
        %p608 = scmp.lt.s32.totalorder %s34, 1
        %s609 = scalar_select %p608, %s34, 1
        %s610 = smul.addr %s609, 8
        %s611 = scalar_lea.vmem %s2, %s610
        %p612 = pneg %p107
        %p613 = pneg %p104
        %p614 = scmp.lt.s32.totalorder %s34, 1
        %s615 = scalar_select %p614, %s34, 1
        %s616 = scalar_lea.vmem %s3, %s615
        %p617 = pneg %p133
        %p618 = pneg %p130
        %p619 = pneg %p154
        %p620 = pneg %p151
        %p621 = pneg %p175
        %p622 = pneg %p172
        %p623 = pneg %p196
        %p624 = pneg %p193
        %p625 = pneg %p217
        %p626 = pneg %p214
        %p627 = pneg %p238
        %p628 = pneg %p235
        %p629 = pneg %p259
        %p630 = pneg %p256
        %p631 = pneg %p280
        %p632 = pneg %p277
        %p633 = pneg %p301
        %p634 = pneg %p298
        %p635 = pneg %p322
        %p636 = pneg %p319
        %p637 = pneg %p343
        %p638 = pneg %p340
        %p639 = pneg %p364
        %p640 = pneg %p361
        %p641 = pneg %p385
        %p642 = pneg %p382
        %p643 = pneg %p406
        %p644 = pneg %p403
        %p645 = pneg %p427
        %p646 = pneg %p424
        %p647 = pneg %p448
        %p648 = pneg %p445
        %p649 = pneg %p469
        %p650 = pneg %p466
        %p651 = pneg %p495
        %p652 = pneg %p492
        %s653 = sand.u32 %s482, 1
        %s654 = scalar_lea.sflag [#allocation3], %s653
        %s655 = sand.u32 %s482, 1
        %s656 = smul.addr %s655, 8
        %s657 = scalar_lea.vmem [#allocation2], %s656
        %p658 = scmp.lt.s32.totalorder %s34, 1
        %s659 = scalar_select %p658, %s34, 1
        %s660 = smul.addr %s659, 8
        %s661 = scalar_lea.vmem %s0, %s660
        %p662 = scmp.lt.s32.totalorder %s34, 1
        %s663 = scalar_select %p662, %s34, 1
        %s664 = smul.addr %s663, 8
        %s665 = scalar_lea.vmem %s1, %s664
        %p666 = scmp.lt.s32.totalorder %s34, 1
        %s667 = scalar_select %p666, %s34, 1
        %s668 = smul.addr %s667, 8
        %s669 = scalar_lea.vmem %s2, %s668
        %p670 = scmp.lt.s32.totalorder %s34, 1
        %s671 = scalar_select %p670, %s34, 1
        %s672 = scalar_lea.vmem %s3, %s671
        %v674 = vld [vmem:[%s661] sm:$0xff]
        %v675 = vld [vmem:[%s665] sm:$0xff]
        %v676 = vld [vmem:[%s669] sm:$0xff]
        %vm677 = vcmp.lt.f32.partialorder %v676, 0.5
        %v678 = vsel %vm677, -1e+09, 0.0
        %v679 = vld [vmem:[%s672] sm:$0x1]
        %vm680 = vcmp.lt.f32.partialorder %v679, 0.5
        %v681 = vsel %vm680, -1e+09, 0.0
        %v682 = vld [vmem:[%s18] sm:$0x7]
        %v683 = vld [vmem:[%s19] sm:$0x7]
        %v684 = vld [vmem:[%s4] sm:$0xf]
        %v685 = vld [vmem:[%s4 + $0x4] sm:$0xf]
        %v686 = vld [vmem:[%s4 + $0x8] sm:$0xf]
        %v687 = vld [vmem:[%s4 + $0xc] sm:$0xf]
        %v688 = vld [vmem:[%s4 + $0x10] sm:$0xf]
        %v689 = vld [vmem:[%s4 + $0x14] sm:$0xf]
        %v690 = vld [vmem:[%s4 + $0x18] sm:$0xf]
        %v691 = vld [vmem:[%s4 + $0x1c] sm:$0xf]
        %v692 = vld [vmem:[%s4 + $0x20] sm:$0xf]
        %v693 = vld [vmem:[%s4 + $0x24] sm:$0xf]
        %v694 = vld [vmem:[%s4 + $0x28] sm:$0xf]
        %v695 = vld [vmem:[%s4 + $0x2c] sm:$0xf]
        %v696 = vld [vmem:[%s4 + $0x30] sm:$0xf]
        %v697 = vld [vmem:[%s4 + $0x34] sm:$0xf]
        %v698 = vld [vmem:[%s4 + $0x38] sm:$0xf]
        %v699 = vld [vmem:[%s4 + $0x3c] sm:$0xf]
        %v700 = vld [vmem:[%s5] sm:$0x1]
        %v701 = vld [vmem:[%s5 + $0x1] sm:$0x1]
        %v702 = vld [vmem:[%s5 + $0x2] sm:$0x1]
        %v703 = vld [vmem:[%s5 + $0x3] sm:$0x1]
        %s704 = scalar_lea.vmem %s4, 64
        %v705 = vld [vmem:[%s704] sm:$0xf]
        %v706 = vld [vmem:[%s704 + $0x4] sm:$0xf]
        %v707 = vld [vmem:[%s704 + $0x8] sm:$0xf]
        %v708 = vld [vmem:[%s704 + $0xc] sm:$0xf]
        %v709 = vld [vmem:[%s704 + $0x10] sm:$0xf]
        %v710 = vld [vmem:[%s704 + $0x14] sm:$0xf]
        %v711 = vld [vmem:[%s704 + $0x18] sm:$0xf]
        %v712 = vld [vmem:[%s704 + $0x1c] sm:$0xf]
        %v713 = vld [vmem:[%s704 + $0x20] sm:$0xf]
        %v714 = vld [vmem:[%s704 + $0x24] sm:$0xf]
        %v715 = vld [vmem:[%s704 + $0x28] sm:$0xf]
        %v716 = vld [vmem:[%s704 + $0x2c] sm:$0xf]
        %v717 = vld [vmem:[%s704 + $0x30] sm:$0xf]
        %v718 = vld [vmem:[%s704 + $0x34] sm:$0xf]
        %v719 = vld [vmem:[%s704 + $0x38] sm:$0xf]
        %v720 = vld [vmem:[%s704 + $0x3c] sm:$0xf]
        %s721 = scalar_lea.vmem %s5, 4
        %v722 = vld [vmem:[%s721] sm:$0x1]
        %v723 = vld [vmem:[%s721 + $0x1] sm:$0x1]
        %v724 = vld [vmem:[%s721 + $0x2] sm:$0x1]
        %v725 = vld [vmem:[%s721 + $0x3] sm:$0x1]
        %s726 = scalar_lea.vmem %s4, 128
        %v727 = vld [vmem:[%s726] sm:$0xf]
        %v728 = vld [vmem:[%s726 + $0x4] sm:$0xf]
        %v729 = vld [vmem:[%s726 + $0x8] sm:$0xf]
        %v730 = vld [vmem:[%s726 + $0xc] sm:$0xf]
        %v731 = vld [vmem:[%s726 + $0x10] sm:$0xf]
        %v732 = vld [vmem:[%s726 + $0x14] sm:$0xf]
        %v733 = vld [vmem:[%s726 + $0x18] sm:$0xf]
        %v734 = vld [vmem:[%s726 + $0x1c] sm:$0xf]
        %v735 = vld [vmem:[%s726 + $0x20] sm:$0xf]
        %v736 = vld [vmem:[%s726 + $0x24] sm:$0xf]
        %v737 = vld [vmem:[%s726 + $0x28] sm:$0xf]
        %v738 = vld [vmem:[%s726 + $0x2c] sm:$0xf]
        %v739 = vld [vmem:[%s726 + $0x30] sm:$0xf]
        %v740 = vld [vmem:[%s726 + $0x34] sm:$0xf]
        %v741 = vld [vmem:[%s726 + $0x38] sm:$0xf]
        %v742 = vld [vmem:[%s726 + $0x3c] sm:$0xf]
        %s743 = scalar_lea.vmem %s5, 8
        %v744 = vld [vmem:[%s743] sm:$0x1]
        %v745 = vld [vmem:[%s743 + $0x1] sm:$0x1]
        %v746 = vld [vmem:[%s743 + $0x2] sm:$0x1]
        %v747 = vld [vmem:[%s743 + $0x3] sm:$0x1]
        %v748 = vld [vmem:[%s6] sm:$0xf]
        %v749 = vld [vmem:[%s6 + $0x4] sm:$0xf]
        %v750 = vld [vmem:[%s6 + $0x8] sm:$0xf]
        %v751 = vld [vmem:[%s6 + $0xc] sm:$0xf]
        %v752 = vld [vmem:[%s7] sm:$0x1]
        %v753 = vpack.c.bf16 %v674, %v674
        %v758 = vperm.slane %v700, 0
        %v759 = vperm.slane %v701, 0
        %v760 = vperm.slane %v702, 0
        %v761 = vperm.slane %v703, 0
        %v770 = vunpack.c.l.b16 %v684
        %v771 = vunpack.c.l.b16 %v685
        %v772 = vunpack.c.l.b16 %v686
        %v773 = vunpack.c.l.b16 %v687
        %v774 = vpack.c.b16 %v771, %v770
        %v775 = vpack.c.b16 %v773, %v772
        %vm778 = vcmask 261120
        %v780 = vsel %vm778, %v753, 0
        %782 = vmatpush.bf16.msra.mxu0 0
        %783 = vmatpush.bf16.msra.mxu0 0
        %784 = vmatpush.bf16.msra.mxu0 0
        %785 = vmatpush.bf16.msra.mxu0 0
        %786 = vmatpush.bf16.msra.mxu0 0
        %787 = vmatpush.bf16.msra.mxu0 0
        %788 = vmatpush.bf16.msra.mxu0 %v775
        %789 = vmatpush.bf16.msra.mxu0 %v774
        %790 = vmatmul.bf16.gmra.mxu0 %v780
        %v791 = vpop.f32.mrf.mxu0
        %v792 = vadd.f32 %v758, %v791
        %v793 = vpop.f32.mrf.mxu0
        %794 = vdwg.mxu0
        %v799 = vunpack.c.l.b16 %v688
        %v800 = vunpack.c.l.b16 %v689
        %v801 = vunpack.c.l.b16 %v690
        %v802 = vunpack.c.l.b16 %v691
        %v803 = vpack.c.b16 %v800, %v799
        %v804 = vpack.c.b16 %v802, %v801
        %807 = vmatpush.bf16.msra.mxu0 0
        %808 = vmatpush.bf16.msra.mxu0 0
        %809 = vmatpush.bf16.msra.mxu0 0
        %810 = vmatpush.bf16.msra.mxu0 0
        %811 = vmatpush.bf16.msra.mxu0 0
        %812 = vmatpush.bf16.msra.mxu0 0
        %813 = vmatpush.bf16.msra.mxu0 %v804
        %814 = vmatpush.bf16.msra.mxu0 %v803
        %815 = vmatmul.bf16.gmra.mxu0 %v780
        %v816 = vpop.f32.mrf.mxu0
        %v817 = vadd.f32 %v759, %v816
        %v818 = vpop.f32.mrf.mxu0
        %819 = vdwg.mxu0
        %v824 = vunpack.c.l.b16 %v692
        %v825 = vunpack.c.l.b16 %v693
        %v826 = vunpack.c.l.b16 %v694
        %v827 = vunpack.c.l.b16 %v695
        %v828 = vpack.c.b16 %v825, %v824
        %v829 = vpack.c.b16 %v827, %v826
        %832 = vmatpush.bf16.msra.mxu0 0
        %833 = vmatpush.bf16.msra.mxu0 0
        %834 = vmatpush.bf16.msra.mxu0 0
        %835 = vmatpush.bf16.msra.mxu0 0
        %836 = vmatpush.bf16.msra.mxu0 0
        %837 = vmatpush.bf16.msra.mxu0 0
        %838 = vmatpush.bf16.msra.mxu0 %v829
        %839 = vmatpush.bf16.msra.mxu0 %v828
        %840 = vmatmul.bf16.gmra.mxu0 %v780
        %v841 = vpop.f32.mrf.mxu0
        %v842 = vadd.f32 %v760, %v841
        %v843 = vpop.f32.mrf.mxu0
        %844 = vdwg.mxu0
        %v849 = vunpack.c.l.b16 %v696
        %v850 = vunpack.c.l.b16 %v697
        %v851 = vunpack.c.l.b16 %v698
        %v852 = vunpack.c.l.b16 %v699
        %v853 = vpack.c.b16 %v850, %v849
        %v854 = vpack.c.b16 %v852, %v851
        %857 = vmatpush.bf16.msra.mxu0 0
        %858 = vmatpush.bf16.msra.mxu0 0
        %859 = vmatpush.bf16.msra.mxu0 0
        %860 = vmatpush.bf16.msra.mxu0 0
        %861 = vmatpush.bf16.msra.mxu0 0
        %862 = vmatpush.bf16.msra.mxu0 0
        %863 = vmatpush.bf16.msra.mxu0 %v854
        %864 = vmatpush.bf16.msra.mxu0 %v853
        %865 = vmatmul.bf16.gmra.mxu0 %v780
        %v866 = vpop.f32.mrf.mxu0
        %v867 = vadd.f32 %v761, %v866
        %v868 = vpop.f32.mrf.mxu0
        %869 = vdwg.mxu0
        %v874 = vperm.slane %v722, 0
        %v875 = vperm.slane %v723, 0
        %v876 = vperm.slane %v724, 0
        %v877 = vperm.slane %v725, 0
        %v886 = vunpack.c.l.b16 %v705
        %v887 = vunpack.c.l.b16 %v706
        %v888 = vunpack.c.l.b16 %v707
        %v889 = vunpack.c.l.b16 %v708
        %v890 = vpack.c.b16 %v887, %v886
        %v891 = vpack.c.b16 %v889, %v888
        %894 = vmatpush.bf16.msra.mxu0 0
        %895 = vmatpush.bf16.msra.mxu0 0
        %896 = vmatpush.bf16.msra.mxu0 0
        %897 = vmatpush.bf16.msra.mxu0 0
        %898 = vmatpush.bf16.msra.mxu0 0
        %899 = vmatpush.bf16.msra.mxu0 0
        %900 = vmatpush.bf16.msra.mxu0 %v891
        %901 = vmatpush.bf16.msra.mxu0 %v890
        %902 = vmatmul.bf16.gmra.mxu0 %v780
        %v903 = vpop.f32.mrf.mxu0
        %v904 = vadd.f32 %v874, %v903
        %v905 = vpop.f32.mrf.mxu0
        %906 = vdwg.mxu0
        %v911 = vunpack.c.l.b16 %v709
        %v912 = vunpack.c.l.b16 %v710
        %v913 = vunpack.c.l.b16 %v711
        %v914 = vunpack.c.l.b16 %v712
        %v915 = vpack.c.b16 %v912, %v911
        %v916 = vpack.c.b16 %v914, %v913
        %919 = vmatpush.bf16.msra.mxu0 0
        %920 = vmatpush.bf16.msra.mxu0 0
        %921 = vmatpush.bf16.msra.mxu0 0
        %922 = vmatpush.bf16.msra.mxu0 0
        %923 = vmatpush.bf16.msra.mxu0 0
        %924 = vmatpush.bf16.msra.mxu0 0
        %925 = vmatpush.bf16.msra.mxu0 %v916
        %926 = vmatpush.bf16.msra.mxu0 %v915
        %927 = vmatmul.bf16.gmra.mxu0 %v780
        %v928 = vpop.f32.mrf.mxu0
        %v929 = vadd.f32 %v875, %v928
        %v930 = vpop.f32.mrf.mxu0
        %931 = vdwg.mxu0
        %v936 = vunpack.c.l.b16 %v713
        %v937 = vunpack.c.l.b16 %v714
        %v938 = vunpack.c.l.b16 %v715
        %v939 = vunpack.c.l.b16 %v716
        %v940 = vpack.c.b16 %v937, %v936
        %v941 = vpack.c.b16 %v939, %v938
        %944 = vmatpush.bf16.msra.mxu0 0
        %945 = vmatpush.bf16.msra.mxu0 0
        %946 = vmatpush.bf16.msra.mxu0 0
        %947 = vmatpush.bf16.msra.mxu0 0
        %948 = vmatpush.bf16.msra.mxu0 0
        %949 = vmatpush.bf16.msra.mxu0 0
        %950 = vmatpush.bf16.msra.mxu0 %v941
        %951 = vmatpush.bf16.msra.mxu0 %v940
        %952 = vmatmul.bf16.gmra.mxu0 %v780
        %v953 = vpop.f32.mrf.mxu0
        %v954 = vadd.f32 %v876, %v953
        %v955 = vpop.f32.mrf.mxu0
        %956 = vdwg.mxu0
        %v961 = vunpack.c.l.b16 %v717
        %v962 = vunpack.c.l.b16 %v718
        %v963 = vunpack.c.l.b16 %v719
        %v964 = vunpack.c.l.b16 %v720
        %v965 = vpack.c.b16 %v962, %v961
        %v966 = vpack.c.b16 %v964, %v963
        %969 = vmatpush.bf16.msra.mxu0 0
        %970 = vmatpush.bf16.msra.mxu0 0
        %971 = vmatpush.bf16.msra.mxu0 0
        %972 = vmatpush.bf16.msra.mxu0 0
        %973 = vmatpush.bf16.msra.mxu0 0
        %974 = vmatpush.bf16.msra.mxu0 0
        %975 = vmatpush.bf16.msra.mxu0 %v966
        %976 = vmatpush.bf16.msra.mxu0 %v965
        %977 = vmatmul.bf16.gmra.mxu0 %v780
        %v978 = vpop.f32.mrf.mxu0
        %v979 = vadd.f32 %v877, %v978
        %v980 = vpop.f32.mrf.mxu0
        %981 = vdwg.mxu0
        %v986 = vperm.slane %v744, 0
        %v987 = vperm.slane %v745, 0
        %v988 = vperm.slane %v746, 0
        %v989 = vperm.slane %v747, 0
        %v998 = vunpack.c.l.b16 %v727
        %v999 = vunpack.c.l.b16 %v728
        %v1000 = vunpack.c.l.b16 %v729
        %v1001 = vunpack.c.l.b16 %v730
        %v1002 = vpack.c.b16 %v999, %v998
        %v1003 = vpack.c.b16 %v1001, %v1000
        %1006 = vmatpush.bf16.msra.mxu0 0
        %1007 = vmatpush.bf16.msra.mxu0 0
        %1008 = vmatpush.bf16.msra.mxu0 0
        %1009 = vmatpush.bf16.msra.mxu0 0
        %1010 = vmatpush.bf16.msra.mxu0 0
        %1011 = vmatpush.bf16.msra.mxu0 0
        %1012 = vmatpush.bf16.msra.mxu0 %v1003
        %1013 = vmatpush.bf16.msra.mxu0 %v1002
        %1014 = vmatmul.bf16.gmra.mxu0 %v780
        %v1015 = vpop.f32.mrf.mxu0
        %v1016 = vadd.f32 %v986, %v1015
        %v1017 = vpop.f32.mrf.mxu0
        %1018 = vdwg.mxu0
        %v1023 = vunpack.c.l.b16 %v731
        %v1024 = vunpack.c.l.b16 %v732
        %v1025 = vunpack.c.l.b16 %v733
        %v1026 = vunpack.c.l.b16 %v734
        %v1027 = vpack.c.b16 %v1024, %v1023
        %v1028 = vpack.c.b16 %v1026, %v1025
        %1031 = vmatpush.bf16.msra.mxu0 0
        %1032 = vmatpush.bf16.msra.mxu0 0
        %1033 = vmatpush.bf16.msra.mxu0 0
        %1034 = vmatpush.bf16.msra.mxu0 0
        %1035 = vmatpush.bf16.msra.mxu0 0
        %1036 = vmatpush.bf16.msra.mxu0 0
        %1037 = vmatpush.bf16.msra.mxu0 %v1028
        %1038 = vmatpush.bf16.msra.mxu0 %v1027
        %1039 = vmatmul.bf16.gmra.mxu0 %v780
        %v1040 = vpop.f32.mrf.mxu0
        %v1041 = vadd.f32 %v987, %v1040
        %v1042 = vpop.f32.mrf.mxu0
        %1043 = vdwg.mxu0
        %v1048 = vunpack.c.l.b16 %v735
        %v1049 = vunpack.c.l.b16 %v736
        %v1050 = vunpack.c.l.b16 %v737
        %v1051 = vunpack.c.l.b16 %v738
        %v1052 = vpack.c.b16 %v1049, %v1048
        %v1053 = vpack.c.b16 %v1051, %v1050
        %1056 = vmatpush.bf16.msra.mxu0 0
        %1057 = vmatpush.bf16.msra.mxu0 0
        %1058 = vmatpush.bf16.msra.mxu0 0
        %1059 = vmatpush.bf16.msra.mxu0 0
        %1060 = vmatpush.bf16.msra.mxu0 0
        %1061 = vmatpush.bf16.msra.mxu0 0
        %1062 = vmatpush.bf16.msra.mxu0 %v1053
        %1063 = vmatpush.bf16.msra.mxu0 %v1052
        %1064 = vmatmul.bf16.gmra.mxu0 %v780
        %v1065 = vpop.f32.mrf.mxu0
        %v1066 = vadd.f32 %v988, %v1065
        %v1067 = vpop.f32.mrf.mxu0
        %1068 = vdwg.mxu0
        %v1073 = vunpack.c.l.b16 %v739
        %v1074 = vunpack.c.l.b16 %v740
        %v1075 = vunpack.c.l.b16 %v741
        %v1076 = vunpack.c.l.b16 %v742
        %v1077 = vpack.c.b16 %v1074, %v1073
        %v1078 = vpack.c.b16 %v1076, %v1075
        %1081 = vmatpush.bf16.msra.mxu0 0
        %1082 = vmatpush.bf16.msra.mxu0 0
        %1083 = vmatpush.bf16.msra.mxu0 0
        %1084 = vmatpush.bf16.msra.mxu0 0
        %1085 = vmatpush.bf16.msra.mxu0 0
        %1086 = vmatpush.bf16.msra.mxu0 0
        %1087 = vmatpush.bf16.msra.mxu0 %v1078
        %1088 = vmatpush.bf16.msra.mxu0 %v1077
        %1089 = vmatmul.bf16.gmra.mxu0 %v780
        %v1090 = vpop.f32.mrf.mxu0
        %v1091 = vadd.f32 %v989, %v1090
        %v1092 = vpop.f32.mrf.mxu0
        %1093 = vdwg.mxu0
        %v1094 = vpack.c.bf16 %v792, %v792
        %v1095 = vpack.c.bf16 %v817, %v817
        %v1096 = vpack.c.bf16 %v842, %v842
        %v1097 = vpack.c.bf16 %v867, %v867
        %v1098 = vpack.c.bf16 %v904, %v904
        %v1099 = vpack.c.bf16 %v929, %v929
        %v1100 = vpack.c.bf16 %v954, %v954
        %v1101 = vpack.c.bf16 %v979, %v979
        %vm1102 = vcmask 64512
        %v1104 = vsel %vm1102, %v1094, 0
        %v1107 = vsel %vm1102, %v1098, 0
        %1109 = vmatpush.bf16.xpose.msra.mxu0 0
        %1110 = vmatpush.bf16.xpose.msra.mxu0 0
        %1111 = vmatpush.bf16.xpose.msra.mxu0 0
        %1112 = vmatpush.bf16.xpose.msra.mxu0 0
        %1113 = vmatpush.bf16.xpose.msra.mxu0 0
        %1114 = vmatpush.bf16.xpose.msra.mxu0 0
        %1115 = vmatpush.bf16.xpose.msra.mxu0 0
        %1116 = vmatpush.bf16.xpose.msra.mxu0 %v1107
        %1117 = vmatmul.bf16.gmra.mxu0 %v1104
        %v1118 = vpop.f32.mrf.mxu0
        %v1119 = vadd.f32 0.0, %v1118
        %v1120 = vpop.f32.mrf.mxu0
        %1121 = vdwg.mxu0
        %v1123 = vsel %vm1102, %v1095, 0
        %v1126 = vsel %vm1102, %v1099, 0
        %1128 = vmatpush.bf16.xpose.msra.mxu0 0
        %1129 = vmatpush.bf16.xpose.msra.mxu0 0
        %1130 = vmatpush.bf16.xpose.msra.mxu0 0
        %1131 = vmatpush.bf16.xpose.msra.mxu0 0
        %1132 = vmatpush.bf16.xpose.msra.mxu0 0
        %1133 = vmatpush.bf16.xpose.msra.mxu0 0
        %1134 = vmatpush.bf16.xpose.msra.mxu0 0
        %1135 = vmatpush.bf16.xpose.msra.mxu0 %v1126
        %1136 = vmatmul.bf16.gmra.mxu0 %v1123
        %v1137 = vpop.f32.mrf.mxu0
        %v1138 = vadd.f32 0.0, %v1137
        %v1139 = vpop.f32.mrf.mxu0
        %1140 = vdwg.mxu0
        %v1142 = vsel %vm1102, %v1096, 0
        %v1145 = vsel %vm1102, %v1100, 0
        %1147 = vmatpush.bf16.xpose.msra.mxu0 0
        %1148 = vmatpush.bf16.xpose.msra.mxu0 0
        %1149 = vmatpush.bf16.xpose.msra.mxu0 0
        %1150 = vmatpush.bf16.xpose.msra.mxu0 0
        %1151 = vmatpush.bf16.xpose.msra.mxu0 0
        %1152 = vmatpush.bf16.xpose.msra.mxu0 0
        %1153 = vmatpush.bf16.xpose.msra.mxu0 0
        %1154 = vmatpush.bf16.xpose.msra.mxu0 %v1145
        %1155 = vmatmul.bf16.gmra.mxu0 %v1142
        %v1156 = vpop.f32.mrf.mxu0
        %v1157 = vadd.f32 0.0, %v1156
        %v1158 = vpop.f32.mrf.mxu0
        %1159 = vdwg.mxu0
        %v1161 = vsel %vm1102, %v1097, 0
        %v1164 = vsel %vm1102, %v1101, 0
        %1166 = vmatpush.bf16.xpose.msra.mxu0 0
        %1167 = vmatpush.bf16.xpose.msra.mxu0 0
        %1168 = vmatpush.bf16.xpose.msra.mxu0 0
        %1169 = vmatpush.bf16.xpose.msra.mxu0 0
        %1170 = vmatpush.bf16.xpose.msra.mxu0 0
        %1171 = vmatpush.bf16.xpose.msra.mxu0 0
        %1172 = vmatpush.bf16.xpose.msra.mxu0 0
        %1173 = vmatpush.bf16.xpose.msra.mxu0 %v1164
        %1174 = vmatmul.bf16.gmra.mxu0 %v1161
        %v1175 = vpop.f32.mrf.mxu0
        %v1176 = vadd.f32 0.0, %v1175
        %v1177 = vpop.f32.mrf.mxu0
        %1178 = vdwg.mxu0
        %v1179 = vmul.f32 %v1119, 0.35355338
        %v1180 = vmul.f32 %v1138, 0.35355338
        %v1181 = vmul.f32 %v1157, 0.35355338
        %v1182 = vmul.f32 %v1176, 0.35355338
        %v1183 = vadd.f32 %v1179, %v678
        %v1184 = vadd.f32 %v1180, %v678
        %v1185 = vadd.f32 %v1181, %v678
        %v1186 = vadd.f32 %v1182, %v678
        %v1187 = vsel %vm1102, %v1183, -inf
        %1188 = vmax.xlane.f32.xlu0 %v1187
        %v1189 = vpop.xlane.xlu0 %1188
        %v1190 = vsel %vm1102, %v1184, -inf
        %1191 = vmax.xlane.f32.xlu0 %v1190
        %v1192 = vpop.xlane.xlu0 %1191
        %v1193 = vsel %vm1102, %v1185, -inf
        %1194 = vmax.xlane.f32.xlu0 %v1193
        %v1195 = vpop.xlane.xlu0 %1194
        %v1196 = vsel %vm1102, %v1186, -inf
        %1197 = vmax.xlane.f32.xlu0 %v1196
        %v1198 = vpop.xlane.xlu0 %1197
        %v1199 = vsub.f32 %v1183, %v1189
        %v1200 = vsub.f32 %v1184, %v1192
        %v1201 = vsub.f32 %v1185, %v1195
        %v1202 = vsub.f32 %v1186, %v1198
        %v1203 = vmul.f32 %v1199, 1.442695
        %v1204 = vpow.pop %v1203
        %v1205 = vmul.f32 %v1200, 1.442695
        %v1206 = vpow.pop %v1205
        %v1207 = vmul.f32 %v1201, 1.442695
        %v1208 = vpow.pop %v1207
        %v1209 = vmul.f32 %v1202, 1.442695
        %v1210 = vpow.pop %v1209
        %v1211 = vsel %vm1102, %v1204, 0.0
        %1212 = vadd.xlane.f32.xlu0 %v1211
        %v1213 = vpop.xlane.xlu0 %1212
        %v1214 = vsel %vm1102, %v1206, 0.0
        %1215 = vadd.xlane.f32.xlu0 %v1214
        %v1216 = vpop.xlane.xlu0 %1215
        %v1217 = vsel %vm1102, %v1208, 0.0
        %1218 = vadd.xlane.f32.xlu0 %v1217
        %v1219 = vpop.xlane.xlu0 %1218
        %v1220 = vsel %vm1102, %v1210, 0.0
        %1221 = vadd.xlane.f32.xlu0 %v1220
        %v1222 = vpop.xlane.xlu0 %1221
        %v1223 = vrcp.pop %v1213
        %v1224 = vrcp.pop %v1216
        %v1225 = vrcp.pop %v1219
        %v1226 = vrcp.pop %v1222
        %v1227 = vmul.f32 %v1204, %v1223
        %v1228 = vmul.f32 %v1206, %v1224
        %v1229 = vmul.f32 %v1208, %v1225
        %v1230 = vmul.f32 %v1210, %v1226
        %v1231 = vpack.c.bf16 %v1227, %v1227
        %v1232 = vpack.c.bf16 %v1228, %v1228
        %v1233 = vpack.c.bf16 %v1229, %v1229
        %v1234 = vpack.c.bf16 %v1230, %v1230
        %v1235 = vpack.c.bf16 %v1016, %v1016
        %v1236 = vpack.c.bf16 %v1041, %v1041
        %v1237 = vpack.c.bf16 %v1066, %v1066
        %v1238 = vpack.c.bf16 %v1091, %v1091
        %v1240 = vsel %vm1102, %v1231, 0
        %vm1242 = vcmask 1043456
        %v1244 = vsel %vm1242, %v1235, 0
        %1246 = vmatpush.bf16.msra.mxu0 0
        %1247 = vmatpush.bf16.msra.mxu0 0
        %1248 = vmatpush.bf16.msra.mxu0 0
        %1249 = vmatpush.bf16.msra.mxu0 0
        %1250 = vmatpush.bf16.msra.mxu0 0
        %1251 = vmatpush.bf16.msra.mxu0 0
        %1252 = vmatpush.bf16.msra.mxu0 0
        %1253 = vmatpush.bf16.msra.mxu0 %v1244
        %1254 = vmatmul.bf16.gmra.mxu0 %v1240
        %v1255 = vpop.f32.mrf.mxu0
        %v1256 = vadd.f32 0.0, %v1255
        %v1257 = vpop.f32.mrf.mxu0
        %1258 = vdwg.mxu0
        %v1260 = vsel %vm1102, %v1232, 0
        %v1263 = vsel %vm1242, %v1236, 0
        %1265 = vmatpush.bf16.msra.mxu0 0
        %1266 = vmatpush.bf16.msra.mxu0 0
        %1267 = vmatpush.bf16.msra.mxu0 0
        %1268 = vmatpush.bf16.msra.mxu0 0
        %1269 = vmatpush.bf16.msra.mxu0 0
        %1270 = vmatpush.bf16.msra.mxu0 0
        %1271 = vmatpush.bf16.msra.mxu0 0
        %1272 = vmatpush.bf16.msra.mxu0 %v1263
        %1273 = vmatmul.bf16.gmra.mxu0 %v1260
        %v1274 = vpop.f32.mrf.mxu0
        %v1275 = vadd.f32 0.0, %v1274
        %v1276 = vpop.f32.mrf.mxu0
        %1277 = vdwg.mxu0
        %v1279 = vsel %vm1102, %v1233, 0
        %v1282 = vsel %vm1242, %v1237, 0
        %1284 = vmatpush.bf16.msra.mxu0 0
        %1285 = vmatpush.bf16.msra.mxu0 0
        %1286 = vmatpush.bf16.msra.mxu0 0
        %1287 = vmatpush.bf16.msra.mxu0 0
        %1288 = vmatpush.bf16.msra.mxu0 0
        %1289 = vmatpush.bf16.msra.mxu0 0
        %1290 = vmatpush.bf16.msra.mxu0 0
        %1291 = vmatpush.bf16.msra.mxu0 %v1282
        %1292 = vmatmul.bf16.gmra.mxu0 %v1279
        %v1293 = vpop.f32.mrf.mxu0
        %v1294 = vadd.f32 0.0, %v1293
        %v1295 = vpop.f32.mrf.mxu0
        %1296 = vdwg.mxu0
        %v1298 = vsel %vm1102, %v1234, 0
        %v1301 = vsel %vm1242, %v1238, 0
        %1303 = vmatpush.bf16.msra.mxu0 0
        %1304 = vmatpush.bf16.msra.mxu0 0
        %1305 = vmatpush.bf16.msra.mxu0 0
        %1306 = vmatpush.bf16.msra.mxu0 0
        %1307 = vmatpush.bf16.msra.mxu0 0
        %1308 = vmatpush.bf16.msra.mxu0 0
        %1309 = vmatpush.bf16.msra.mxu0 0
        %1310 = vmatpush.bf16.msra.mxu0 %v1301
        %1311 = vmatmul.bf16.gmra.mxu0 %v1298
        %v1312 = vpop.f32.mrf.mxu0
        %v1313 = vadd.f32 0.0, %v1312
        %v1314 = vpop.f32.mrf.mxu0
        %1315 = vdwg.mxu0
        %v1316 = vpack.c.bf16 %v1256, %v1256
        %v1317 = vpack.c.bf16 %v1275, %v1275
        %v1318 = vpack.c.bf16 %v1294, %v1294
        %v1319 = vpack.c.bf16 %v1313, %v1313
        %v1321 = vsel %vm1102, %v1316, 0
        %v1324 = vsel %vm1242, %v748, 0
        %1326 = vmatpush.bf16.msra.mxu0 0
        %1327 = vmatpush.bf16.msra.mxu0 0
        %1328 = vmatpush.bf16.msra.mxu0 0
        %1329 = vmatpush.bf16.msra.mxu0 0
        %1330 = vmatpush.bf16.msra.mxu0 0
        %1331 = vmatpush.bf16.msra.mxu0 0
        %1332 = vmatpush.bf16.msra.mxu0 0
        %1333 = vmatpush.bf16.msra.mxu0 %v1324
        %1334 = vmatmul.bf16.gmra.mxu0 %v1321
        %v1335 = vpop.f32.mrf.mxu0
        %v1336 = vadd.f32 0.0, %v1335
        %v1337 = vpop.f32.mrf.mxu0
        %1338 = vdwg.mxu0
        %v1340 = vsel %vm1102, %v1317, 0
        %v1343 = vsel %vm1242, %v749, 0
        %1345 = vmatpush.bf16.msra.mxu0 0
        %1346 = vmatpush.bf16.msra.mxu0 0
        %1347 = vmatpush.bf16.msra.mxu0 0
        %1348 = vmatpush.bf16.msra.mxu0 0
        %1349 = vmatpush.bf16.msra.mxu0 0
        %1350 = vmatpush.bf16.msra.mxu0 0
        %1351 = vmatpush.bf16.msra.mxu0 0
        %1352 = vmatpush.bf16.msra.mxu0 %v1343
        %1353 = vmatmul.bf16.gmra.mxu0 %v1340
        %v1354 = vpop.f32.mrf.mxu0
        %v1355 = vadd.f32 0.0, %v1354
        %v1356 = vpop.f32.mrf.mxu0
        %1357 = vdwg.mxu0
        %v1359 = vsel %vm1102, %v1318, 0
        %v1362 = vsel %vm1242, %v750, 0
        %1364 = vmatpush.bf16.msra.mxu0 0
        %1365 = vmatpush.bf16.msra.mxu0 0
        %1366 = vmatpush.bf16.msra.mxu0 0
        %1367 = vmatpush.bf16.msra.mxu0 0
        %1368 = vmatpush.bf16.msra.mxu0 0
        %1369 = vmatpush.bf16.msra.mxu0 0
        %1370 = vmatpush.bf16.msra.mxu0 0
        %1371 = vmatpush.bf16.msra.mxu0 %v1362
        %1372 = vmatmul.bf16.gmra.mxu0 %v1359
        %v1373 = vpop.f32.mrf.mxu0
        %v1374 = vadd.f32 0.0, %v1373
        %v1375 = vpop.f32.mrf.mxu0
        %1376 = vdwg.mxu0
        %v1378 = vsel %vm1102, %v1319, 0
        %v1381 = vsel %vm1242, %v751, 0
        %1383 = vmatpush.bf16.msra.mxu0 0
        %1384 = vmatpush.bf16.msra.mxu0 0
        %1385 = vmatpush.bf16.msra.mxu0 0
        %1386 = vmatpush.bf16.msra.mxu0 0
        %1387 = vmatpush.bf16.msra.mxu0 0
        %1388 = vmatpush.bf16.msra.mxu0 0
        %1389 = vmatpush.bf16.msra.mxu0 0
        %1390 = vmatpush.bf16.msra.mxu0 %v1381
        %1391 = vmatmul.bf16.gmra.mxu0 %v1378
        %v1392 = vpop.f32.mrf.mxu0
        %v1393 = vadd.f32 0.0, %v1392
        %v1394 = vpop.f32.mrf.mxu0
        %1395 = vdwg.mxu0
        %v1396 = vsel %vm778, %v1336, 0.0
        %v1397 = vsel %vm778, %v1355, 0.0
        %v1398 = vadd.f32 %v1396, %v1397
        %v1399 = vsel %vm778, %v1374, 0.0
        %v1400 = vadd.f32 %v1398, %v1399
        %v1401 = vsel %vm778, %v1393, 0.0
        %v1402 = vadd.f32 %v1400, %v1401
        %v1404 = vperm.slane %v752, 0
        %v1406 = vadd.f32 %v1402, %v1404
        %v1407 = vadd.f32 %v674, %v1406
        %v1408 = vsel %vm778, %v1407, 0.0
        %1409 = vadd.xlane.f32.xlu0 %v1408
        %v1410 = vpop.xlane.xlu0 %1409
        %v1411 = vrcp.pop 32.0
        %v1412 = vmul.f32 32.0, %v1411
        %v1413 = vsub.f32 1.0, %v1412
        %v1414 = vmul.f32 %v1411, %v1413
        %v1415 = vadd.f32 %v1411, %v1414
        %vm1416 = vweird.f32 %v1411
        %v1417 = vsel %vm1416, %v1411, %v1415
        %v1418 = vmul.f32 %v1410, %v1417
        %v1419 = vsub.f32 %v1407, %v1418
        %v1420 = vmul.f32 %v1419, %v1419
        %v1421 = vsel %vm778, %v1420, 0.0
        %1422 = vadd.xlane.f32.xlu0 %v1421
        %v1423 = vpop.xlane.xlu0 %1422
        %v1424 = vmul.f32 %v1423, 0.032258064
        %v1425 = vperm.slane %v682, 0
        %v1426 = vmul.f32 %v1425, %v1419
        %v1427 = vrsqrt.pop %v1424
        %v1428 = vmul.f32 %v1427, %v1424
        %v1429 = vmul.f32 %v1428, %v1427
        %v1430 = vmul.f32 0.5, %v1429
        %v1431 = vsub.f32 1.5, %v1430
        %v1432 = vmul.f32 %v1427, %v1431
        %v1433 = vmul.f32 %v1424, %v1432
        %vm1434 = vcmp.eq.f32.partialorder %v1424, inf
        %v1435 = vsel %vm1434, %v1424, %v1433
        %vm1436 = vcmp.eq.f32.partialorder %v1424, 0.0
        %v1437 = vand.u32 %v1424, 2147483648
        %v1438 = vsel %vm1436, %v1437, %v1435
        %v1439 = vadd.f32 %v1438, 1e-06
        %v1440 = vrcp.pop %v1439
        %v1441 = vmul.f32 %v1439, %v1440
        %v1442 = vsub.f32 1.0, %v1441
        %v1443 = vmul.f32 %v1440, %v1442
        %v1444 = vadd.f32 %v1440, %v1443
        %vm1445 = vweird.f32 %v1439
        %vm1446 = vweird.f32 %v1440
        %vm1447 = vmor %vm1445, %vm1446
        %v1448 = vsel %vm1447, %v1440, %v1444
        %v1449 = vand.u32 2147483647, %v1439
        %vm1450 = vcmp.eq.f32.partialorder %v1449, 8.507059e+37
        %v1451 = vand.u32 %v1439, 2147483648
        %v1452 = vor.u32 1.1754944e-38, %v1451
        %v1453 = vsel %vm1450, %v1452, %v1448
        %v1454 = vmul.f32 %v1426, %v1453
        %v1455 = vperm.slane %v683, 0
        %v1456 = vadd.f32 %v1454, %v1455
        %v1457 = vld [vmem:[%s8] sm:$0xf]
        %v1458 = vld [vmem:[%s8 + $0x4] sm:$0xf]
        %v1459 = vld [vmem:[%s8 + $0x8] sm:$0xf]
        %v1460 = vld [vmem:[%s8 + $0xc] sm:$0xf]
        %v1461 = vld [vmem:[%s8 + $0x10] sm:$0xf]
        %v1462 = vld [vmem:[%s8 + $0x14] sm:$0xf]
        %v1463 = vld [vmem:[%s8 + $0x18] sm:$0xf]
        %v1464 = vld [vmem:[%s8 + $0x1c] sm:$0xf]
        %v1465 = vld [vmem:[%s8 + $0x20] sm:$0xf]
        %v1466 = vld [vmem:[%s8 + $0x24] sm:$0xf]
        %v1467 = vld [vmem:[%s8 + $0x28] sm:$0xf]
        %v1468 = vld [vmem:[%s8 + $0x2c] sm:$0xf]
        %v1469 = vld [vmem:[%s8 + $0x30] sm:$0xf]
        %v1470 = vld [vmem:[%s8 + $0x34] sm:$0xf]
        %v1471 = vld [vmem:[%s8 + $0x38] sm:$0xf]
        %v1472 = vld [vmem:[%s8 + $0x3c] sm:$0xf]
        %v1473 = vld [vmem:[%s9] sm:$0x1]
        %v1474 = vld [vmem:[%s9 + $0x1] sm:$0x1]
        %v1475 = vld [vmem:[%s9 + $0x2] sm:$0x1]
        %v1476 = vld [vmem:[%s9 + $0x3] sm:$0x1]
        %v1477 = vld [vmem:[%s10] sm:$0xf]
        %v1478 = vld [vmem:[%s10 + $0x4] sm:$0xf]
        %v1479 = vld [vmem:[%s10 + $0x8] sm:$0xf]
        %v1480 = vld [vmem:[%s10 + $0xc] sm:$0xf]
        %v1481 = vld [vmem:[%s10 + $0x10] sm:$0xf]
        %v1482 = vld [vmem:[%s10 + $0x14] sm:$0xf]
        %v1483 = vld [vmem:[%s10 + $0x18] sm:$0xf]
        %v1484 = vld [vmem:[%s10 + $0x1c] sm:$0xf]
        %v1485 = vld [vmem:[%s10 + $0x20] sm:$0xf]
        %v1486 = vld [vmem:[%s10 + $0x24] sm:$0xf]
        %v1487 = vld [vmem:[%s10 + $0x28] sm:$0xf]
        %v1488 = vld [vmem:[%s10 + $0x2c] sm:$0xf]
        %v1489 = vld [vmem:[%s10 + $0x30] sm:$0xf]
        %v1490 = vld [vmem:[%s10 + $0x34] sm:$0xf]
        %v1491 = vld [vmem:[%s10 + $0x38] sm:$0xf]
        %v1492 = vld [vmem:[%s10 + $0x3c] sm:$0xf]
        %v1493 = vld [vmem:[%s11] sm:$0x1]
        %v1494 = vld [vmem:[%s11 + $0x1] sm:$0x1]
        %v1495 = vld [vmem:[%s11 + $0x2] sm:$0x1]
        %v1496 = vld [vmem:[%s11 + $0x3] sm:$0x1]
        %s1497 = scalar_lea.vmem %s10, 64
        %v1498 = vld [vmem:[%s1497] sm:$0xf]
        %v1499 = vld [vmem:[%s1497 + $0x4] sm:$0xf]
        %v1500 = vld [vmem:[%s1497 + $0x8] sm:$0xf]
        %v1501 = vld [vmem:[%s1497 + $0xc] sm:$0xf]
        %v1502 = vld [vmem:[%s1497 + $0x10] sm:$0xf]
        %v1503 = vld [vmem:[%s1497 + $0x14] sm:$0xf]
        %v1504 = vld [vmem:[%s1497 + $0x18] sm:$0xf]
        %v1505 = vld [vmem:[%s1497 + $0x1c] sm:$0xf]
        %v1506 = vld [vmem:[%s1497 + $0x20] sm:$0xf]
        %v1507 = vld [vmem:[%s1497 + $0x24] sm:$0xf]
        %v1508 = vld [vmem:[%s1497 + $0x28] sm:$0xf]
        %v1509 = vld [vmem:[%s1497 + $0x2c] sm:$0xf]
        %v1510 = vld [vmem:[%s1497 + $0x30] sm:$0xf]
        %v1511 = vld [vmem:[%s1497 + $0x34] sm:$0xf]
        %v1512 = vld [vmem:[%s1497 + $0x38] sm:$0xf]
        %v1513 = vld [vmem:[%s1497 + $0x3c] sm:$0xf]
        %s1514 = scalar_lea.vmem %s11, 4
        %v1515 = vld [vmem:[%s1514] sm:$0x1]
        %v1516 = vld [vmem:[%s1514 + $0x1] sm:$0x1]
        %v1517 = vld [vmem:[%s1514 + $0x2] sm:$0x1]
        %v1518 = vld [vmem:[%s1514 + $0x3] sm:$0x1]
        %v1519 = vld [vmem:[%s12] sm:$0xf]
        %v1520 = vld [vmem:[%s12 + $0x4] sm:$0xf]
        %v1521 = vld [vmem:[%s12 + $0x8] sm:$0xf]
        %v1522 = vld [vmem:[%s12 + $0xc] sm:$0xf]
        %v1523 = vld [vmem:[%s13] sm:$0x1]
        %v1524 = vpack.c.bf16 %v1456, %v1456
        %v1525 = vpack.c.bf16 %v675, %v675
        %v1530 = vperm.slane %v1473, 0
        %v1531 = vperm.slane %v1474, 0
        %v1532 = vperm.slane %v1475, 0
        %v1533 = vperm.slane %v1476, 0
        %v1542 = vunpack.c.l.b16 %v1457
        %v1543 = vunpack.c.l.b16 %v1458
        %v1544 = vunpack.c.l.b16 %v1459
        %v1545 = vunpack.c.l.b16 %v1460
        %v1546 = vpack.c.b16 %v1543, %v1542
        %v1547 = vpack.c.b16 %v1545, %v1544
        %v1551 = vsel %vm778, %v1524, 0
        %1553 = vmatpush.bf16.msra.mxu0 0
        %1554 = vmatpush.bf16.msra.mxu0 0
        %1555 = vmatpush.bf16.msra.mxu0 0
        %1556 = vmatpush.bf16.msra.mxu0 0
        %1557 = vmatpush.bf16.msra.mxu0 0
        %1558 = vmatpush.bf16.msra.mxu0 0
        %1559 = vmatpush.bf16.msra.mxu0 %v1547
        %1560 = vmatpush.bf16.msra.mxu0 %v1546
        %1561 = vmatmul.bf16.gmra.mxu0 %v1551
        %v1562 = vpop.f32.mrf.mxu0
        %v1563 = vadd.f32 %v1530, %v1562
        %v1564 = vpop.f32.mrf.mxu0
        %1565 = vdwg.mxu0
        %v1570 = vunpack.c.l.b16 %v1461
        %v1571 = vunpack.c.l.b16 %v1462
        %v1572 = vunpack.c.l.b16 %v1463
        %v1573 = vunpack.c.l.b16 %v1464
        %v1574 = vpack.c.b16 %v1571, %v1570
        %v1575 = vpack.c.b16 %v1573, %v1572
        %1578 = vmatpush.bf16.msra.mxu0 0
        %1579 = vmatpush.bf16.msra.mxu0 0
        %1580 = vmatpush.bf16.msra.mxu0 0
        %1581 = vmatpush.bf16.msra.mxu0 0
        %1582 = vmatpush.bf16.msra.mxu0 0
        %1583 = vmatpush.bf16.msra.mxu0 0
        %1584 = vmatpush.bf16.msra.mxu0 %v1575
        %1585 = vmatpush.bf16.msra.mxu0 %v1574
        %1586 = vmatmul.bf16.gmra.mxu0 %v1551
        %v1587 = vpop.f32.mrf.mxu0
        %v1588 = vadd.f32 %v1531, %v1587
        %v1589 = vpop.f32.mrf.mxu0
        %1590 = vdwg.mxu0
        %v1595 = vunpack.c.l.b16 %v1465
        %v1596 = vunpack.c.l.b16 %v1466
        %v1597 = vunpack.c.l.b16 %v1467
        %v1598 = vunpack.c.l.b16 %v1468
        %v1599 = vpack.c.b16 %v1596, %v1595
        %v1600 = vpack.c.b16 %v1598, %v1597
        %1603 = vmatpush.bf16.msra.mxu0 0
        %1604 = vmatpush.bf16.msra.mxu0 0
        %1605 = vmatpush.bf16.msra.mxu0 0
        %1606 = vmatpush.bf16.msra.mxu0 0
        %1607 = vmatpush.bf16.msra.mxu0 0
        %1608 = vmatpush.bf16.msra.mxu0 0
        %1609 = vmatpush.bf16.msra.mxu0 %v1600
        %1610 = vmatpush.bf16.msra.mxu0 %v1599
        %1611 = vmatmul.bf16.gmra.mxu0 %v1551
        %v1612 = vpop.f32.mrf.mxu0
        %v1613 = vadd.f32 %v1532, %v1612
        %v1614 = vpop.f32.mrf.mxu0
        %1615 = vdwg.mxu0
        %v1620 = vunpack.c.l.b16 %v1469
        %v1621 = vunpack.c.l.b16 %v1470
        %v1622 = vunpack.c.l.b16 %v1471
        %v1623 = vunpack.c.l.b16 %v1472
        %v1624 = vpack.c.b16 %v1621, %v1620
        %v1625 = vpack.c.b16 %v1623, %v1622
        %1628 = vmatpush.bf16.msra.mxu0 0
        %1629 = vmatpush.bf16.msra.mxu0 0
        %1630 = vmatpush.bf16.msra.mxu0 0
        %1631 = vmatpush.bf16.msra.mxu0 0
        %1632 = vmatpush.bf16.msra.mxu0 0
        %1633 = vmatpush.bf16.msra.mxu0 0
        %1634 = vmatpush.bf16.msra.mxu0 %v1625
        %1635 = vmatpush.bf16.msra.mxu0 %v1624
        %1636 = vmatmul.bf16.gmra.mxu0 %v1551
        %v1637 = vpop.f32.mrf.mxu0
        %v1638 = vadd.f32 %v1533, %v1637
        %v1639 = vpop.f32.mrf.mxu0
        %1640 = vdwg.mxu0
        %v1645 = vperm.slane %v1493, 0
        %v1646 = vperm.slane %v1494, 0
        %v1647 = vperm.slane %v1495, 0
        %v1648 = vperm.slane %v1496, 0
        %v1657 = vunpack.c.l.b16 %v1477
        %v1658 = vunpack.c.l.b16 %v1478
        %v1659 = vunpack.c.l.b16 %v1479
        %v1660 = vunpack.c.l.b16 %v1480
        %v1661 = vpack.c.b16 %v1658, %v1657
        %v1662 = vpack.c.b16 %v1660, %v1659
        %v1666 = vsel %vm778, %v1525, 0
        %1668 = vmatpush.bf16.msra.mxu0 0
        %1669 = vmatpush.bf16.msra.mxu0 0
        %1670 = vmatpush.bf16.msra.mxu0 0
        %1671 = vmatpush.bf16.msra.mxu0 0
        %1672 = vmatpush.bf16.msra.mxu0 0
        %1673 = vmatpush.bf16.msra.mxu0 0
        %1674 = vmatpush.bf16.msra.mxu0 %v1662
        %1675 = vmatpush.bf16.msra.mxu0 %v1661
        %1676 = vmatmul.bf16.gmra.mxu0 %v1666
        %v1677 = vpop.f32.mrf.mxu0
        %v1678 = vadd.f32 %v1645, %v1677
        %v1679 = vpop.f32.mrf.mxu0
        %1680 = vdwg.mxu0
        %v1685 = vunpack.c.l.b16 %v1481
        %v1686 = vunpack.c.l.b16 %v1482
        %v1687 = vunpack.c.l.b16 %v1483
        %v1688 = vunpack.c.l.b16 %v1484
        %v1689 = vpack.c.b16 %v1686, %v1685
        %v1690 = vpack.c.b16 %v1688, %v1687
        %1693 = vmatpush.bf16.msra.mxu0 0
        %1694 = vmatpush.bf16.msra.mxu0 0
        %1695 = vmatpush.bf16.msra.mxu0 0
        %1696 = vmatpush.bf16.msra.mxu0 0
        %1697 = vmatpush.bf16.msra.mxu0 0
        %1698 = vmatpush.bf16.msra.mxu0 0
        %1699 = vmatpush.bf16.msra.mxu0 %v1690
        %1700 = vmatpush.bf16.msra.mxu0 %v1689
        %1701 = vmatmul.bf16.gmra.mxu0 %v1666
        %v1702 = vpop.f32.mrf.mxu0
        %v1703 = vadd.f32 %v1646, %v1702
        %v1704 = vpop.f32.mrf.mxu0
        %1705 = vdwg.mxu0
        %v1710 = vunpack.c.l.b16 %v1485
        %v1711 = vunpack.c.l.b16 %v1486
        %v1712 = vunpack.c.l.b16 %v1487
        %v1713 = vunpack.c.l.b16 %v1488
        %v1714 = vpack.c.b16 %v1711, %v1710
        %v1715 = vpack.c.b16 %v1713, %v1712
        %1718 = vmatpush.bf16.msra.mxu0 0
        %1719 = vmatpush.bf16.msra.mxu0 0
        %1720 = vmatpush.bf16.msra.mxu0 0
        %1721 = vmatpush.bf16.msra.mxu0 0
        %1722 = vmatpush.bf16.msra.mxu0 0
        %1723 = vmatpush.bf16.msra.mxu0 0
        %1724 = vmatpush.bf16.msra.mxu0 %v1715
        %1725 = vmatpush.bf16.msra.mxu0 %v1714
        %1726 = vmatmul.bf16.gmra.mxu0 %v1666
        %v1727 = vpop.f32.mrf.mxu0
        %v1728 = vadd.f32 %v1647, %v1727
        %v1729 = vpop.f32.mrf.mxu0
        %1730 = vdwg.mxu0
        %v1735 = vunpack.c.l.b16 %v1489
        %v1736 = vunpack.c.l.b16 %v1490
        %v1737 = vunpack.c.l.b16 %v1491
        %v1738 = vunpack.c.l.b16 %v1492
        %v1739 = vpack.c.b16 %v1736, %v1735
        %v1740 = vpack.c.b16 %v1738, %v1737
        %1743 = vmatpush.bf16.msra.mxu0 0
        %1744 = vmatpush.bf16.msra.mxu0 0
        %1745 = vmatpush.bf16.msra.mxu0 0
        %1746 = vmatpush.bf16.msra.mxu0 0
        %1747 = vmatpush.bf16.msra.mxu0 0
        %1748 = vmatpush.bf16.msra.mxu0 0
        %1749 = vmatpush.bf16.msra.mxu0 %v1740
        %1750 = vmatpush.bf16.msra.mxu0 %v1739
        %1751 = vmatmul.bf16.gmra.mxu0 %v1666
        %v1752 = vpop.f32.mrf.mxu0
        %v1753 = vadd.f32 %v1648, %v1752
        %v1754 = vpop.f32.mrf.mxu0
        %1755 = vdwg.mxu0
        %v1760 = vperm.slane %v1515, 0
        %v1761 = vperm.slane %v1516, 0
        %v1762 = vperm.slane %v1517, 0
        %v1763 = vperm.slane %v1518, 0
        %v1772 = vunpack.c.l.b16 %v1498
        %v1773 = vunpack.c.l.b16 %v1499
        %v1774 = vunpack.c.l.b16 %v1500
        %v1775 = vunpack.c.l.b16 %v1501
        %v1776 = vpack.c.b16 %v1773, %v1772
        %v1777 = vpack.c.b16 %v1775, %v1774
        %1780 = vmatpush.bf16.msra.mxu0 0
        %1781 = vmatpush.bf16.msra.mxu0 0
        %1782 = vmatpush.bf16.msra.mxu0 0
        %1783 = vmatpush.bf16.msra.mxu0 0
        %1784 = vmatpush.bf16.msra.mxu0 0
        %1785 = vmatpush.bf16.msra.mxu0 0
        %1786 = vmatpush.bf16.msra.mxu0 %v1777
        %1787 = vmatpush.bf16.msra.mxu0 %v1776
        %1788 = vmatmul.bf16.gmra.mxu0 %v1666
        %v1789 = vpop.f32.mrf.mxu0
        %v1790 = vadd.f32 %v1760, %v1789
        %v1791 = vpop.f32.mrf.mxu0
        %1792 = vdwg.mxu0
        %v1797 = vunpack.c.l.b16 %v1502
        %v1798 = vunpack.c.l.b16 %v1503
        %v1799 = vunpack.c.l.b16 %v1504
        %v1800 = vunpack.c.l.b16 %v1505
        %v1801 = vpack.c.b16 %v1798, %v1797
        %v1802 = vpack.c.b16 %v1800, %v1799
        %1805 = vmatpush.bf16.msra.mxu0 0
        %1806 = vmatpush.bf16.msra.mxu0 0
        %1807 = vmatpush.bf16.msra.mxu0 0
        %1808 = vmatpush.bf16.msra.mxu0 0
        %1809 = vmatpush.bf16.msra.mxu0 0
        %1810 = vmatpush.bf16.msra.mxu0 0
        %1811 = vmatpush.bf16.msra.mxu0 %v1802
        %1812 = vmatpush.bf16.msra.mxu0 %v1801
        %1813 = vmatmul.bf16.gmra.mxu0 %v1666
        %v1814 = vpop.f32.mrf.mxu0
        %v1815 = vadd.f32 %v1761, %v1814
        %v1816 = vpop.f32.mrf.mxu0
        %1817 = vdwg.mxu0
        %v1822 = vunpack.c.l.b16 %v1506
        %v1823 = vunpack.c.l.b16 %v1507
        %v1824 = vunpack.c.l.b16 %v1508
        %v1825 = vunpack.c.l.b16 %v1509
        %v1826 = vpack.c.b16 %v1823, %v1822
        %v1827 = vpack.c.b16 %v1825, %v1824
        %1830 = vmatpush.bf16.msra.mxu0 0
        %1831 = vmatpush.bf16.msra.mxu0 0
        %1832 = vmatpush.bf16.msra.mxu0 0
        %1833 = vmatpush.bf16.msra.mxu0 0
        %1834 = vmatpush.bf16.msra.mxu0 0
        %1835 = vmatpush.bf16.msra.mxu0 0
        %1836 = vmatpush.bf16.msra.mxu0 %v1827
        %1837 = vmatpush.bf16.msra.mxu0 %v1826
        %1838 = vmatmul.bf16.gmra.mxu0 %v1666
        %v1839 = vpop.f32.mrf.mxu0
        %v1840 = vadd.f32 %v1762, %v1839
        %v1841 = vpop.f32.mrf.mxu0
        %1842 = vdwg.mxu0
        %v1847 = vunpack.c.l.b16 %v1510
        %v1848 = vunpack.c.l.b16 %v1511
        %v1849 = vunpack.c.l.b16 %v1512
        %v1850 = vunpack.c.l.b16 %v1513
        %v1851 = vpack.c.b16 %v1848, %v1847
        %v1852 = vpack.c.b16 %v1850, %v1849
        %1855 = vmatpush.bf16.msra.mxu0 0
        %1856 = vmatpush.bf16.msra.mxu0 0
        %1857 = vmatpush.bf16.msra.mxu0 0
        %1858 = vmatpush.bf16.msra.mxu0 0
        %1859 = vmatpush.bf16.msra.mxu0 0
        %1860 = vmatpush.bf16.msra.mxu0 0
        %1861 = vmatpush.bf16.msra.mxu0 %v1852
        %1862 = vmatpush.bf16.msra.mxu0 %v1851
        %1863 = vmatmul.bf16.gmra.mxu0 %v1666
        %v1864 = vpop.f32.mrf.mxu0
        %v1865 = vadd.f32 %v1763, %v1864
        %v1866 = vpop.f32.mrf.mxu0
        %1867 = vdwg.mxu0
        %v1868 = vpack.c.bf16 %v1563, %v1563
        %v1869 = vpack.c.bf16 %v1588, %v1588
        %v1870 = vpack.c.bf16 %v1613, %v1613
        %v1871 = vpack.c.bf16 %v1638, %v1638
        %v1872 = vpack.c.bf16 %v1678, %v1678
        %v1873 = vpack.c.bf16 %v1703, %v1703
        %v1874 = vpack.c.bf16 %v1728, %v1728
        %v1875 = vpack.c.bf16 %v1753, %v1753
        %v1877 = vsel %vm1102, %v1868, 0
        %v1880 = vsel %vm1102, %v1872, 0
        %1882 = vmatpush.bf16.xpose.msra.mxu0 0
        %1883 = vmatpush.bf16.xpose.msra.mxu0 0
        %1884 = vmatpush.bf16.xpose.msra.mxu0 0
        %1885 = vmatpush.bf16.xpose.msra.mxu0 0
        %1886 = vmatpush.bf16.xpose.msra.mxu0 0
        %1887 = vmatpush.bf16.xpose.msra.mxu0 0
        %1888 = vmatpush.bf16.xpose.msra.mxu0 0
        %1889 = vmatpush.bf16.xpose.msra.mxu0 %v1880
        %1890 = vmatmul.bf16.gmra.mxu0 %v1877
        %v1891 = vpop.f32.mrf.mxu0
        %v1892 = vadd.f32 0.0, %v1891
        %v1893 = vpop.f32.mrf.mxu0
        %1894 = vdwg.mxu0
        %v1896 = vsel %vm1102, %v1869, 0
        %v1899 = vsel %vm1102, %v1873, 0
        %1901 = vmatpush.bf16.xpose.msra.mxu0 0
        %1902 = vmatpush.bf16.xpose.msra.mxu0 0
        %1903 = vmatpush.bf16.xpose.msra.mxu0 0
        %1904 = vmatpush.bf16.xpose.msra.mxu0 0
        %1905 = vmatpush.bf16.xpose.msra.mxu0 0
        %1906 = vmatpush.bf16.xpose.msra.mxu0 0
        %1907 = vmatpush.bf16.xpose.msra.mxu0 0
        %1908 = vmatpush.bf16.xpose.msra.mxu0 %v1899
        %1909 = vmatmul.bf16.gmra.mxu0 %v1896
        %v1910 = vpop.f32.mrf.mxu0
        %v1911 = vadd.f32 0.0, %v1910
        %v1912 = vpop.f32.mrf.mxu0
        %1913 = vdwg.mxu0
        %v1915 = vsel %vm1102, %v1870, 0
        %v1918 = vsel %vm1102, %v1874, 0
        %1920 = vmatpush.bf16.xpose.msra.mxu0 0
        %1921 = vmatpush.bf16.xpose.msra.mxu0 0
        %1922 = vmatpush.bf16.xpose.msra.mxu0 0
        %1923 = vmatpush.bf16.xpose.msra.mxu0 0
        %1924 = vmatpush.bf16.xpose.msra.mxu0 0
        %1925 = vmatpush.bf16.xpose.msra.mxu0 0
        %1926 = vmatpush.bf16.xpose.msra.mxu0 0
        %1927 = vmatpush.bf16.xpose.msra.mxu0 %v1918
        %1928 = vmatmul.bf16.gmra.mxu0 %v1915
        %v1929 = vpop.f32.mrf.mxu0
        %v1930 = vadd.f32 0.0, %v1929
        %v1931 = vpop.f32.mrf.mxu0
        %1932 = vdwg.mxu0
        %v1934 = vsel %vm1102, %v1871, 0
        %v1937 = vsel %vm1102, %v1875, 0
        %1939 = vmatpush.bf16.xpose.msra.mxu0 0
        %1940 = vmatpush.bf16.xpose.msra.mxu0 0
        %1941 = vmatpush.bf16.xpose.msra.mxu0 0
        %1942 = vmatpush.bf16.xpose.msra.mxu0 0
        %1943 = vmatpush.bf16.xpose.msra.mxu0 0
        %1944 = vmatpush.bf16.xpose.msra.mxu0 0
        %1945 = vmatpush.bf16.xpose.msra.mxu0 0
        %1946 = vmatpush.bf16.xpose.msra.mxu0 %v1937
        %1947 = vmatmul.bf16.gmra.mxu0 %v1934
        %v1948 = vpop.f32.mrf.mxu0
        %v1949 = vadd.f32 0.0, %v1948
        %v1950 = vpop.f32.mrf.mxu0
        %1951 = vdwg.mxu0
        %v1952 = vmul.f32 %v1892, 0.35355338
        %v1953 = vmul.f32 %v1911, 0.35355338
        %v1954 = vmul.f32 %v1930, 0.35355338
        %v1955 = vmul.f32 %v1949, 0.35355338
        %v1957 = vperm.slane %v681, 0
        %v1959 = vadd.f32 %v1952, %v1957
        %v1960 = vadd.f32 %v1953, %v1957
        %v1961 = vadd.f32 %v1954, %v1957
        %v1962 = vadd.f32 %v1955, %v1957
        %v1963 = vsel %vm1102, %v1959, -inf
        %1964 = vmax.xlane.f32.xlu0 %v1963
        %v1965 = vpop.xlane.xlu0 %1964
        %v1966 = vsel %vm1102, %v1960, -inf
        %1967 = vmax.xlane.f32.xlu0 %v1966
        %v1968 = vpop.xlane.xlu0 %1967
        %v1969 = vsel %vm1102, %v1961, -inf
        %1970 = vmax.xlane.f32.xlu0 %v1969
        %v1971 = vpop.xlane.xlu0 %1970
        %v1972 = vsel %vm1102, %v1962, -inf
        %1973 = vmax.xlane.f32.xlu0 %v1972
        %v1974 = vpop.xlane.xlu0 %1973
        %v1975 = vsub.f32 %v1959, %v1965
        %v1976 = vsub.f32 %v1960, %v1968
        %v1977 = vsub.f32 %v1961, %v1971
        %v1978 = vsub.f32 %v1962, %v1974
        %v1979 = vmul.f32 %v1975, 1.442695
        %v1980 = vpow.pop %v1979
        %v1981 = vmul.f32 %v1976, 1.442695
        %v1982 = vpow.pop %v1981
        %v1983 = vmul.f32 %v1977, 1.442695
        %v1984 = vpow.pop %v1983
        %v1985 = vmul.f32 %v1978, 1.442695
        %v1986 = vpow.pop %v1985
        %v1987 = vsel %vm1102, %v1980, 0.0
        %1988 = vadd.xlane.f32.xlu0 %v1987
        %v1989 = vpop.xlane.xlu0 %1988
        %v1990 = vsel %vm1102, %v1982, 0.0
        %1991 = vadd.xlane.f32.xlu0 %v1990
        %v1992 = vpop.xlane.xlu0 %1991
        %v1993 = vsel %vm1102, %v1984, 0.0
        %1994 = vadd.xlane.f32.xlu0 %v1993
        %v1995 = vpop.xlane.xlu0 %1994
        %v1996 = vsel %vm1102, %v1986, 0.0
        %1997 = vadd.xlane.f32.xlu0 %v1996
        %v1998 = vpop.xlane.xlu0 %1997
        %v1999 = vrcp.pop %v1989
        %v2000 = vrcp.pop %v1992
        %v2001 = vrcp.pop %v1995
        %v2002 = vrcp.pop %v1998
        %v2003 = vmul.f32 %v1980, %v1999
        %v2004 = vmul.f32 %v1982, %v2000
        %v2005 = vmul.f32 %v1984, %v2001
        %v2006 = vmul.f32 %v1986, %v2002
        %v2007 = vpack.c.bf16 %v2003, %v2003
        %v2008 = vpack.c.bf16 %v2004, %v2004
        %v2009 = vpack.c.bf16 %v2005, %v2005
        %v2010 = vpack.c.bf16 %v2006, %v2006
        %v2011 = vpack.c.bf16 %v1790, %v1790
        %v2012 = vpack.c.bf16 %v1815, %v1815
        %v2013 = vpack.c.bf16 %v1840, %v1840
        %v2014 = vpack.c.bf16 %v1865, %v1865
        %v2016 = vsel %vm1102, %v2007, 0
        %v2019 = vsel %vm1242, %v2011, 0
        %2021 = vmatpush.bf16.msra.mxu0 0
        %2022 = vmatpush.bf16.msra.mxu0 0
        %2023 = vmatpush.bf16.msra.mxu0 0
        %2024 = vmatpush.bf16.msra.mxu0 0
        %2025 = vmatpush.bf16.msra.mxu0 0
        %2026 = vmatpush.bf16.msra.mxu0 0
        %2027 = vmatpush.bf16.msra.mxu0 0
        %2028 = vmatpush.bf16.msra.mxu0 %v2019
        %2029 = vmatmul.bf16.gmra.mxu0 %v2016
        %v2030 = vpop.f32.mrf.mxu0
        %v2031 = vadd.f32 0.0, %v2030
        %v2032 = vpop.f32.mrf.mxu0
        %2033 = vdwg.mxu0
        %v2035 = vsel %vm1102, %v2008, 0
        %v2038 = vsel %vm1242, %v2012, 0
        %2040 = vmatpush.bf16.msra.mxu0 0
        %2041 = vmatpush.bf16.msra.mxu0 0
        %2042 = vmatpush.bf16.msra.mxu0 0
        %2043 = vmatpush.bf16.msra.mxu0 0
        %2044 = vmatpush.bf16.msra.mxu0 0
        %2045 = vmatpush.bf16.msra.mxu0 0
        %2046 = vmatpush.bf16.msra.mxu0 0
        %2047 = vmatpush.bf16.msra.mxu0 %v2038
        %2048 = vmatmul.bf16.gmra.mxu0 %v2035
        %v2049 = vpop.f32.mrf.mxu0
        %v2050 = vadd.f32 0.0, %v2049
        %v2051 = vpop.f32.mrf.mxu0
        %2052 = vdwg.mxu0
        %v2054 = vsel %vm1102, %v2009, 0
        %v2057 = vsel %vm1242, %v2013, 0
        %2059 = vmatpush.bf16.msra.mxu0 0
        %2060 = vmatpush.bf16.msra.mxu0 0
        %2061 = vmatpush.bf16.msra.mxu0 0
        %2062 = vmatpush.bf16.msra.mxu0 0
        %2063 = vmatpush.bf16.msra.mxu0 0
        %2064 = vmatpush.bf16.msra.mxu0 0
        %2065 = vmatpush.bf16.msra.mxu0 0
        %2066 = vmatpush.bf16.msra.mxu0 %v2057
        %2067 = vmatmul.bf16.gmra.mxu0 %v2054
        %v2068 = vpop.f32.mrf.mxu0
        %v2069 = vadd.f32 0.0, %v2068
        %v2070 = vpop.f32.mrf.mxu0
        %2071 = vdwg.mxu0
        %v2073 = vsel %vm1102, %v2010, 0
        %v2076 = vsel %vm1242, %v2014, 0
        %2078 = vmatpush.bf16.msra.mxu0 0
        %2079 = vmatpush.bf16.msra.mxu0 0
        %2080 = vmatpush.bf16.msra.mxu0 0
        %2081 = vmatpush.bf16.msra.mxu0 0
        %2082 = vmatpush.bf16.msra.mxu0 0
        %2083 = vmatpush.bf16.msra.mxu0 0
        %2084 = vmatpush.bf16.msra.mxu0 0
        %2085 = vmatpush.bf16.msra.mxu0 %v2076
        %2086 = vmatmul.bf16.gmra.mxu0 %v2073
        %v2087 = vpop.f32.mrf.mxu0
        %v2088 = vadd.f32 0.0, %v2087
        %v2089 = vpop.f32.mrf.mxu0
        %2090 = vdwg.mxu0
        %v2091 = vpack.c.bf16 %v2031, %v2031
        %v2092 = vpack.c.bf16 %v2050, %v2050
        %v2093 = vpack.c.bf16 %v2069, %v2069
        %v2094 = vpack.c.bf16 %v2088, %v2088
        %v2096 = vsel %vm1102, %v2091, 0
        %v2099 = vsel %vm1242, %v1519, 0
        %2101 = vmatpush.bf16.msra.mxu0 0
        %2102 = vmatpush.bf16.msra.mxu0 0
        %2103 = vmatpush.bf16.msra.mxu0 0
        %2104 = vmatpush.bf16.msra.mxu0 0
        %2105 = vmatpush.bf16.msra.mxu0 0
        %2106 = vmatpush.bf16.msra.mxu0 0
        %2107 = vmatpush.bf16.msra.mxu0 0
        %2108 = vmatpush.bf16.msra.mxu0 %v2099
        %2109 = vmatmul.bf16.gmra.mxu0 %v2096
        %v2110 = vpop.f32.mrf.mxu0
        %v2111 = vadd.f32 0.0, %v2110
        %v2112 = vpop.f32.mrf.mxu0
        %2113 = vdwg.mxu0
        %v2115 = vsel %vm1102, %v2092, 0
        %v2118 = vsel %vm1242, %v1520, 0
        %2120 = vmatpush.bf16.msra.mxu0 0
        %2121 = vmatpush.bf16.msra.mxu0 0
        %2122 = vmatpush.bf16.msra.mxu0 0
        %2123 = vmatpush.bf16.msra.mxu0 0
        %2124 = vmatpush.bf16.msra.mxu0 0
        %2125 = vmatpush.bf16.msra.mxu0 0
        %2126 = vmatpush.bf16.msra.mxu0 0
        %2127 = vmatpush.bf16.msra.mxu0 %v2118
        %2128 = vmatmul.bf16.gmra.mxu0 %v2115
        %v2129 = vpop.f32.mrf.mxu0
        %v2130 = vadd.f32 0.0, %v2129
        %v2131 = vpop.f32.mrf.mxu0
        %2132 = vdwg.mxu0
        %v2134 = vsel %vm1102, %v2093, 0
        %v2137 = vsel %vm1242, %v1521, 0
        %2139 = vmatpush.bf16.msra.mxu0 0
        %2140 = vmatpush.bf16.msra.mxu0 0
        %2141 = vmatpush.bf16.msra.mxu0 0
        %2142 = vmatpush.bf16.msra.mxu0 0
        %2143 = vmatpush.bf16.msra.mxu0 0
        %2144 = vmatpush.bf16.msra.mxu0 0
        %2145 = vmatpush.bf16.msra.mxu0 0
        %2146 = vmatpush.bf16.msra.mxu0 %v2137
        %2147 = vmatmul.bf16.gmra.mxu0 %v2134
        %v2148 = vpop.f32.mrf.mxu0
        %v2149 = vadd.f32 0.0, %v2148
        %v2150 = vpop.f32.mrf.mxu0
        %2151 = vdwg.mxu0
        %v2153 = vsel %vm1102, %v2094, 0
        %v2156 = vsel %vm1242, %v1522, 0
        %2158 = vmatpush.bf16.msra.mxu0 0
        %2159 = vmatpush.bf16.msra.mxu0 0
        %2160 = vmatpush.bf16.msra.mxu0 0
        %2161 = vmatpush.bf16.msra.mxu0 0
        %2162 = vmatpush.bf16.msra.mxu0 0
        %2163 = vmatpush.bf16.msra.mxu0 0
        %2164 = vmatpush.bf16.msra.mxu0 0
        %2165 = vmatpush.bf16.msra.mxu0 %v2156
        %2166 = vmatmul.bf16.gmra.mxu0 %v2153
        %v2167 = vpop.f32.mrf.mxu0
        %v2168 = vadd.f32 0.0, %v2167
        %v2169 = vpop.f32.mrf.mxu0
        %2170 = vdwg.mxu0
        %v2171 = vsel %vm778, %v2111, 0.0
        %v2172 = vsel %vm778, %v2130, 0.0
        %v2173 = vadd.f32 %v2171, %v2172
        %v2174 = vsel %vm778, %v2149, 0.0
        %v2175 = vadd.f32 %v2173, %v2174
        %v2176 = vsel %vm778, %v2168, 0.0
        %v2177 = vadd.f32 %v2175, %v2176
        %v2179 = vperm.slane %v1523, 0
        %v2181 = vadd.f32 %v2177, %v2179
        %v2182 = vadd.f32 %v1456, %v2181
        %v2183 = vsel %vm778, %v2182, 0.0
        %2184 = vadd.xlane.f32.xlu0 %v2183
        %v2185 = vpop.xlane.xlu0 %2184
        %v2186 = vmul.f32 %v2185, %v1417
        %v2187 = vsub.f32 %v2182, %v2186
        %v2188 = vmul.f32 %v2187, %v2187
        %v2189 = vsel %vm778, %v2188, 0.0
        %2190 = vadd.xlane.f32.xlu0 %v2189
        %v2191 = vpop.xlane.xlu0 %2190
        %v2192 = vmul.f32 %v2191, 0.032258064
        %v2193 = vperm.slane %v682, 1
        %v2194 = vmul.f32 %v2193, %v2187
        %v2195 = vrsqrt.pop %v2192
        %v2196 = vmul.f32 %v2195, %v2192
        %v2197 = vmul.f32 %v2196, %v2195
        %v2198 = vmul.f32 0.5, %v2197
        %v2199 = vsub.f32 1.5, %v2198
        %v2200 = vmul.f32 %v2195, %v2199
        %v2201 = vmul.f32 %v2192, %v2200
        %vm2202 = vcmp.eq.f32.partialorder %v2192, inf
        %v2203 = vsel %vm2202, %v2192, %v2201
        %vm2204 = vcmp.eq.f32.partialorder %v2192, 0.0
        %v2205 = vand.u32 %v2192, 2147483648
        %v2206 = vsel %vm2204, %v2205, %v2203
        %v2207 = vadd.f32 %v2206, 1e-06
        %v2208 = vrcp.pop %v2207
        %v2209 = vmul.f32 %v2207, %v2208
        %v2210 = vsub.f32 1.0, %v2209
        %v2211 = vmul.f32 %v2208, %v2210
        %v2212 = vadd.f32 %v2208, %v2211
        %vm2213 = vweird.f32 %v2207
        %vm2214 = vweird.f32 %v2208
        %vm2215 = vmor %vm2213, %vm2214
        %v2216 = vsel %vm2215, %v2208, %v2212
        %v2217 = vand.u32 2147483647, %v2207
        %vm2218 = vcmp.eq.f32.partialorder %v2217, 8.507059e+37
        %v2219 = vand.u32 %v2207, 2147483648
        %v2220 = vor.u32 1.1754944e-38, %v2219
        %v2221 = vsel %vm2218, %v2220, %v2216
        %v2222 = vmul.f32 %v2194, %v2221
        %v2223 = vperm.slane %v683, 1
        %v2224 = vadd.f32 %v2222, %v2223
        %v2225 = vpack.c.bf16 %v2224, %v2224
        %v2226 = vld [vmem:[%s14] sm:$0xff]
        %v2227 = vld [vmem:[%s14 + $0x8] sm:$0xff]
        %v2228 = vld [vmem:[%s14 + $0x10] sm:$0xff]
        %v2229 = vld [vmem:[%s14 + $0x18] sm:$0xff]
        %v2230 = vld [vmem:[%s14 + $0x20] sm:$0xff]
        %v2231 = vld [vmem:[%s14 + $0x28] sm:$0xff]
        %v2232 = vld [vmem:[%s14 + $0x30] sm:$0xff]
        %v2233 = vld [vmem:[%s14 + $0x38] sm:$0xff]
        %v2234 = vld [vmem:[%s14 + $0x40] sm:$0xff]
        %v2235 = vld [vmem:[%s14 + $0x48] sm:$0xff]
        %v2236 = vld [vmem:[%s14 + $0x50] sm:$0xff]
        %v2237 = vld [vmem:[%s14 + $0x58] sm:$0xff]
        %v2238 = vld [vmem:[%s14 + $0x60] sm:$0xff]
        %v2239 = vld [vmem:[%s14 + $0x68] sm:$0xff]
        %v2240 = vld [vmem:[%s14 + $0x70] sm:$0xff]
        %v2241 = vld [vmem:[%s14 + $0x78] sm:$0xff]
        %v2242 = vld [vmem:[%s14 + $0x80] sm:$0xff]
        %v2243 = vld [vmem:[%s14 + $0x88] sm:$0xff]
        %v2244 = vld [vmem:[%s14 + $0x90] sm:$0xff]
        %v2245 = vld [vmem:[%s14 + $0x98] sm:$0xff]
        %v2246 = vld [vmem:[%s14 + $0xa0] sm:$0xff]
        %v2247 = vld [vmem:[%s14 + $0xa8] sm:$0xff]
        %v2248 = vld [vmem:[%s14 + $0xb0] sm:$0xff]
        %v2249 = vld [vmem:[%s14 + $0xb8] sm:$0xff]
        %v2250 = vld [vmem:[%s14 + $0xc0] sm:$0xff]
        %v2251 = vld [vmem:[%s14 + $0xc8] sm:$0xff]
        %v2252 = vld [vmem:[%s14 + $0xd0] sm:$0xff]
        %v2253 = vld [vmem:[%s14 + $0xd8] sm:$0xff]
        %v2254 = vld [vmem:[%s14 + $0xe0] sm:$0xff]
        %v2255 = vld [vmem:[%s14 + $0xe8] sm:$0xff]
        %v2256 = vld [vmem:[%s14 + $0xf0] sm:$0xff]
        %v2257 = vld [vmem:[%s14 + $0xf8] sm:$0xff]
        %v2258 = vld [vmem:[%s15] sm:$0xff]
        %v2259 = vld [vmem:[%s15 + $0x8] sm:$0xff]
        %v2262 = vperm.slane %v2258, 0
        %v2263 = vperm.slane %v2258, 1
        %v2264 = vperm.slane %v2258, 2
        %v2265 = vperm.slane %v2258, 3
        %v2266 = vperm.slane %v2258, 4
        %v2267 = vperm.slane %v2258, 5
        %v2268 = vperm.slane %v2258, 6
        %v2269 = vperm.slane %v2258, 7
        %v2270 = vperm.slane %v2259, 0
        %v2271 = vperm.slane %v2259, 1
        %v2272 = vperm.slane %v2259, 2
        %v2273 = vperm.slane %v2259, 3
        %v2274 = vperm.slane %v2259, 4
        %v2275 = vperm.slane %v2259, 5
        %v2276 = vperm.slane %v2259, 6
        %v2277 = vperm.slane %v2259, 7
        %v2326 = vunpack.c.l.b16 %v2226
        %v2327 = vunpack.c.h.b16 %v2226
        %v2328 = vunpack.c.l.b16 %v2227
        %v2329 = vunpack.c.h.b16 %v2227
        %v2330 = vunpack.c.l.b16 %v2228
        %v2331 = vunpack.c.h.b16 %v2228
        %v2332 = vunpack.c.l.b16 %v2229
        %v2333 = vunpack.c.h.b16 %v2229
        %v2334 = vunpack.c.l.b16 %v2230
        %v2335 = vunpack.c.h.b16 %v2230
        %v2336 = vunpack.c.l.b16 %v2231
        %v2337 = vunpack.c.h.b16 %v2231
        %v2338 = vunpack.c.l.b16 %v2232
        %v2339 = vunpack.c.h.b16 %v2232
        %v2340 = vunpack.c.l.b16 %v2233
        %v2341 = vunpack.c.h.b16 %v2233
        %v2342 = vunpack.c.l.b16 %v2234
        %v2343 = vunpack.c.h.b16 %v2234
        %v2344 = vunpack.c.l.b16 %v2235
        %v2345 = vunpack.c.h.b16 %v2235
        %v2346 = vunpack.c.l.b16 %v2236
        %v2347 = vunpack.c.h.b16 %v2236
        %v2348 = vunpack.c.l.b16 %v2237
        %v2349 = vunpack.c.h.b16 %v2237
        %v2350 = vunpack.c.l.b16 %v2238
        %v2351 = vunpack.c.h.b16 %v2238
        %v2352 = vunpack.c.l.b16 %v2239
        %v2353 = vunpack.c.h.b16 %v2239
        %v2354 = vunpack.c.l.b16 %v2240
        %v2355 = vunpack.c.h.b16 %v2240
        %v2356 = vunpack.c.l.b16 %v2241
        %v2357 = vunpack.c.h.b16 %v2241
        %v2358 = vunpack.c.l.b16 %v2242
        %v2359 = vunpack.c.h.b16 %v2242
        %v2360 = vunpack.c.l.b16 %v2243
        %v2361 = vunpack.c.h.b16 %v2243
        %v2362 = vunpack.c.l.b16 %v2244
        %v2363 = vunpack.c.h.b16 %v2244
        %v2364 = vunpack.c.l.b16 %v2245
        %v2365 = vunpack.c.h.b16 %v2245
        %v2366 = vunpack.c.l.b16 %v2246
        %v2367 = vunpack.c.h.b16 %v2246
        %v2368 = vunpack.c.l.b16 %v2247
        %v2369 = vunpack.c.h.b16 %v2247
        %v2370 = vunpack.c.l.b16 %v2248
        %v2371 = vunpack.c.h.b16 %v2248
        %v2372 = vunpack.c.l.b16 %v2249
        %v2373 = vunpack.c.h.b16 %v2249
        %v2374 = vunpack.c.l.b16 %v2250
        %v2375 = vunpack.c.h.b16 %v2250
        %v2376 = vunpack.c.l.b16 %v2251
        %v2377 = vunpack.c.h.b16 %v2251
        %v2378 = vunpack.c.l.b16 %v2252
        %v2379 = vunpack.c.h.b16 %v2252
        %v2380 = vunpack.c.l.b16 %v2253
        %v2381 = vunpack.c.h.b16 %v2253
        %v2382 = vunpack.c.l.b16 %v2254
        %v2383 = vunpack.c.h.b16 %v2254
        %v2384 = vunpack.c.l.b16 %v2255
        %v2385 = vunpack.c.h.b16 %v2255
        %v2386 = vunpack.c.l.b16 %v2256
        %v2387 = vunpack.c.h.b16 %v2256
        %v2388 = vunpack.c.l.b16 %v2257
        %v2389 = vunpack.c.h.b16 %v2257
        %v2390 = vpack.c.b16 %v2342, %v2326
        %v2391 = vpack.c.b16 %v2343, %v2327
        %v2392 = vpack.c.b16 %v2344, %v2328
        %v2393 = vpack.c.b16 %v2345, %v2329
        %v2394 = vpack.c.b16 %v2346, %v2330
        %v2395 = vpack.c.b16 %v2347, %v2331
        %v2396 = vpack.c.b16 %v2348, %v2332
        %v2397 = vpack.c.b16 %v2349, %v2333
        %v2398 = vpack.c.b16 %v2350, %v2334
        %v2399 = vpack.c.b16 %v2351, %v2335
        %v2400 = vpack.c.b16 %v2352, %v2336
        %v2401 = vpack.c.b16 %v2353, %v2337
        %v2402 = vpack.c.b16 %v2354, %v2338
        %v2403 = vpack.c.b16 %v2355, %v2339
        %v2404 = vpack.c.b16 %v2356, %v2340
        %v2405 = vpack.c.b16 %v2357, %v2341
        %v2406 = vpack.c.b16 %v2374, %v2358
        %v2407 = vpack.c.b16 %v2375, %v2359
        %v2408 = vpack.c.b16 %v2376, %v2360
        %v2409 = vpack.c.b16 %v2377, %v2361
        %v2410 = vpack.c.b16 %v2378, %v2362
        %v2411 = vpack.c.b16 %v2379, %v2363
        %v2412 = vpack.c.b16 %v2380, %v2364
        %v2413 = vpack.c.b16 %v2381, %v2365
        %v2414 = vpack.c.b16 %v2382, %v2366
        %v2415 = vpack.c.b16 %v2383, %v2367
        %v2416 = vpack.c.b16 %v2384, %v2368
        %v2417 = vpack.c.b16 %v2385, %v2369
        %v2418 = vpack.c.b16 %v2386, %v2370
        %v2419 = vpack.c.b16 %v2387, %v2371
        %v2420 = vpack.c.b16 %v2388, %v2372
        %v2421 = vpack.c.b16 %v2389, %v2373
        %v2455 = vsel %vm778, %v2225, 0
        %2457 = vmatpush.bf16.msra.mxu0 0
        %2458 = vmatpush.bf16.msra.mxu0 0
        %2459 = vmatpush.bf16.msra.mxu0 0
        %2460 = vmatpush.bf16.msra.mxu0 0
        %2461 = vmatpush.bf16.msra.mxu0 0
        %2462 = vmatpush.bf16.msra.mxu0 0
        %2463 = vmatpush.bf16.msra.mxu0 %v2406
        %2464 = vmatpush.bf16.msra.mxu0 %v2390
        %2465 = vmatmul.bf16.gmra.mxu0 %v2455
        %v2466 = vpop.f32.mrf.mxu0
        %v2467 = vadd.f32 %v2262, %v2466
        %v2468 = vpop.f32.mrf.mxu0
        %2469 = vdwg.mxu0
        %2470 = vmatpush.bf16.msra.mxu0 0
        %2471 = vmatpush.bf16.msra.mxu0 0
        %2472 = vmatpush.bf16.msra.mxu0 0
        %2473 = vmatpush.bf16.msra.mxu0 0
        %2474 = vmatpush.bf16.msra.mxu0 0
        %2475 = vmatpush.bf16.msra.mxu0 0
        %2476 = vmatpush.bf16.msra.mxu0 %v2407
        %2477 = vmatpush.bf16.msra.mxu0 %v2391
        %2478 = vmatmul.bf16.gmra.mxu0 %v2455
        %v2479 = vpop.f32.mrf.mxu0
        %v2480 = vadd.f32 %v2263, %v2479
        %v2481 = vpop.f32.mrf.mxu0
        %2482 = vdwg.mxu0
        %2483 = vmatpush.bf16.msra.mxu0 0
        %2484 = vmatpush.bf16.msra.mxu0 0
        %2485 = vmatpush.bf16.msra.mxu0 0
        %2486 = vmatpush.bf16.msra.mxu0 0
        %2487 = vmatpush.bf16.msra.mxu0 0
        %2488 = vmatpush.bf16.msra.mxu0 0
        %2489 = vmatpush.bf16.msra.mxu0 %v2408
        %2490 = vmatpush.bf16.msra.mxu0 %v2392
        %2491 = vmatmul.bf16.gmra.mxu0 %v2455
        %v2492 = vpop.f32.mrf.mxu0
        %v2493 = vadd.f32 %v2264, %v2492
        %v2494 = vpop.f32.mrf.mxu0
        %2495 = vdwg.mxu0
        %2496 = vmatpush.bf16.msra.mxu0 0
        %2497 = vmatpush.bf16.msra.mxu0 0
        %2498 = vmatpush.bf16.msra.mxu0 0
        %2499 = vmatpush.bf16.msra.mxu0 0
        %2500 = vmatpush.bf16.msra.mxu0 0
        %2501 = vmatpush.bf16.msra.mxu0 0
        %2502 = vmatpush.bf16.msra.mxu0 %v2409
        %2503 = vmatpush.bf16.msra.mxu0 %v2393
        %2504 = vmatmul.bf16.gmra.mxu0 %v2455
        %v2505 = vpop.f32.mrf.mxu0
        %v2506 = vadd.f32 %v2265, %v2505
        %v2507 = vpop.f32.mrf.mxu0
        %2508 = vdwg.mxu0
        %2509 = vmatpush.bf16.msra.mxu0 0
        %2510 = vmatpush.bf16.msra.mxu0 0
        %2511 = vmatpush.bf16.msra.mxu0 0
        %2512 = vmatpush.bf16.msra.mxu0 0
        %2513 = vmatpush.bf16.msra.mxu0 0
        %2514 = vmatpush.bf16.msra.mxu0 0
        %2515 = vmatpush.bf16.msra.mxu0 %v2410
        %2516 = vmatpush.bf16.msra.mxu0 %v2394
        %2517 = vmatmul.bf16.gmra.mxu0 %v2455
        %v2518 = vpop.f32.mrf.mxu0
        %v2519 = vadd.f32 %v2266, %v2518
        %v2520 = vpop.f32.mrf.mxu0
        %2521 = vdwg.mxu0
        %2522 = vmatpush.bf16.msra.mxu0 0
        %2523 = vmatpush.bf16.msra.mxu0 0
        %2524 = vmatpush.bf16.msra.mxu0 0
        %2525 = vmatpush.bf16.msra.mxu0 0
        %2526 = vmatpush.bf16.msra.mxu0 0
        %2527 = vmatpush.bf16.msra.mxu0 0
        %2528 = vmatpush.bf16.msra.mxu0 %v2411
        %2529 = vmatpush.bf16.msra.mxu0 %v2395
        %2530 = vmatmul.bf16.gmra.mxu0 %v2455
        %v2531 = vpop.f32.mrf.mxu0
        %v2532 = vadd.f32 %v2267, %v2531
        %v2533 = vpop.f32.mrf.mxu0
        %2534 = vdwg.mxu0
        %2535 = vmatpush.bf16.msra.mxu0 0
        %2536 = vmatpush.bf16.msra.mxu0 0
        %2537 = vmatpush.bf16.msra.mxu0 0
        %2538 = vmatpush.bf16.msra.mxu0 0
        %2539 = vmatpush.bf16.msra.mxu0 0
        %2540 = vmatpush.bf16.msra.mxu0 0
        %2541 = vmatpush.bf16.msra.mxu0 %v2412
        %2542 = vmatpush.bf16.msra.mxu0 %v2396
        %2543 = vmatmul.bf16.gmra.mxu0 %v2455
        %v2544 = vpop.f32.mrf.mxu0
        %v2545 = vadd.f32 %v2268, %v2544
        %v2546 = vpop.f32.mrf.mxu0
        %2547 = vdwg.mxu0
        %2548 = vmatpush.bf16.msra.mxu0 0
        %2549 = vmatpush.bf16.msra.mxu0 0
        %2550 = vmatpush.bf16.msra.mxu0 0
        %2551 = vmatpush.bf16.msra.mxu0 0
        %2552 = vmatpush.bf16.msra.mxu0 0
        %2553 = vmatpush.bf16.msra.mxu0 0
        %2554 = vmatpush.bf16.msra.mxu0 %v2413
        %2555 = vmatpush.bf16.msra.mxu0 %v2397
        %2556 = vmatmul.bf16.gmra.mxu0 %v2455
        %v2557 = vpop.f32.mrf.mxu0
        %v2558 = vadd.f32 %v2269, %v2557
        %v2559 = vpop.f32.mrf.mxu0
        %2560 = vdwg.mxu0
        %2561 = vmatpush.bf16.msra.mxu0 0
        %2562 = vmatpush.bf16.msra.mxu0 0
        %2563 = vmatpush.bf16.msra.mxu0 0
        %2564 = vmatpush.bf16.msra.mxu0 0
        %2565 = vmatpush.bf16.msra.mxu0 0
        %2566 = vmatpush.bf16.msra.mxu0 0
        %2567 = vmatpush.bf16.msra.mxu0 %v2414
        %2568 = vmatpush.bf16.msra.mxu0 %v2398
        %2569 = vmatmul.bf16.gmra.mxu0 %v2455
        %v2570 = vpop.f32.mrf.mxu0
        %v2571 = vadd.f32 %v2270, %v2570
        %v2572 = vpop.f32.mrf.mxu0
        %2573 = vdwg.mxu0
        %2574 = vmatpush.bf16.msra.mxu0 0
        %2575 = vmatpush.bf16.msra.mxu0 0
        %2576 = vmatpush.bf16.msra.mxu0 0
        %2577 = vmatpush.bf16.msra.mxu0 0
        %2578 = vmatpush.bf16.msra.mxu0 0
        %2579 = vmatpush.bf16.msra.mxu0 0
        %2580 = vmatpush.bf16.msra.mxu0 %v2415
        %2581 = vmatpush.bf16.msra.mxu0 %v2399
        %2582 = vmatmul.bf16.gmra.mxu0 %v2455
        %v2583 = vpop.f32.mrf.mxu0
        %v2584 = vadd.f32 %v2271, %v2583
        %v2585 = vpop.f32.mrf.mxu0
        %2586 = vdwg.mxu0
        %2587 = vmatpush.bf16.msra.mxu0 0
        %2588 = vmatpush.bf16.msra.mxu0 0
        %2589 = vmatpush.bf16.msra.mxu0 0
        %2590 = vmatpush.bf16.msra.mxu0 0
        %2591 = vmatpush.bf16.msra.mxu0 0
        %2592 = vmatpush.bf16.msra.mxu0 0
        %2593 = vmatpush.bf16.msra.mxu0 %v2416
        %2594 = vmatpush.bf16.msra.mxu0 %v2400
        %2595 = vmatmul.bf16.gmra.mxu0 %v2455
        %v2596 = vpop.f32.mrf.mxu0
        %v2597 = vadd.f32 %v2272, %v2596
        %v2598 = vpop.f32.mrf.mxu0
        %2599 = vdwg.mxu0
        %2600 = vmatpush.bf16.msra.mxu0 0
        %2601 = vmatpush.bf16.msra.mxu0 0
        %2602 = vmatpush.bf16.msra.mxu0 0
        %2603 = vmatpush.bf16.msra.mxu0 0
        %2604 = vmatpush.bf16.msra.mxu0 0
        %2605 = vmatpush.bf16.msra.mxu0 0
        %2606 = vmatpush.bf16.msra.mxu0 %v2417
        %2607 = vmatpush.bf16.msra.mxu0 %v2401
        %2608 = vmatmul.bf16.gmra.mxu0 %v2455
        %v2609 = vpop.f32.mrf.mxu0
        %v2610 = vadd.f32 %v2273, %v2609
        %v2611 = vpop.f32.mrf.mxu0
        %2612 = vdwg.mxu0
        %2613 = vmatpush.bf16.msra.mxu0 0
        %2614 = vmatpush.bf16.msra.mxu0 0
        %2615 = vmatpush.bf16.msra.mxu0 0
        %2616 = vmatpush.bf16.msra.mxu0 0
        %2617 = vmatpush.bf16.msra.mxu0 0
        %2618 = vmatpush.bf16.msra.mxu0 0
        %2619 = vmatpush.bf16.msra.mxu0 %v2418
        %2620 = vmatpush.bf16.msra.mxu0 %v2402
        %2621 = vmatmul.bf16.gmra.mxu0 %v2455
        %v2622 = vpop.f32.mrf.mxu0
        %v2623 = vadd.f32 %v2274, %v2622
        %v2624 = vpop.f32.mrf.mxu0
        %2625 = vdwg.mxu0
        %2626 = vmatpush.bf16.msra.mxu0 0
        %2627 = vmatpush.bf16.msra.mxu0 0
        %2628 = vmatpush.bf16.msra.mxu0 0
        %2629 = vmatpush.bf16.msra.mxu0 0
        %2630 = vmatpush.bf16.msra.mxu0 0
        %2631 = vmatpush.bf16.msra.mxu0 0
        %2632 = vmatpush.bf16.msra.mxu0 %v2419
        %2633 = vmatpush.bf16.msra.mxu0 %v2403
        %2634 = vmatmul.bf16.gmra.mxu0 %v2455
        %v2635 = vpop.f32.mrf.mxu0
        %v2636 = vadd.f32 %v2275, %v2635
        %v2637 = vpop.f32.mrf.mxu0
        %2638 = vdwg.mxu0
        %2639 = vmatpush.bf16.msra.mxu0 0
        %2640 = vmatpush.bf16.msra.mxu0 0
        %2641 = vmatpush.bf16.msra.mxu0 0
        %2642 = vmatpush.bf16.msra.mxu0 0
        %2643 = vmatpush.bf16.msra.mxu0 0
        %2644 = vmatpush.bf16.msra.mxu0 0
        %2645 = vmatpush.bf16.msra.mxu0 %v2420
        %2646 = vmatpush.bf16.msra.mxu0 %v2404
        %2647 = vmatmul.bf16.gmra.mxu0 %v2455
        %v2648 = vpop.f32.mrf.mxu0
        %v2649 = vadd.f32 %v2276, %v2648
        %v2650 = vpop.f32.mrf.mxu0
        %2651 = vdwg.mxu0
        %2652 = vmatpush.bf16.msra.mxu0 0
        %2653 = vmatpush.bf16.msra.mxu0 0
        %2654 = vmatpush.bf16.msra.mxu0 0
        %2655 = vmatpush.bf16.msra.mxu0 0
        %2656 = vmatpush.bf16.msra.mxu0 0
        %2657 = vmatpush.bf16.msra.mxu0 0
        %2658 = vmatpush.bf16.msra.mxu0 %v2421
        %2659 = vmatpush.bf16.msra.mxu0 %v2405
        %2660 = vmatmul.bf16.gmra.mxu0 %v2455
        %v2661 = vpop.f32.mrf.mxu0
        %v2662 = vadd.f32 %v2277, %v2661
        %v2663 = vpop.f32.mrf.mxu0
        %2664 = vdwg.mxu0
        %v2665 = vmax.f32 %v2467, 0.0
        %v2666 = vmax.f32 %v2480, 0.0
        %v2667 = vmax.f32 %v2493, 0.0
        %v2668 = vmax.f32 %v2506, 0.0
        %v2669 = vmax.f32 %v2519, 0.0
        %v2670 = vmax.f32 %v2532, 0.0
        %v2671 = vmax.f32 %v2545, 0.0
        %v2672 = vmax.f32 %v2558, 0.0
        %v2673 = vmax.f32 %v2571, 0.0
        %v2674 = vmax.f32 %v2584, 0.0
        %v2675 = vmax.f32 %v2597, 0.0
        %v2676 = vmax.f32 %v2610, 0.0
        %v2677 = vmax.f32 %v2623, 0.0
        %v2678 = vmax.f32 %v2636, 0.0
        %v2679 = vmax.f32 %v2649, 0.0
        %v2680 = vmax.f32 %v2662, 0.0
        %v2681 = vpack.c.bf16 %v2665, %v2665
        %v2682 = vpack.c.bf16 %v2666, %v2666
        %v2683 = vpack.c.bf16 %v2667, %v2667
        %v2684 = vpack.c.bf16 %v2668, %v2668
        %v2685 = vpack.c.bf16 %v2669, %v2669
        %v2686 = vpack.c.bf16 %v2670, %v2670
        %v2687 = vpack.c.bf16 %v2671, %v2671
        %v2688 = vpack.c.bf16 %v2672, %v2672
        %v2689 = vpack.c.bf16 %v2673, %v2673
        %v2690 = vpack.c.bf16 %v2674, %v2674
        %v2691 = vpack.c.bf16 %v2675, %v2675
        %v2692 = vpack.c.bf16 %v2676, %v2676
        %v2693 = vpack.c.bf16 %v2677, %v2677
        %v2694 = vpack.c.bf16 %v2678, %v2678
        %v2695 = vpack.c.bf16 %v2679, %v2679
        %v2696 = vpack.c.bf16 %v2680, %v2680
        %v2697 = vld [vmem:[%s16] sm:$0xf]
        %v2698 = vld [vmem:[%s16 + $0x4] sm:$0xf]
        %v2699 = vld [vmem:[%s16 + $0x8] sm:$0xf]
        %v2700 = vld [vmem:[%s16 + $0xc] sm:$0xf]
        %v2701 = vld [vmem:[%s16 + $0x10] sm:$0xf]
        %v2702 = vld [vmem:[%s16 + $0x14] sm:$0xf]
        %v2703 = vld [vmem:[%s16 + $0x18] sm:$0xf]
        %v2704 = vld [vmem:[%s16 + $0x1c] sm:$0xf]
        %v2705 = vld [vmem:[%s16 + $0x20] sm:$0xf]
        %v2706 = vld [vmem:[%s16 + $0x24] sm:$0xf]
        %v2707 = vld [vmem:[%s16 + $0x28] sm:$0xf]
        %v2708 = vld [vmem:[%s16 + $0x2c] sm:$0xf]
        %v2709 = vld [vmem:[%s16 + $0x30] sm:$0xf]
        %v2710 = vld [vmem:[%s16 + $0x34] sm:$0xf]
        %v2711 = vld [vmem:[%s16 + $0x38] sm:$0xf]
        %v2712 = vld [vmem:[%s16 + $0x3c] sm:$0xf]
        %v2713 = vld [vmem:[%s16 + $0x40] sm:$0xf]
        %v2714 = vld [vmem:[%s16 + $0x44] sm:$0xf]
        %v2715 = vld [vmem:[%s16 + $0x48] sm:$0xf]
        %v2716 = vld [vmem:[%s16 + $0x4c] sm:$0xf]
        %v2717 = vld [vmem:[%s16 + $0x50] sm:$0xf]
        %v2718 = vld [vmem:[%s16 + $0x54] sm:$0xf]
        %v2719 = vld [vmem:[%s16 + $0x58] sm:$0xf]
        %v2720 = vld [vmem:[%s16 + $0x5c] sm:$0xf]
        %v2721 = vld [vmem:[%s16 + $0x60] sm:$0xf]
        %v2722 = vld [vmem:[%s16 + $0x64] sm:$0xf]
        %v2723 = vld [vmem:[%s16 + $0x68] sm:$0xf]
        %v2724 = vld [vmem:[%s16 + $0x6c] sm:$0xf]
        %v2725 = vld [vmem:[%s16 + $0x70] sm:$0xf]
        %v2726 = vld [vmem:[%s16 + $0x74] sm:$0xf]
        %v2727 = vld [vmem:[%s16 + $0x78] sm:$0xf]
        %v2728 = vld [vmem:[%s16 + $0x7c] sm:$0xf]
        %v2729 = vld [vmem:[%s16 + $0x80] sm:$0xf]
        %v2730 = vld [vmem:[%s16 + $0x84] sm:$0xf]
        %v2731 = vld [vmem:[%s16 + $0x88] sm:$0xf]
        %v2732 = vld [vmem:[%s16 + $0x8c] sm:$0xf]
        %v2733 = vld [vmem:[%s16 + $0x90] sm:$0xf]
        %v2734 = vld [vmem:[%s16 + $0x94] sm:$0xf]
        %v2735 = vld [vmem:[%s16 + $0x98] sm:$0xf]
        %v2736 = vld [vmem:[%s16 + $0x9c] sm:$0xf]
        %v2737 = vld [vmem:[%s16 + $0xa0] sm:$0xf]
        %v2738 = vld [vmem:[%s16 + $0xa4] sm:$0xf]
        %v2739 = vld [vmem:[%s16 + $0xa8] sm:$0xf]
        %v2740 = vld [vmem:[%s16 + $0xac] sm:$0xf]
        %v2741 = vld [vmem:[%s16 + $0xb0] sm:$0xf]
        %v2742 = vld [vmem:[%s16 + $0xb4] sm:$0xf]
        %v2743 = vld [vmem:[%s16 + $0xb8] sm:$0xf]
        %v2744 = vld [vmem:[%s16 + $0xbc] sm:$0xf]
        %v2745 = vld [vmem:[%s16 + $0xc0] sm:$0xf]
        %v2746 = vld [vmem:[%s16 + $0xc4] sm:$0xf]
        %v2747 = vld [vmem:[%s16 + $0xc8] sm:$0xf]
        %v2748 = vld [vmem:[%s16 + $0xcc] sm:$0xf]
        %v2749 = vld [vmem:[%s16 + $0xd0] sm:$0xf]
        %v2750 = vld [vmem:[%s16 + $0xd4] sm:$0xf]
        %v2751 = vld [vmem:[%s16 + $0xd8] sm:$0xf]
        %v2752 = vld [vmem:[%s16 + $0xdc] sm:$0xf]
        %v2753 = vld [vmem:[%s16 + $0xe0] sm:$0xf]
        %v2754 = vld [vmem:[%s16 + $0xe4] sm:$0xf]
        %v2755 = vld [vmem:[%s16 + $0xe8] sm:$0xf]
        %v2756 = vld [vmem:[%s16 + $0xec] sm:$0xf]
        %v2757 = vld [vmem:[%s16 + $0xf0] sm:$0xf]
        %v2758 = vld [vmem:[%s16 + $0xf4] sm:$0xf]
        %v2759 = vld [vmem:[%s16 + $0xf8] sm:$0xf]
        %v2760 = vld [vmem:[%s16 + $0xfc] sm:$0xf]
        %v2761 = vld [vmem:[%s16 + $0x100] sm:$0xf]
        %v2762 = vld [vmem:[%s16 + $0x104] sm:$0xf]
        %v2763 = vld [vmem:[%s16 + $0x108] sm:$0xf]
        %v2764 = vld [vmem:[%s16 + $0x10c] sm:$0xf]
        %v2765 = vld [vmem:[%s16 + $0x110] sm:$0xf]
        %v2766 = vld [vmem:[%s16 + $0x114] sm:$0xf]
        %v2767 = vld [vmem:[%s16 + $0x118] sm:$0xf]
        %v2768 = vld [vmem:[%s16 + $0x11c] sm:$0xf]
        %v2769 = vld [vmem:[%s16 + $0x120] sm:$0xf]
        %v2770 = vld [vmem:[%s16 + $0x124] sm:$0xf]
        %v2771 = vld [vmem:[%s16 + $0x128] sm:$0xf]
        %v2772 = vld [vmem:[%s16 + $0x12c] sm:$0xf]
        %v2773 = vld [vmem:[%s16 + $0x130] sm:$0xf]
        %v2774 = vld [vmem:[%s16 + $0x134] sm:$0xf]
        %v2775 = vld [vmem:[%s16 + $0x138] sm:$0xf]
        %v2776 = vld [vmem:[%s16 + $0x13c] sm:$0xf]
        %v2777 = vld [vmem:[%s16 + $0x140] sm:$0xf]
        %v2778 = vld [vmem:[%s16 + $0x144] sm:$0xf]
        %v2779 = vld [vmem:[%s16 + $0x148] sm:$0xf]
        %v2780 = vld [vmem:[%s16 + $0x14c] sm:$0xf]
        %v2781 = vld [vmem:[%s16 + $0x150] sm:$0xf]
        %v2782 = vld [vmem:[%s16 + $0x154] sm:$0xf]
        %v2783 = vld [vmem:[%s16 + $0x158] sm:$0xf]
        %v2784 = vld [vmem:[%s16 + $0x15c] sm:$0xf]
        %v2785 = vld [vmem:[%s16 + $0x160] sm:$0xf]
        %v2786 = vld [vmem:[%s16 + $0x164] sm:$0xf]
        %v2787 = vld [vmem:[%s16 + $0x168] sm:$0xf]
        %v2788 = vld [vmem:[%s16 + $0x16c] sm:$0xf]
        %v2789 = vld [vmem:[%s16 + $0x170] sm:$0xf]
        %v2790 = vld [vmem:[%s16 + $0x174] sm:$0xf]
        %v2791 = vld [vmem:[%s16 + $0x178] sm:$0xf]
        %v2792 = vld [vmem:[%s16 + $0x17c] sm:$0xf]
        %v2793 = vld [vmem:[%s16 + $0x180] sm:$0xf]
        %v2794 = vld [vmem:[%s16 + $0x184] sm:$0xf]
        %v2795 = vld [vmem:[%s16 + $0x188] sm:$0xf]
        %v2796 = vld [vmem:[%s16 + $0x18c] sm:$0xf]
        %v2797 = vld [vmem:[%s16 + $0x190] sm:$0xf]
        %v2798 = vld [vmem:[%s16 + $0x194] sm:$0xf]
        %v2799 = vld [vmem:[%s16 + $0x198] sm:$0xf]
        %v2800 = vld [vmem:[%s16 + $0x19c] sm:$0xf]
        %v2801 = vld [vmem:[%s16 + $0x1a0] sm:$0xf]
        %v2802 = vld [vmem:[%s16 + $0x1a4] sm:$0xf]
        %v2803 = vld [vmem:[%s16 + $0x1a8] sm:$0xf]
        %v2804 = vld [vmem:[%s16 + $0x1ac] sm:$0xf]
        %v2805 = vld [vmem:[%s16 + $0x1b0] sm:$0xf]
        %v2806 = vld [vmem:[%s16 + $0x1b4] sm:$0xf]
        %v2807 = vld [vmem:[%s16 + $0x1b8] sm:$0xf]
        %v2808 = vld [vmem:[%s16 + $0x1bc] sm:$0xf]
        %v2809 = vld [vmem:[%s16 + $0x1c0] sm:$0xf]
        %v2810 = vld [vmem:[%s16 + $0x1c4] sm:$0xf]
        %v2811 = vld [vmem:[%s16 + $0x1c8] sm:$0xf]
        %v2812 = vld [vmem:[%s16 + $0x1cc] sm:$0xf]
        %v2813 = vld [vmem:[%s16 + $0x1d0] sm:$0xf]
        %v2814 = vld [vmem:[%s16 + $0x1d4] sm:$0xf]
        %v2815 = vld [vmem:[%s16 + $0x1d8] sm:$0xf]
        %v2816 = vld [vmem:[%s16 + $0x1dc] sm:$0xf]
        %v2817 = vld [vmem:[%s16 + $0x1e0] sm:$0xf]
        %v2818 = vld [vmem:[%s16 + $0x1e4] sm:$0xf]
        %v2819 = vld [vmem:[%s16 + $0x1e8] sm:$0xf]
        %v2820 = vld [vmem:[%s16 + $0x1ec] sm:$0xf]
        %v2821 = vld [vmem:[%s16 + $0x1f0] sm:$0xf]
        %v2822 = vld [vmem:[%s16 + $0x1f4] sm:$0xf]
        %v2823 = vld [vmem:[%s16 + $0x1f8] sm:$0xf]
        %v2824 = vld [vmem:[%s16 + $0x1fc] sm:$0xf]
        %v2825 = vld [vmem:[%s16 + $0x200] sm:$0xf]
        %v2826 = vld [vmem:[%s16 + $0x204] sm:$0xf]
        %v2827 = vld [vmem:[%s16 + $0x208] sm:$0xf]
        %v2828 = vld [vmem:[%s16 + $0x20c] sm:$0xf]
        %v2829 = vld [vmem:[%s16 + $0x210] sm:$0xf]
        %v2830 = vld [vmem:[%s16 + $0x214] sm:$0xf]
        %v2831 = vld [vmem:[%s16 + $0x218] sm:$0xf]
        %v2832 = vld [vmem:[%s16 + $0x21c] sm:$0xf]
        %v2833 = vld [vmem:[%s16 + $0x220] sm:$0xf]
        %v2834 = vld [vmem:[%s16 + $0x224] sm:$0xf]
        %v2835 = vld [vmem:[%s16 + $0x228] sm:$0xf]
        %v2836 = vld [vmem:[%s16 + $0x22c] sm:$0xf]
        %v2837 = vld [vmem:[%s16 + $0x230] sm:$0xf]
        %v2838 = vld [vmem:[%s16 + $0x234] sm:$0xf]
        %v2839 = vld [vmem:[%s16 + $0x238] sm:$0xf]
        %v2840 = vld [vmem:[%s16 + $0x23c] sm:$0xf]
        %v2841 = vld [vmem:[%s16 + $0x240] sm:$0xf]
        %v2842 = vld [vmem:[%s16 + $0x244] sm:$0xf]
        %v2843 = vld [vmem:[%s16 + $0x248] sm:$0xf]
        %v2844 = vld [vmem:[%s16 + $0x24c] sm:$0xf]
        %v2845 = vld [vmem:[%s16 + $0x250] sm:$0xf]
        %v2846 = vld [vmem:[%s16 + $0x254] sm:$0xf]
        %v2847 = vld [vmem:[%s16 + $0x258] sm:$0xf]
        %v2848 = vld [vmem:[%s16 + $0x25c] sm:$0xf]
        %v2849 = vld [vmem:[%s16 + $0x260] sm:$0xf]
        %v2850 = vld [vmem:[%s16 + $0x264] sm:$0xf]
        %v2851 = vld [vmem:[%s16 + $0x268] sm:$0xf]
        %v2852 = vld [vmem:[%s16 + $0x26c] sm:$0xf]
        %v2853 = vld [vmem:[%s16 + $0x270] sm:$0xf]
        %v2854 = vld [vmem:[%s16 + $0x274] sm:$0xf]
        %v2855 = vld [vmem:[%s16 + $0x278] sm:$0xf]
        %v2856 = vld [vmem:[%s16 + $0x27c] sm:$0xf]
        %v2857 = vld [vmem:[%s16 + $0x280] sm:$0xf]
        %v2858 = vld [vmem:[%s16 + $0x284] sm:$0xf]
        %v2859 = vld [vmem:[%s16 + $0x288] sm:$0xf]
        %v2860 = vld [vmem:[%s16 + $0x28c] sm:$0xf]
        %v2861 = vld [vmem:[%s16 + $0x290] sm:$0xf]
        %v2862 = vld [vmem:[%s16 + $0x294] sm:$0xf]
        %v2863 = vld [vmem:[%s16 + $0x298] sm:$0xf]
        %v2864 = vld [vmem:[%s16 + $0x29c] sm:$0xf]
        %v2865 = vld [vmem:[%s16 + $0x2a0] sm:$0xf]
        %v2866 = vld [vmem:[%s16 + $0x2a4] sm:$0xf]
        %v2867 = vld [vmem:[%s16 + $0x2a8] sm:$0xf]
        %v2868 = vld [vmem:[%s16 + $0x2ac] sm:$0xf]
        %v2869 = vld [vmem:[%s16 + $0x2b0] sm:$0xf]
        %v2870 = vld [vmem:[%s16 + $0x2b4] sm:$0xf]
        %v2871 = vld [vmem:[%s16 + $0x2b8] sm:$0xf]
        %v2872 = vld [vmem:[%s16 + $0x2bc] sm:$0xf]
        %v2873 = vld [vmem:[%s16 + $0x2c0] sm:$0xf]
        %v2874 = vld [vmem:[%s16 + $0x2c4] sm:$0xf]
        %v2875 = vld [vmem:[%s16 + $0x2c8] sm:$0xf]
        %v2876 = vld [vmem:[%s16 + $0x2cc] sm:$0xf]
        %v2877 = vld [vmem:[%s16 + $0x2d0] sm:$0xf]
        %v2878 = vld [vmem:[%s16 + $0x2d4] sm:$0xf]
        %v2879 = vld [vmem:[%s16 + $0x2d8] sm:$0xf]
        %v2880 = vld [vmem:[%s16 + $0x2dc] sm:$0xf]
        %v2881 = vld [vmem:[%s16 + $0x2e0] sm:$0xf]
        %v2882 = vld [vmem:[%s16 + $0x2e4] sm:$0xf]
        %v2883 = vld [vmem:[%s16 + $0x2e8] sm:$0xf]
        %v2884 = vld [vmem:[%s16 + $0x2ec] sm:$0xf]
        %v2885 = vld [vmem:[%s16 + $0x2f0] sm:$0xf]
        %v2886 = vld [vmem:[%s16 + $0x2f4] sm:$0xf]
        %v2887 = vld [vmem:[%s16 + $0x2f8] sm:$0xf]
        %v2888 = vld [vmem:[%s16 + $0x2fc] sm:$0xf]
        %v2889 = vld [vmem:[%s16 + $0x300] sm:$0xf]
        %v2890 = vld [vmem:[%s16 + $0x304] sm:$0xf]
        %v2891 = vld [vmem:[%s16 + $0x308] sm:$0xf]
        %v2892 = vld [vmem:[%s16 + $0x30c] sm:$0xf]
        %v2893 = vld [vmem:[%s16 + $0x310] sm:$0xf]
        %v2894 = vld [vmem:[%s16 + $0x314] sm:$0xf]
        %v2895 = vld [vmem:[%s16 + $0x318] sm:$0xf]
        %v2896 = vld [vmem:[%s16 + $0x31c] sm:$0xf]
        %v2897 = vld [vmem:[%s16 + $0x320] sm:$0xf]
        %v2898 = vld [vmem:[%s16 + $0x324] sm:$0xf]
        %v2899 = vld [vmem:[%s16 + $0x328] sm:$0xf]
        %v2900 = vld [vmem:[%s16 + $0x32c] sm:$0xf]
        %v2901 = vld [vmem:[%s16 + $0x330] sm:$0xf]
        %v2902 = vld [vmem:[%s16 + $0x334] sm:$0xf]
        %v2903 = vld [vmem:[%s16 + $0x338] sm:$0xf]
        %v2904 = vld [vmem:[%s16 + $0x33c] sm:$0xf]
        %v2905 = vld [vmem:[%s16 + $0x340] sm:$0xf]
        %v2906 = vld [vmem:[%s16 + $0x344] sm:$0xf]
        %v2907 = vld [vmem:[%s16 + $0x348] sm:$0xf]
        %v2908 = vld [vmem:[%s16 + $0x34c] sm:$0xf]
        %v2909 = vld [vmem:[%s16 + $0x350] sm:$0xf]
        %v2910 = vld [vmem:[%s16 + $0x354] sm:$0xf]
        %v2911 = vld [vmem:[%s16 + $0x358] sm:$0xf]
        %v2912 = vld [vmem:[%s16 + $0x35c] sm:$0xf]
        %v2913 = vld [vmem:[%s16 + $0x360] sm:$0xf]
        %v2914 = vld [vmem:[%s16 + $0x364] sm:$0xf]
        %v2915 = vld [vmem:[%s16 + $0x368] sm:$0xf]
        %v2916 = vld [vmem:[%s16 + $0x36c] sm:$0xf]
        %v2917 = vld [vmem:[%s16 + $0x370] sm:$0xf]
        %v2918 = vld [vmem:[%s16 + $0x374] sm:$0xf]
        %v2919 = vld [vmem:[%s16 + $0x378] sm:$0xf]
        %v2920 = vld [vmem:[%s16 + $0x37c] sm:$0xf]
        %v2921 = vld [vmem:[%s16 + $0x380] sm:$0xf]
        %v2922 = vld [vmem:[%s16 + $0x384] sm:$0xf]
        %v2923 = vld [vmem:[%s16 + $0x388] sm:$0xf]
        %v2924 = vld [vmem:[%s16 + $0x38c] sm:$0xf]
        %v2925 = vld [vmem:[%s16 + $0x390] sm:$0xf]
        %v2926 = vld [vmem:[%s16 + $0x394] sm:$0xf]
        %v2927 = vld [vmem:[%s16 + $0x398] sm:$0xf]
        %v2928 = vld [vmem:[%s16 + $0x39c] sm:$0xf]
        %v2929 = vld [vmem:[%s16 + $0x3a0] sm:$0xf]
        %v2930 = vld [vmem:[%s16 + $0x3a4] sm:$0xf]
        %v2931 = vld [vmem:[%s16 + $0x3a8] sm:$0xf]
        %v2932 = vld [vmem:[%s16 + $0x3ac] sm:$0xf]
        %v2933 = vld [vmem:[%s16 + $0x3b0] sm:$0xf]
        %v2934 = vld [vmem:[%s16 + $0x3b4] sm:$0xf]
        %v2935 = vld [vmem:[%s16 + $0x3b8] sm:$0xf]
        %v2936 = vld [vmem:[%s16 + $0x3bc] sm:$0xf]
        %v2937 = vld [vmem:[%s16 + $0x3c0] sm:$0xf]
        %v2938 = vld [vmem:[%s16 + $0x3c4] sm:$0xf]
        %v2939 = vld [vmem:[%s16 + $0x3c8] sm:$0xf]
        %v2940 = vld [vmem:[%s16 + $0x3cc] sm:$0xf]
        %v2941 = vld [vmem:[%s16 + $0x3d0] sm:$0xf]
        %v2942 = vld [vmem:[%s16 + $0x3d4] sm:$0xf]
        %v2943 = vld [vmem:[%s16 + $0x3d8] sm:$0xf]
        %v2944 = vld [vmem:[%s16 + $0x3dc] sm:$0xf]
        %v2945 = vld [vmem:[%s16 + $0x3e0] sm:$0xf]
        %v2946 = vld [vmem:[%s16 + $0x3e4] sm:$0xf]
        %v2947 = vld [vmem:[%s16 + $0x3e8] sm:$0xf]
        %v2948 = vld [vmem:[%s16 + $0x3ec] sm:$0xf]
        %v2949 = vld [vmem:[%s16 + $0x3f0] sm:$0xf]
        %v2950 = vld [vmem:[%s16 + $0x3f4] sm:$0xf]
        %v2951 = vld [vmem:[%s16 + $0x3f8] sm:$0xf]
        %v2952 = vld [vmem:[%s16 + $0x3fc] sm:$0xf]
        %v2953 = vld [vmem:[%s17] sm:$0x1]
        %v2955 = vperm.slane %v2953, 0
        %v3213 = vunpack.c.l.b16 %v2697
        %v3214 = vunpack.c.l.b16 %v2698
        %v3215 = vunpack.c.l.b16 %v2699
        %v3216 = vunpack.c.l.b16 %v2700
        %v3217 = vunpack.c.l.b16 %v2701
        %v3218 = vunpack.c.l.b16 %v2702
        %v3219 = vunpack.c.l.b16 %v2703
        %v3220 = vunpack.c.l.b16 %v2704
        %v3221 = vunpack.c.l.b16 %v2705
        %v3222 = vunpack.c.l.b16 %v2706
        %v3223 = vunpack.c.l.b16 %v2707
        %v3224 = vunpack.c.l.b16 %v2708
        %v3225 = vunpack.c.l.b16 %v2709
        %v3226 = vunpack.c.l.b16 %v2710
        %v3227 = vunpack.c.l.b16 %v2711
        %v3228 = vunpack.c.l.b16 %v2712
        %v3229 = vunpack.c.l.b16 %v2713
        %v3230 = vunpack.c.l.b16 %v2714
        %v3231 = vunpack.c.l.b16 %v2715
        %v3232 = vunpack.c.l.b16 %v2716
        %v3233 = vunpack.c.l.b16 %v2717
        %v3234 = vunpack.c.l.b16 %v2718
        %v3235 = vunpack.c.l.b16 %v2719
        %v3236 = vunpack.c.l.b16 %v2720
        %v3237 = vunpack.c.l.b16 %v2721
        %v3238 = vunpack.c.l.b16 %v2722
        %v3239 = vunpack.c.l.b16 %v2723
        %v3240 = vunpack.c.l.b16 %v2724
        %v3241 = vunpack.c.l.b16 %v2725
        %v3242 = vunpack.c.l.b16 %v2726
        %v3243 = vunpack.c.l.b16 %v2727
        %v3244 = vunpack.c.l.b16 %v2728
        %v3245 = vunpack.c.l.b16 %v2729
        %v3246 = vunpack.c.l.b16 %v2730
        %v3247 = vunpack.c.l.b16 %v2731
        %v3248 = vunpack.c.l.b16 %v2732
        %v3249 = vunpack.c.l.b16 %v2733
        %v3250 = vunpack.c.l.b16 %v2734
        %v3251 = vunpack.c.l.b16 %v2735
        %v3252 = vunpack.c.l.b16 %v2736
        %v3253 = vunpack.c.l.b16 %v2737
        %v3254 = vunpack.c.l.b16 %v2738
        %v3255 = vunpack.c.l.b16 %v2739
        %v3256 = vunpack.c.l.b16 %v2740
        %v3257 = vunpack.c.l.b16 %v2741
        %v3258 = vunpack.c.l.b16 %v2742
        %v3259 = vunpack.c.l.b16 %v2743
        %v3260 = vunpack.c.l.b16 %v2744
        %v3261 = vunpack.c.l.b16 %v2745
        %v3262 = vunpack.c.l.b16 %v2746
        %v3263 = vunpack.c.l.b16 %v2747
        %v3264 = vunpack.c.l.b16 %v2748
        %v3265 = vunpack.c.l.b16 %v2749
        %v3266 = vunpack.c.l.b16 %v2750
        %v3267 = vunpack.c.l.b16 %v2751
        %v3268 = vunpack.c.l.b16 %v2752
        %v3269 = vunpack.c.l.b16 %v2753
        %v3270 = vunpack.c.l.b16 %v2754
        %v3271 = vunpack.c.l.b16 %v2755
        %v3272 = vunpack.c.l.b16 %v2756
        %v3273 = vunpack.c.l.b16 %v2757
        %v3274 = vunpack.c.l.b16 %v2758
        %v3275 = vunpack.c.l.b16 %v2759
        %v3276 = vunpack.c.l.b16 %v2760
        %v3277 = vunpack.c.l.b16 %v2761
        %v3278 = vunpack.c.l.b16 %v2762
        %v3279 = vunpack.c.l.b16 %v2763
        %v3280 = vunpack.c.l.b16 %v2764
        %v3281 = vunpack.c.l.b16 %v2765
        %v3282 = vunpack.c.l.b16 %v2766
        %v3283 = vunpack.c.l.b16 %v2767
        %v3284 = vunpack.c.l.b16 %v2768
        %v3285 = vunpack.c.l.b16 %v2769
        %v3286 = vunpack.c.l.b16 %v2770
        %v3287 = vunpack.c.l.b16 %v2771
        %v3288 = vunpack.c.l.b16 %v2772
        %v3289 = vunpack.c.l.b16 %v2773
        %v3290 = vunpack.c.l.b16 %v2774
        %v3291 = vunpack.c.l.b16 %v2775
        %v3292 = vunpack.c.l.b16 %v2776
        %v3293 = vunpack.c.l.b16 %v2777
        %v3294 = vunpack.c.l.b16 %v2778
        %v3295 = vunpack.c.l.b16 %v2779
        %v3296 = vunpack.c.l.b16 %v2780
        %v3297 = vunpack.c.l.b16 %v2781
        %v3298 = vunpack.c.l.b16 %v2782
        %v3299 = vunpack.c.l.b16 %v2783
        %v3300 = vunpack.c.l.b16 %v2784
        %v3301 = vunpack.c.l.b16 %v2785
        %v3302 = vunpack.c.l.b16 %v2786
        %v3303 = vunpack.c.l.b16 %v2787
        %v3304 = vunpack.c.l.b16 %v2788
        %v3305 = vunpack.c.l.b16 %v2789
        %v3306 = vunpack.c.l.b16 %v2790
        %v3307 = vunpack.c.l.b16 %v2791
        %v3308 = vunpack.c.l.b16 %v2792
        %v3309 = vunpack.c.l.b16 %v2793
        %v3310 = vunpack.c.l.b16 %v2794
        %v3311 = vunpack.c.l.b16 %v2795
        %v3312 = vunpack.c.l.b16 %v2796
        %v3313 = vunpack.c.l.b16 %v2797
        %v3314 = vunpack.c.l.b16 %v2798
        %v3315 = vunpack.c.l.b16 %v2799
        %v3316 = vunpack.c.l.b16 %v2800
        %v3317 = vunpack.c.l.b16 %v2801
        %v3318 = vunpack.c.l.b16 %v2802
        %v3319 = vunpack.c.l.b16 %v2803
        %v3320 = vunpack.c.l.b16 %v2804
        %v3321 = vunpack.c.l.b16 %v2805
        %v3322 = vunpack.c.l.b16 %v2806
        %v3323 = vunpack.c.l.b16 %v2807
        %v3324 = vunpack.c.l.b16 %v2808
        %v3325 = vunpack.c.l.b16 %v2809
        %v3326 = vunpack.c.l.b16 %v2810
        %v3327 = vunpack.c.l.b16 %v2811
        %v3328 = vunpack.c.l.b16 %v2812
        %v3329 = vunpack.c.l.b16 %v2813
        %v3330 = vunpack.c.l.b16 %v2814
        %v3331 = vunpack.c.l.b16 %v2815
        %v3332 = vunpack.c.l.b16 %v2816
        %v3333 = vunpack.c.l.b16 %v2817
        %v3334 = vunpack.c.l.b16 %v2818
        %v3335 = vunpack.c.l.b16 %v2819
        %v3336 = vunpack.c.l.b16 %v2820
        %v3337 = vunpack.c.l.b16 %v2821
        %v3338 = vunpack.c.l.b16 %v2822
        %v3339 = vunpack.c.l.b16 %v2823
        %v3340 = vunpack.c.l.b16 %v2824
        %v3341 = vunpack.c.l.b16 %v2825
        %v3342 = vunpack.c.l.b16 %v2826
        %v3343 = vunpack.c.l.b16 %v2827
        %v3344 = vunpack.c.l.b16 %v2828
        %v3345 = vunpack.c.l.b16 %v2829
        %v3346 = vunpack.c.l.b16 %v2830
        %v3347 = vunpack.c.l.b16 %v2831
        %v3348 = vunpack.c.l.b16 %v2832
        %v3349 = vunpack.c.l.b16 %v2833
        %v3350 = vunpack.c.l.b16 %v2834
        %v3351 = vunpack.c.l.b16 %v2835
        %v3352 = vunpack.c.l.b16 %v2836
        %v3353 = vunpack.c.l.b16 %v2837
        %v3354 = vunpack.c.l.b16 %v2838
        %v3355 = vunpack.c.l.b16 %v2839
        %v3356 = vunpack.c.l.b16 %v2840
        %v3357 = vunpack.c.l.b16 %v2841
        %v3358 = vunpack.c.l.b16 %v2842
        %v3359 = vunpack.c.l.b16 %v2843
        %v3360 = vunpack.c.l.b16 %v2844
        %v3361 = vunpack.c.l.b16 %v2845
        %v3362 = vunpack.c.l.b16 %v2846
        %v3363 = vunpack.c.l.b16 %v2847
        %v3364 = vunpack.c.l.b16 %v2848
        %v3365 = vunpack.c.l.b16 %v2849
        %v3366 = vunpack.c.l.b16 %v2850
        %v3367 = vunpack.c.l.b16 %v2851
        %v3368 = vunpack.c.l.b16 %v2852
        %v3369 = vunpack.c.l.b16 %v2853
        %v3370 = vunpack.c.l.b16 %v2854
        %v3371 = vunpack.c.l.b16 %v2855
        %v3372 = vunpack.c.l.b16 %v2856
        %v3373 = vunpack.c.l.b16 %v2857
        %v3374 = vunpack.c.l.b16 %v2858
        %v3375 = vunpack.c.l.b16 %v2859
        %v3376 = vunpack.c.l.b16 %v2860
        %v3377 = vunpack.c.l.b16 %v2861
        %v3378 = vunpack.c.l.b16 %v2862
        %v3379 = vunpack.c.l.b16 %v2863
        %v3380 = vunpack.c.l.b16 %v2864
        %v3381 = vunpack.c.l.b16 %v2865
        %v3382 = vunpack.c.l.b16 %v2866
        %v3383 = vunpack.c.l.b16 %v2867
        %v3384 = vunpack.c.l.b16 %v2868
        %v3385 = vunpack.c.l.b16 %v2869
        %v3386 = vunpack.c.l.b16 %v2870
        %v3387 = vunpack.c.l.b16 %v2871
        %v3388 = vunpack.c.l.b16 %v2872
        %v3389 = vunpack.c.l.b16 %v2873
        %v3390 = vunpack.c.l.b16 %v2874
        %v3391 = vunpack.c.l.b16 %v2875
        %v3392 = vunpack.c.l.b16 %v2876
        %v3393 = vunpack.c.l.b16 %v2877
        %v3394 = vunpack.c.l.b16 %v2878
        %v3395 = vunpack.c.l.b16 %v2879
        %v3396 = vunpack.c.l.b16 %v2880
        %v3397 = vunpack.c.l.b16 %v2881
        %v3398 = vunpack.c.l.b16 %v2882
        %v3399 = vunpack.c.l.b16 %v2883
        %v3400 = vunpack.c.l.b16 %v2884
        %v3401 = vunpack.c.l.b16 %v2885
        %v3402 = vunpack.c.l.b16 %v2886
        %v3403 = vunpack.c.l.b16 %v2887
        %v3404 = vunpack.c.l.b16 %v2888
        %v3405 = vunpack.c.l.b16 %v2889
        %v3406 = vunpack.c.l.b16 %v2890
        %v3407 = vunpack.c.l.b16 %v2891
        %v3408 = vunpack.c.l.b16 %v2892
        %v3409 = vunpack.c.l.b16 %v2893
        %v3410 = vunpack.c.l.b16 %v2894
        %v3411 = vunpack.c.l.b16 %v2895
        %v3412 = vunpack.c.l.b16 %v2896
        %v3413 = vunpack.c.l.b16 %v2897
        %v3414 = vunpack.c.l.b16 %v2898
        %v3415 = vunpack.c.l.b16 %v2899
        %v3416 = vunpack.c.l.b16 %v2900
        %v3417 = vunpack.c.l.b16 %v2901
        %v3418 = vunpack.c.l.b16 %v2902
        %v3419 = vunpack.c.l.b16 %v2903
        %v3420 = vunpack.c.l.b16 %v2904
        %v3421 = vunpack.c.l.b16 %v2905
        %v3422 = vunpack.c.l.b16 %v2906
        %v3423 = vunpack.c.l.b16 %v2907
        %v3424 = vunpack.c.l.b16 %v2908
        %v3425 = vunpack.c.l.b16 %v2909
        %v3426 = vunpack.c.l.b16 %v2910
        %v3427 = vunpack.c.l.b16 %v2911
        %v3428 = vunpack.c.l.b16 %v2912
        %v3429 = vunpack.c.l.b16 %v2913
        %v3430 = vunpack.c.l.b16 %v2914
        %v3431 = vunpack.c.l.b16 %v2915
        %v3432 = vunpack.c.l.b16 %v2916
        %v3433 = vunpack.c.l.b16 %v2917
        %v3434 = vunpack.c.l.b16 %v2918
        %v3435 = vunpack.c.l.b16 %v2919
        %v3436 = vunpack.c.l.b16 %v2920
        %v3437 = vunpack.c.l.b16 %v2921
        %v3438 = vunpack.c.l.b16 %v2922
        %v3439 = vunpack.c.l.b16 %v2923
        %v3440 = vunpack.c.l.b16 %v2924
        %v3441 = vunpack.c.l.b16 %v2925
        %v3442 = vunpack.c.l.b16 %v2926
        %v3443 = vunpack.c.l.b16 %v2927
        %v3444 = vunpack.c.l.b16 %v2928
        %v3445 = vunpack.c.l.b16 %v2929
        %v3446 = vunpack.c.l.b16 %v2930
        %v3447 = vunpack.c.l.b16 %v2931
        %v3448 = vunpack.c.l.b16 %v2932
        %v3449 = vunpack.c.l.b16 %v2933
        %v3450 = vunpack.c.l.b16 %v2934
        %v3451 = vunpack.c.l.b16 %v2935
        %v3452 = vunpack.c.l.b16 %v2936
        %v3453 = vunpack.c.l.b16 %v2937
        %v3454 = vunpack.c.l.b16 %v2938
        %v3455 = vunpack.c.l.b16 %v2939
        %v3456 = vunpack.c.l.b16 %v2940
        %v3457 = vunpack.c.l.b16 %v2941
        %v3458 = vunpack.c.l.b16 %v2942
        %v3459 = vunpack.c.l.b16 %v2943
        %v3460 = vunpack.c.l.b16 %v2944
        %v3461 = vunpack.c.l.b16 %v2945
        %v3462 = vunpack.c.l.b16 %v2946
        %v3463 = vunpack.c.l.b16 %v2947
        %v3464 = vunpack.c.l.b16 %v2948
        %v3465 = vunpack.c.l.b16 %v2949
        %v3466 = vunpack.c.l.b16 %v2950
        %v3467 = vunpack.c.l.b16 %v2951
        %v3468 = vunpack.c.l.b16 %v2952
        %v3469 = vpack.c.b16 %v3214, %v3213
        %v3470 = vpack.c.b16 %v3216, %v3215
        %v3471 = vpack.c.b16 %v3218, %v3217
        %v3472 = vpack.c.b16 %v3220, %v3219
        %v3473 = vpack.c.b16 %v3222, %v3221
        %v3474 = vpack.c.b16 %v3224, %v3223
        %v3475 = vpack.c.b16 %v3226, %v3225
        %v3476 = vpack.c.b16 %v3228, %v3227
        %v3477 = vpack.c.b16 %v3230, %v3229
        %v3478 = vpack.c.b16 %v3232, %v3231
        %v3479 = vpack.c.b16 %v3234, %v3233
        %v3480 = vpack.c.b16 %v3236, %v3235
        %v3481 = vpack.c.b16 %v3238, %v3237
        %v3482 = vpack.c.b16 %v3240, %v3239
        %v3483 = vpack.c.b16 %v3242, %v3241
        %v3484 = vpack.c.b16 %v3244, %v3243
        %v3485 = vpack.c.b16 %v3246, %v3245
        %v3486 = vpack.c.b16 %v3248, %v3247
        %v3487 = vpack.c.b16 %v3250, %v3249
        %v3488 = vpack.c.b16 %v3252, %v3251
        %v3489 = vpack.c.b16 %v3254, %v3253
        %v3490 = vpack.c.b16 %v3256, %v3255
        %v3491 = vpack.c.b16 %v3258, %v3257
        %v3492 = vpack.c.b16 %v3260, %v3259
        %v3493 = vpack.c.b16 %v3262, %v3261
        %v3494 = vpack.c.b16 %v3264, %v3263
        %v3495 = vpack.c.b16 %v3266, %v3265
        %v3496 = vpack.c.b16 %v3268, %v3267
        %v3497 = vpack.c.b16 %v3270, %v3269
        %v3498 = vpack.c.b16 %v3272, %v3271
        %v3499 = vpack.c.b16 %v3274, %v3273
        %v3500 = vpack.c.b16 %v3276, %v3275
        %v3501 = vpack.c.b16 %v3278, %v3277
        %v3502 = vpack.c.b16 %v3280, %v3279
        %v3503 = vpack.c.b16 %v3282, %v3281
        %v3504 = vpack.c.b16 %v3284, %v3283
        %v3505 = vpack.c.b16 %v3286, %v3285
        %v3506 = vpack.c.b16 %v3288, %v3287
        %v3507 = vpack.c.b16 %v3290, %v3289
        %v3508 = vpack.c.b16 %v3292, %v3291
        %v3509 = vpack.c.b16 %v3294, %v3293
        %v3510 = vpack.c.b16 %v3296, %v3295
        %v3511 = vpack.c.b16 %v3298, %v3297
        %v3512 = vpack.c.b16 %v3300, %v3299
        %v3513 = vpack.c.b16 %v3302, %v3301
        %v3514 = vpack.c.b16 %v3304, %v3303
        %v3515 = vpack.c.b16 %v3306, %v3305
        %v3516 = vpack.c.b16 %v3308, %v3307
        %v3517 = vpack.c.b16 %v3310, %v3309
        %v3518 = vpack.c.b16 %v3312, %v3311
        %v3519 = vpack.c.b16 %v3314, %v3313
        %v3520 = vpack.c.b16 %v3316, %v3315
        %v3521 = vpack.c.b16 %v3318, %v3317
        %v3522 = vpack.c.b16 %v3320, %v3319
        %v3523 = vpack.c.b16 %v3322, %v3321
        %v3524 = vpack.c.b16 %v3324, %v3323
        %v3525 = vpack.c.b16 %v3326, %v3325
        %v3526 = vpack.c.b16 %v3328, %v3327
        %v3527 = vpack.c.b16 %v3330, %v3329
        %v3528 = vpack.c.b16 %v3332, %v3331
        %v3529 = vpack.c.b16 %v3334, %v3333
        %v3530 = vpack.c.b16 %v3336, %v3335
        %v3531 = vpack.c.b16 %v3338, %v3337
        %v3532 = vpack.c.b16 %v3340, %v3339
        %v3533 = vpack.c.b16 %v3342, %v3341
        %v3534 = vpack.c.b16 %v3344, %v3343
        %v3535 = vpack.c.b16 %v3346, %v3345
        %v3536 = vpack.c.b16 %v3348, %v3347
        %v3537 = vpack.c.b16 %v3350, %v3349
        %v3538 = vpack.c.b16 %v3352, %v3351
        %v3539 = vpack.c.b16 %v3354, %v3353
        %v3540 = vpack.c.b16 %v3356, %v3355
        %v3541 = vpack.c.b16 %v3358, %v3357
        %v3542 = vpack.c.b16 %v3360, %v3359
        %v3543 = vpack.c.b16 %v3362, %v3361
        %v3544 = vpack.c.b16 %v3364, %v3363
        %v3545 = vpack.c.b16 %v3366, %v3365
        %v3546 = vpack.c.b16 %v3368, %v3367
        %v3547 = vpack.c.b16 %v3370, %v3369
        %v3548 = vpack.c.b16 %v3372, %v3371
        %v3549 = vpack.c.b16 %v3374, %v3373
        %v3550 = vpack.c.b16 %v3376, %v3375
        %v3551 = vpack.c.b16 %v3378, %v3377
        %v3552 = vpack.c.b16 %v3380, %v3379
        %v3553 = vpack.c.b16 %v3382, %v3381
        %v3554 = vpack.c.b16 %v3384, %v3383
        %v3555 = vpack.c.b16 %v3386, %v3385
        %v3556 = vpack.c.b16 %v3388, %v3387
        %v3557 = vpack.c.b16 %v3390, %v3389
        %v3558 = vpack.c.b16 %v3392, %v3391
        %v3559 = vpack.c.b16 %v3394, %v3393
        %v3560 = vpack.c.b16 %v3396, %v3395
        %v3561 = vpack.c.b16 %v3398, %v3397
        %v3562 = vpack.c.b16 %v3400, %v3399
        %v3563 = vpack.c.b16 %v3402, %v3401
        %v3564 = vpack.c.b16 %v3404, %v3403
        %v3565 = vpack.c.b16 %v3406, %v3405
        %v3566 = vpack.c.b16 %v3408, %v3407
        %v3567 = vpack.c.b16 %v3410, %v3409
        %v3568 = vpack.c.b16 %v3412, %v3411
        %v3569 = vpack.c.b16 %v3414, %v3413
        %v3570 = vpack.c.b16 %v3416, %v3415
        %v3571 = vpack.c.b16 %v3418, %v3417
        %v3572 = vpack.c.b16 %v3420, %v3419
        %v3573 = vpack.c.b16 %v3422, %v3421
        %v3574 = vpack.c.b16 %v3424, %v3423
        %v3575 = vpack.c.b16 %v3426, %v3425
        %v3576 = vpack.c.b16 %v3428, %v3427
        %v3577 = vpack.c.b16 %v3430, %v3429
        %v3578 = vpack.c.b16 %v3432, %v3431
        %v3579 = vpack.c.b16 %v3434, %v3433
        %v3580 = vpack.c.b16 %v3436, %v3435
        %v3581 = vpack.c.b16 %v3438, %v3437
        %v3582 = vpack.c.b16 %v3440, %v3439
        %v3583 = vpack.c.b16 %v3442, %v3441
        %v3584 = vpack.c.b16 %v3444, %v3443
        %v3585 = vpack.c.b16 %v3446, %v3445
        %v3586 = vpack.c.b16 %v3448, %v3447
        %v3587 = vpack.c.b16 %v3450, %v3449
        %v3588 = vpack.c.b16 %v3452, %v3451
        %v3589 = vpack.c.b16 %v3454, %v3453
        %v3590 = vpack.c.b16 %v3456, %v3455
        %v3591 = vpack.c.b16 %v3458, %v3457
        %v3592 = vpack.c.b16 %v3460, %v3459
        %v3593 = vpack.c.b16 %v3462, %v3461
        %v3594 = vpack.c.b16 %v3464, %v3463
        %v3595 = vpack.c.b16 %v3466, %v3465
        %v3596 = vpack.c.b16 %v3468, %v3467
        %3725 = vmatpush.bf16.msra.mxu0 %v3476
        %3726 = vmatpush.bf16.msra.mxu0 %v3475
        %3727 = vmatpush.bf16.msra.mxu0 %v3474
        %3728 = vmatpush.bf16.msra.mxu0 %v3473
        %3729 = vmatpush.bf16.msra.mxu0 %v3472
        %3730 = vmatpush.bf16.msra.mxu0 %v3471
        %3731 = vmatpush.bf16.msra.mxu0 %v3470
        %3732 = vmatpush.bf16.msra.mxu0 %v3469
        %3733 = vmatmul.bf16.gmra.mxu0 %v2681
        %v3734 = vpop.f32.mrf.mxu0
        %v3735 = vadd.f32 %v2955, %v3734
        %v3736 = vpop.f32.mrf.mxu0
        %3737 = vdwg.mxu0
        %3738 = vmatpush.bf16.msra.mxu0 %v3484
        %3739 = vmatpush.bf16.msra.mxu0 %v3483
        %3740 = vmatpush.bf16.msra.mxu0 %v3482
        %3741 = vmatpush.bf16.msra.mxu0 %v3481
        %3742 = vmatpush.bf16.msra.mxu0 %v3480
        %3743 = vmatpush.bf16.msra.mxu0 %v3479
        %3744 = vmatpush.bf16.msra.mxu0 %v3478
        %3745 = vmatpush.bf16.msra.mxu0 %v3477
        %3746 = vmatmul.bf16.gmra.mxu0 %v2682
        %v3747 = vpop.f32.mrf.mxu0
        %v3748 = vadd.f32 %v3735, %v3747
        %v3749 = vpop.f32.mrf.mxu0
        %3750 = vdwg.mxu0
        %3751 = vmatpush.bf16.msra.mxu0 %v3492
        %3752 = vmatpush.bf16.msra.mxu0 %v3491
        %3753 = vmatpush.bf16.msra.mxu0 %v3490
        %3754 = vmatpush.bf16.msra.mxu0 %v3489
        %3755 = vmatpush.bf16.msra.mxu0 %v3488
        %3756 = vmatpush.bf16.msra.mxu0 %v3487
        %3757 = vmatpush.bf16.msra.mxu0 %v3486
        %3758 = vmatpush.bf16.msra.mxu0 %v3485
        %3759 = vmatmul.bf16.gmra.mxu0 %v2683
        %v3760 = vpop.f32.mrf.mxu0
        %v3761 = vadd.f32 %v3748, %v3760
        %v3762 = vpop.f32.mrf.mxu0
        %3763 = vdwg.mxu0
        %3764 = vmatpush.bf16.msra.mxu0 %v3500
        %3765 = vmatpush.bf16.msra.mxu0 %v3499
        %3766 = vmatpush.bf16.msra.mxu0 %v3498
        %3767 = vmatpush.bf16.msra.mxu0 %v3497
        %3768 = vmatpush.bf16.msra.mxu0 %v3496
        %3769 = vmatpush.bf16.msra.mxu0 %v3495
        %3770 = vmatpush.bf16.msra.mxu0 %v3494
        %3771 = vmatpush.bf16.msra.mxu0 %v3493
        %3772 = vmatmul.bf16.gmra.mxu0 %v2684
        %v3773 = vpop.f32.mrf.mxu0
        %v3774 = vadd.f32 %v3761, %v3773
        %v3775 = vpop.f32.mrf.mxu0
        %3776 = vdwg.mxu0
        %3777 = vmatpush.bf16.msra.mxu0 %v3508
        %3778 = vmatpush.bf16.msra.mxu0 %v3507
        %3779 = vmatpush.bf16.msra.mxu0 %v3506
        %3780 = vmatpush.bf16.msra.mxu0 %v3505
        %3781 = vmatpush.bf16.msra.mxu0 %v3504
        %3782 = vmatpush.bf16.msra.mxu0 %v3503
        %3783 = vmatpush.bf16.msra.mxu0 %v3502
        %3784 = vmatpush.bf16.msra.mxu0 %v3501
        %3785 = vmatmul.bf16.gmra.mxu0 %v2685
        %v3786 = vpop.f32.mrf.mxu0
        %v3787 = vadd.f32 %v3774, %v3786
        %v3788 = vpop.f32.mrf.mxu0
        %3789 = vdwg.mxu0
        %3790 = vmatpush.bf16.msra.mxu0 %v3516
        %3791 = vmatpush.bf16.msra.mxu0 %v3515
        %3792 = vmatpush.bf16.msra.mxu0 %v3514
        %3793 = vmatpush.bf16.msra.mxu0 %v3513
        %3794 = vmatpush.bf16.msra.mxu0 %v3512
        %3795 = vmatpush.bf16.msra.mxu0 %v3511
        %3796 = vmatpush.bf16.msra.mxu0 %v3510
        %3797 = vmatpush.bf16.msra.mxu0 %v3509
        %3798 = vmatmul.bf16.gmra.mxu0 %v2686
        %v3799 = vpop.f32.mrf.mxu0
        %v3800 = vadd.f32 %v3787, %v3799
        %v3801 = vpop.f32.mrf.mxu0
        %3802 = vdwg.mxu0
        %3803 = vmatpush.bf16.msra.mxu0 %v3524
        %3804 = vmatpush.bf16.msra.mxu0 %v3523
        %3805 = vmatpush.bf16.msra.mxu0 %v3522
        %3806 = vmatpush.bf16.msra.mxu0 %v3521
        %3807 = vmatpush.bf16.msra.mxu0 %v3520
        %3808 = vmatpush.bf16.msra.mxu0 %v3519
        %3809 = vmatpush.bf16.msra.mxu0 %v3518
        %3810 = vmatpush.bf16.msra.mxu0 %v3517
        %3811 = vmatmul.bf16.gmra.mxu0 %v2687
        %v3812 = vpop.f32.mrf.mxu0
        %v3813 = vadd.f32 %v3800, %v3812
        %v3814 = vpop.f32.mrf.mxu0
        %3815 = vdwg.mxu0
        %3816 = vmatpush.bf16.msra.mxu0 %v3532
        %3817 = vmatpush.bf16.msra.mxu0 %v3531
        %3818 = vmatpush.bf16.msra.mxu0 %v3530
        %3819 = vmatpush.bf16.msra.mxu0 %v3529
        %3820 = vmatpush.bf16.msra.mxu0 %v3528
        %3821 = vmatpush.bf16.msra.mxu0 %v3527
        %3822 = vmatpush.bf16.msra.mxu0 %v3526
        %3823 = vmatpush.bf16.msra.mxu0 %v3525
        %3824 = vmatmul.bf16.gmra.mxu0 %v2688
        %v3825 = vpop.f32.mrf.mxu0
        %v3826 = vadd.f32 %v3813, %v3825
        %v3827 = vpop.f32.mrf.mxu0
        %3828 = vdwg.mxu0
        %3829 = vmatpush.bf16.msra.mxu0 %v3540
        %3830 = vmatpush.bf16.msra.mxu0 %v3539
        %3831 = vmatpush.bf16.msra.mxu0 %v3538
        %3832 = vmatpush.bf16.msra.mxu0 %v3537
        %3833 = vmatpush.bf16.msra.mxu0 %v3536
        %3834 = vmatpush.bf16.msra.mxu0 %v3535
        %3835 = vmatpush.bf16.msra.mxu0 %v3534
        %3836 = vmatpush.bf16.msra.mxu0 %v3533
        %3837 = vmatmul.bf16.gmra.mxu0 %v2689
        %v3838 = vpop.f32.mrf.mxu0
        %v3839 = vadd.f32 %v3826, %v3838
        %v3840 = vpop.f32.mrf.mxu0
        %3841 = vdwg.mxu0
        %3842 = vmatpush.bf16.msra.mxu0 %v3548
        %3843 = vmatpush.bf16.msra.mxu0 %v3547
        %3844 = vmatpush.bf16.msra.mxu0 %v3546
        %3845 = vmatpush.bf16.msra.mxu0 %v3545
        %3846 = vmatpush.bf16.msra.mxu0 %v3544
        %3847 = vmatpush.bf16.msra.mxu0 %v3543
        %3848 = vmatpush.bf16.msra.mxu0 %v3542
        %3849 = vmatpush.bf16.msra.mxu0 %v3541
        %3850 = vmatmul.bf16.gmra.mxu0 %v2690
        %v3851 = vpop.f32.mrf.mxu0
        %v3852 = vadd.f32 %v3839, %v3851
        %v3853 = vpop.f32.mrf.mxu0
        %3854 = vdwg.mxu0
        %3855 = vmatpush.bf16.msra.mxu0 %v3556
        %3856 = vmatpush.bf16.msra.mxu0 %v3555
        %3857 = vmatpush.bf16.msra.mxu0 %v3554
        %3858 = vmatpush.bf16.msra.mxu0 %v3553
        %3859 = vmatpush.bf16.msra.mxu0 %v3552
        %3860 = vmatpush.bf16.msra.mxu0 %v3551
        %3861 = vmatpush.bf16.msra.mxu0 %v3550
        %3862 = vmatpush.bf16.msra.mxu0 %v3549
        %3863 = vmatmul.bf16.gmra.mxu0 %v2691
        %v3864 = vpop.f32.mrf.mxu0
        %v3865 = vadd.f32 %v3852, %v3864
        %v3866 = vpop.f32.mrf.mxu0
        %3867 = vdwg.mxu0
        %3868 = vmatpush.bf16.msra.mxu0 %v3564
        %3869 = vmatpush.bf16.msra.mxu0 %v3563
        %3870 = vmatpush.bf16.msra.mxu0 %v3562
        %3871 = vmatpush.bf16.msra.mxu0 %v3561
        %3872 = vmatpush.bf16.msra.mxu0 %v3560
        %3873 = vmatpush.bf16.msra.mxu0 %v3559
        %3874 = vmatpush.bf16.msra.mxu0 %v3558
        %3875 = vmatpush.bf16.msra.mxu0 %v3557
        %3876 = vmatmul.bf16.gmra.mxu0 %v2692
        %v3877 = vpop.f32.mrf.mxu0
        %v3878 = vadd.f32 %v3865, %v3877
        %v3879 = vpop.f32.mrf.mxu0
        %3880 = vdwg.mxu0
        %3881 = vmatpush.bf16.msra.mxu0 %v3572
        %3882 = vmatpush.bf16.msra.mxu0 %v3571
        %3883 = vmatpush.bf16.msra.mxu0 %v3570
        %3884 = vmatpush.bf16.msra.mxu0 %v3569
        %3885 = vmatpush.bf16.msra.mxu0 %v3568
        %3886 = vmatpush.bf16.msra.mxu0 %v3567
        %3887 = vmatpush.bf16.msra.mxu0 %v3566
        %3888 = vmatpush.bf16.msra.mxu0 %v3565
        %3889 = vmatmul.bf16.gmra.mxu0 %v2693
        %v3890 = vpop.f32.mrf.mxu0
        %v3891 = vadd.f32 %v3878, %v3890
        %v3892 = vpop.f32.mrf.mxu0
        %3893 = vdwg.mxu0
        %3894 = vmatpush.bf16.msra.mxu0 %v3580
        %3895 = vmatpush.bf16.msra.mxu0 %v3579
        %3896 = vmatpush.bf16.msra.mxu0 %v3578
        %3897 = vmatpush.bf16.msra.mxu0 %v3577
        %3898 = vmatpush.bf16.msra.mxu0 %v3576
        %3899 = vmatpush.bf16.msra.mxu0 %v3575
        %3900 = vmatpush.bf16.msra.mxu0 %v3574
        %3901 = vmatpush.bf16.msra.mxu0 %v3573
        %3902 = vmatmul.bf16.gmra.mxu0 %v2694
        %v3903 = vpop.f32.mrf.mxu0
        %v3904 = vadd.f32 %v3891, %v3903
        %v3905 = vpop.f32.mrf.mxu0
        %3906 = vdwg.mxu0
        %3907 = vmatpush.bf16.msra.mxu0 %v3588
        %3908 = vmatpush.bf16.msra.mxu0 %v3587
        %3909 = vmatpush.bf16.msra.mxu0 %v3586
        %3910 = vmatpush.bf16.msra.mxu0 %v3585
        %3911 = vmatpush.bf16.msra.mxu0 %v3584
        %3912 = vmatpush.bf16.msra.mxu0 %v3583
        %3913 = vmatpush.bf16.msra.mxu0 %v3582
        %3914 = vmatpush.bf16.msra.mxu0 %v3581
        %3915 = vmatmul.bf16.gmra.mxu0 %v2695
        %v3916 = vpop.f32.mrf.mxu0
        %v3917 = vadd.f32 %v3904, %v3916
        %v3918 = vpop.f32.mrf.mxu0
        %3919 = vdwg.mxu0
        %3920 = vmatpush.bf16.msra.mxu0 %v3596
        %3921 = vmatpush.bf16.msra.mxu0 %v3595
        %3922 = vmatpush.bf16.msra.mxu0 %v3594
        %3923 = vmatpush.bf16.msra.mxu0 %v3593
        %3924 = vmatpush.bf16.msra.mxu0 %v3592
        %3925 = vmatpush.bf16.msra.mxu0 %v3591
        %3926 = vmatpush.bf16.msra.mxu0 %v3590
        %3927 = vmatpush.bf16.msra.mxu0 %v3589
        %3928 = vmatmul.bf16.gmra.mxu0 %v2696
        %v3929 = vpop.f32.mrf.mxu0
        %v3930 = vadd.f32 %v3917, %v3929
        %v3931 = vpop.f32.mrf.mxu0
        %3932 = vdwg.mxu0
        %v3933 = vadd.f32 %v2224, %v3930
        %v3934 = vsel %vm778, %v3933, 0.0
        %3935 = vadd.xlane.f32.xlu0 %v3934
        %v3936 = vpop.xlane.xlu0 %3935
        %v3937 = vmul.f32 %v3936, %v1417
        %v3938 = vsub.f32 %v3933, %v3937
        %v3939 = vmul.f32 %v3938, %v3938
        %v3940 = vsel %vm778, %v3939, 0.0
        %3941 = vadd.xlane.f32.xlu0 %v3940
        %v3942 = vpop.xlane.xlu0 %3941
        %v3943 = vmul.f32 %v3942, 0.032258064
        %v3944 = vperm.slane %v682, 2
        %v3945 = vmul.f32 %v3944, %v3938
        %v3946 = vrsqrt.pop %v3943
        %v3947 = vmul.f32 %v3946, %v3943
        %v3948 = vmul.f32 %v3947, %v3946
        %v3949 = vmul.f32 0.5, %v3948
        %v3950 = vsub.f32 1.5, %v3949
        %v3951 = vmul.f32 %v3946, %v3950
        %v3952 = vmul.f32 %v3943, %v3951
        %vm3953 = vcmp.eq.f32.partialorder %v3943, inf
        %v3954 = vsel %vm3953, %v3943, %v3952
        %vm3955 = vcmp.eq.f32.partialorder %v3943, 0.0
        %v3956 = vand.u32 %v3943, 2147483648
        %v3957 = vsel %vm3955, %v3956, %v3954
        %v3958 = vadd.f32 %v3957, 1e-06
        %v3959 = vrcp.pop %v3958
        %v3960 = vmul.f32 %v3958, %v3959
        %v3961 = vsub.f32 1.0, %v3960
        %v3962 = vmul.f32 %v3959, %v3961
        %v3963 = vadd.f32 %v3959, %v3962
        %vm3964 = vweird.f32 %v3958
        %vm3965 = vweird.f32 %v3959
        %vm3966 = vmor %vm3964, %vm3965
        %v3967 = vsel %vm3966, %v3959, %v3963
        %v3968 = vand.u32 2147483647, %v3958
        %vm3969 = vcmp.eq.f32.partialorder %v3968, 8.507059e+37
        %v3970 = vand.u32 %v3958, 2147483648
        %v3971 = vor.u32 1.1754944e-38, %v3970
        %v3972 = vsel %vm3969, %v3971, %v3967
        %v3973 = vmul.f32 %v3945, %v3972
        %v3974 = vperm.slane %v683, 2
        %v3975 = vadd.f32 %v3973, %v3974
        %3976 = vst.msk [vmem:[%s657] sm:$0xff] %vm778, %v3975
        %s3977 = sand.u32 %s482, 1
        %s3978 = scalar_lea.sflag [#allocation3], %s3977
        %s3979 = sand.u32 %s482, 1
        %s3980 = smul.addr %s3979, 8
        %s3981 = scalar_lea.vmem [#allocation2], %s3980
        // Predicated region
        $region101: #{tpu_custom_call.1} parent=99 // pred_check
          %p3982 = pneg %p492
        $region102: #{tpu_custom_call.1} parent=99 // pred_check_branch
          %3984 = sbr.rel (%p3982) target = $region104
        $region103: #{tpu_custom_call.1} parent=99 // pred_region
          %3986 = vsyncadd %s3978, 0
          %s3987 = smul.addr %s34, 8
          %s3988 = scalar_lea.hbm %s20, %s3987
          %s3990 = sshll.u32 %s3981, 4
          %s3991 = int_to_ptr.vmem [resolvable:$true] %s3990
          %s3992 = sshll.u32 %s3988, 4
          %s3993 = int_to_ptr.hbm [resolvable:$true] %s3992
          %3995 = dma.vmem_to_hbm [thread:$0]  %s3991, 128, %s3993, %s3978
        $region104: #{tpu_custom_call.1} parent=99 // pred_fallthru
          _
      $region100: #{tpu_custom_call.1} parent=5 // pred_fallthru
        _
      %p3996 = scmp.le.s32.totalorder 2, %s29
      // Predicated region
      $region105: #{tpu_custom_call.1} parent=5 // pred_check
        %p3997 = pneg %p3996
      $region106: #{tpu_custom_call.1} parent=5 // pred_check_branch
        %3999 = sbr.rel (%p3997) target = $region108
      $region107: #{tpu_custom_call.1} parent=5 // pred_region
        %s4000 = ssub.s32 %s29, 2
        // Predicated region
        $region109: #{tpu_custom_call.1} parent=107 // pred_check
          %p4001 = pneg %p498
        $region110: #{tpu_custom_call.1} parent=107 // pred_check_branch
          %4003 = sbr.rel (%p4001) target = $region112
        $region111: #{tpu_custom_call.1} parent=107 // pred_region
          %s4004 = sand.u32 %s483, 1
          %s4005 = scalar_lea.sflag [#allocation3], %s4004
          %s4006 = sand.u32 %s483, 1
          %s4007 = smul.addr %s4006, 8
          %s4008 = scalar_lea.vmem [#allocation2], %s4007
          %4010 = dma.done %s4005, 128
        $region112: #{tpu_custom_call.1} parent=107 // pred_fallthru
          _
      $region108: #{tpu_custom_call.1} parent=5 // pred_fallthru
        _
    $region6: #{tpu_custom_call.1} parent=1 // loop_footer
      %s33 = sadd.s32 1, %s29
    $region7: #{tpu_custom_call.1} parent=1 // loop_footer_branch
      %28 = sbr.rel target = $region3
    $region8: #{tpu_custom_call.1} parent=1 // loop_exit
      _
    %4011 = vsyncpa [#allocation3], 1
    %s4012 = scalar_lea.sflag [#allocation3], 1
    %4013 = vsyncpa %s4012, 1

</llo_original>
